<compile_context>
chip_gen: v7x
topology: tpu7x:2x2x1
jax: 0.10.0
libtpu: 0.0.40
codegen_flags: <defaults>
</compile_context>

<pallas_src>
import functools

import jax
import jax.numpy as jnp
from jax.experimental import pallas as pl
from jax.experimental.pallas import tpu as pltpu

# Conservative scoped-VMEM request so the same code compiles on v5e/v6e
# (128 MiB physical) and v7x (64 MiB physical).  With bf16 weights and
# block_b<=512 the actual residency is far below this.
_VMEM_LIMIT_BYTES = 48 * 1024 * 1024


def _fc1_stats_kernel(x_ref, w1_ref, sum_ref, sumsq_ref):
    """Pass 1: per-feature sum / sum-of-squares of h1 = x @ W1 (no bias).

    b1 is dropped because train-mode BatchNorm cancels it exactly (it shifts
    the per-feature mean and leaves the variance unchanged).  h1 is NOT
    written back to HBM -- pass 2 recomputes it from the x tile.  MXU gets
    bf16 operands; accumulation and stats stay f32.
    """
    @pl.when(pl.program_id(1) == 0)
    def _init():
        sum_ref[...] = jnp.zeros_like(sum_ref)
        sumsq_ref[...] = jnp.zeros_like(sumsq_ref)

    h1 = jnp.dot(x_ref[...], w1_ref[...], preferred_element_type=jnp.float32)
    sum_ref[...] += jnp.sum(h1, axis=0, keepdims=True)
    sumsq_ref[...] += jnp.sum(h1 * h1, axis=0, keepdims=True)


def _fused_mlp_kernel(x_ref, w1_ref, scale_ref, shift_ref,
                      w2_ref, b2_ref, w3_ref, b3_ref, out_ref):
    """Pass 2 (fused): fc1 recompute + BN affine + ReLU + fc2 + ReLU + fc3."""
    h1 = jnp.dot(x_ref[...], w1_ref[...], preferred_element_type=jnp.float32)
    # BatchNorm folded into a single per-feature scale/shift (f32).
    a1 = jnp.maximum(h1 * scale_ref[...] + shift_ref[...], 0.0)
    h2 = jnp.dot(a1.astype(jnp.bfloat16), w2_ref[...],
                 preferred_element_type=jnp.float32) + b2_ref[...]
    a2 = jnp.maximum(h2, 0.0)
    out = jnp.dot(a2.astype(jnp.bfloat16), w3_ref[...],
                  preferred_element_type=jnp.float32) + b3_ref[...]
    out_ref[...] = out.astype(out_ref.dtype)


@functools.partial(jax.jit, static_argnames=("block_b", "eps"))
def mlp_forward(x, params, *, block_b=512, eps=1e-5):
    """Pallas MLP forward with train-mode BatchNorm1d (batch stats, biased var)."""
    w1, b1, gamma, beta, w2, b2, w3, b3 = params
    del b1  # cancelled exactly by train-mode BatchNorm (mean shift only)
    B, D = x.shape
    H = w1.shape[1]
    P = w3.shape[1]
    out_dtype = x.dtype

    block_b = min(block_b, B)
    # TODO(synk): for non-divisible batches, pad rows in the caller and mask
    # them in pass 1 so they do not pollute the batch statistics.
    assert B % block_b == 0, "batch must be a multiple of block_b"
    n_tiles = B // block_b
    # Two independent stat splits so pass 1 can use both TensorCores on v7x
    # (no effect on v5e/v6e, which have a single TC).
    num_splits = 2 if n_tiles % 2 == 0 else 1
    tiles_per_split = n_tiles // num_splits

    # bf16 MXU operands, f32 everything else.
    x_bf = x.astype(jnp.bfloat16)
    w1_bf = w1.astype(jnp.bfloat16)
    w2_bf = w2.astype(jnp.bfloat16)
    w3_bf = w3.astype(jnp.bfloat16)
    b2_2d = b2.reshape(1, H).astype(jnp.float32)
    b3_2d = b3.reshape(1, P).astype(jnp.float32)

    # ---- pass 1: fc1 batch statistics only (no h1 writeback) ----
    psum, psumsq = pl.pallas_call(
        _fc1_stats_kernel,
        out_shape=(
            jax.ShapeDtypeStruct((num_splits, 1, H), jnp.float32),
            jax.ShapeDtypeStruct((num_splits, 1, H), jnp.float32),
        ),
        grid_spec=pltpu.PrefetchScalarGridSpec(
            num_scalar_prefetch=0,
            grid=(num_splits, tiles_per_split),
            in_specs=[
                # TODO(synk): add pipeline_mode=pl.Buffered(3) here if profiling
                # on v5e shows exposed DMA on the streamed x tiles.
                pl.BlockSpec((block_b, D),
                             lambda c, i: (c * tiles_per_split + i, 0)),
                pl.BlockSpec((D, H), lambda c, i: (0, 0)),
            ],
            out_specs=[
                pl.BlockSpec((None, 1, H), lambda c, i: (c, 0, 0)),
                pl.BlockSpec((None, 1, H), lambda c, i: (c, 0, 0)),
            ],
        ),
        compiler_params=pltpu.CompilerParams(
            dimension_semantics=("parallel", "arbitrary"),
            vmem_limit_bytes=_VMEM_LIMIT_BYTES,
        ),
    )(x_bf, w1_bf)

    # Tiny (1, H) glue: reduce per-split partials, finalize train-mode BN
    # (biased variance) and fold gamma/beta/mean/var into one scale/shift.
    feat_sum = jnp.sum(psum, axis=0)        # (1, H)
    feat_sumsq = jnp.sum(psumsq, axis=0)    # (1, H)
    mean = feat_sum / B
    # TODO(synk): uncentered variance (E[x^2]-E[x]^2) can cancel badly for
    # large-mean activations; switch to a shifted sumsq for pretrained weights.
    var = feat_sumsq / B - mean * mean
    inv_std = jax.lax.rsqrt(var + eps)
    scale = gamma.reshape(1, H).astype(jnp.float32) * inv_std
    shift = beta.reshape(1, H).astype(jnp.float32) - mean * scale

    # ---- pass 2: fused fc1-recompute + BN + ReLU + fc2 + ReLU + fc3 over
    # independent batch tiles ("parallel" => both TCs on v7x) ----
    out = pl.pallas_call(
        _fused_mlp_kernel,
        out_shape=jax.ShapeDtypeStruct((B, P), out_dtype),
        grid_spec=pltpu.PrefetchScalarGridSpec(
            num_scalar_prefetch=0,
            grid=(n_tiles,),
            in_specs=[
                pl.BlockSpec((block_b, D), lambda i: (i, 0)),
                pl.BlockSpec((D, H), lambda i: (0, 0)),
                pl.BlockSpec((1, H), lambda i: (0, 0)),
                pl.BlockSpec((1, H), lambda i: (0, 0)),
                pl.BlockSpec((H, H), lambda i: (0, 0)),
                pl.BlockSpec((1, H), lambda i: (0, 0)),
                pl.BlockSpec((H, P), lambda i: (0, 0)),
                pl.BlockSpec((1, P), lambda i: (0, 0)),
            ],
            out_specs=pl.BlockSpec((block_b, P), lambda i: (i, 0)),
        ),
        compiler_params=pltpu.CompilerParams(
            dimension_semantics=("parallel",),
            vmem_limit_bytes=_VMEM_LIMIT_BYTES,
        ),
    )(x_bf, w1_bf, scale, shift, w2_bf, b2_2d, w3_bf, b3_2d)
    return out


def mlp_reference(x, params, eps=1e-5):
    """Pure-f32 JAX reference with nn.BatchNorm1d train-mode semantics."""
    w1, b1, gamma, beta, w2, b2, w3, b3 = params
    h1 = x @ w1 + b1
    mean = jnp.mean(h1, axis=0, keepdims=True)
    var = jnp.mean((h1 - mean) ** 2, axis=0, keepdims=True)  # biased variance
    h1n = (h1 - mean) * jax.lax.rsqrt(var + eps) * gamma + beta
    a1 = jnp.maximum(h1n, 0.0)
    a2 = jnp.maximum(a1 @ w2 + b2, 0.0)
    return a2 @ w3 + b3


def mlp_reference_mixed(x, params, eps=1e-5):
    """Reference applying the same bf16 casts as the kernel (logic check)."""
    w1, b1, gamma, beta, w2, b2, w3, b3 = params
    del b1  # cancelled by train-mode BatchNorm
    bf = jnp.bfloat16
    h1 = jnp.dot(x.astype(bf), w1.astype(bf), preferred_element_type=jnp.float32)
    mean = jnp.mean(h1, axis=0, keepdims=True)
    var = jnp.mean(h1 * h1, axis=0, keepdims=True) - mean * mean
    inv_std = jax.lax.rsqrt(var + eps)
    scale = gamma[None, :] * inv_std
    shift = beta[None, :] - mean * scale
    a1 = jnp.maximum(h1 * scale + shift, 0.0).astype(bf)
    h2 = jnp.dot(a1, w2.astype(bf), preferred_element_type=jnp.float32) + b2[None, :]
    a2 = jnp.maximum(h2, 0.0).astype(bf)
    return jnp.dot(a2, w3.astype(bf), preferred_element_type=jnp.float32) + b3[None, :]


if __name__ == "__main__":
    # Lane/sublane-aligned demo shapes: dim=128, hidden_size=256,
    # projection_size=128, batch=1024 (block_b=512 default => pass-1 grid
    # (2 splits x 1 tile), pass-2 grid (2,)).
    B, D, H, P = 1024, 128, 256, 128
    key = jax.random.PRNGKey(0)
    ks = jax.random.split(key, 9)

    x = jax.random.normal(ks[0], (B, D), dtype=jnp.float32)
    w1 = jax.random.normal(ks[1], (D, H), dtype=jnp.float32) / jnp.sqrt(D)
    b1 = 0.1 * jax.random.normal(ks[2], (H,), dtype=jnp.float32)
    gamma = 1.0 + 0.1 * jax.random.normal(ks[3], (H,), dtype=jnp.float32)
    beta = 0.1 * jax.random.normal(ks[4], (H,), dtype=jnp.float32)
    w2 = jax.random.normal(ks[5], (H, H), dtype=jnp.float32) / jnp.sqrt(H)
    b2 = 0.1 * jax.random.normal(ks[6], (H,), dtype=jnp.float32)
    w3 = jax.random.normal(ks[7], (H, P), dtype=jnp.float32) / jnp.sqrt(H)
    b3 = 0.1 * jax.random.normal(ks[8], (P,), dtype=jnp.float32)

    params = (w1, b1, gamma, beta, w2, b2, w3, b3)

    out = mlp_forward(x, params)
    out = jax.block_until_ready(out)
    assert out.shape == (B, P), out.shape

    # Tight check vs. a reference doing identical bf16 casts (kernel logic).
    ref_mixed = mlp_reference_mixed(x, params)
    err_mixed = float(jnp.max(jnp.abs(out - ref_mixed)))
    assert jnp.allclose(out, ref_mixed, atol=1e-2, rtol=1e-2), ("mixed", err_mixed)

    # Loose check vs. the pure-f32 reference; the gap is the bf16 MXU operands.
    ref_f32 = mlp_reference(x, params)
    err_f32 = float(jnp.max(jnp.abs(out - ref_f32)))
    assert jnp.allclose(out, ref_f32, atol=1e-1, rtol=1e-1), ("f32", err_f32)

    print("KERNEL_OK")
</pallas_src>

<mosaic_0001>
module attributes {stable_mosaic.version = 11 : i64} {
  func.func @_fc1_stats_kernel(%arg0: i32, %arg1: i32, %arg2: memref<512x128xbf16, #tpu.memory_space<vmem>>, %arg3: memref<128x256xbf16, #tpu.memory_space<vmem>>, %arg4: memref<1x1x256xf32, #tpu.memory_space<vmem>>, %arg5: memref<1x1x256xf32, #tpu.memory_space<vmem>>) attributes {dimension_semantics = [#tpu.dimension_semantics<parallel>, #tpu.dimension_semantics<arbitrary>], iteration_bounds = array<i64: 2, 1>, scalar_prefetch = 0 : i64, scratch_operands = 0 : i64, tpu.core_type = #tpu.core_type<tc>, window_params = [{transform_indices = @transform_0, window_bounds = array<i64: 512, 128>}, {pipeline_mode = #tpu.pipeline_mode<synchronous>, transform_indices = @transform_1, window_bounds = array<i64: 128, 256>}, {transform_indices = @transform_2, window_bounds = array<i64: 1, 1, 256>}, {transform_indices = @transform_3, window_bounds = array<i64: 1, 1, 256>}]} {
    %c0_i32 = arith.constant 0 : i32
    %0 = arith.cmpi eq, %arg1, %c0_i32 : i32
    %1 = arith.extui %0 : i1 to i32
    %c0_i32_0 = arith.constant 0 : i32
    %2 = arith.cmpi ne, %1, %c0_i32_0 : i32
    scf.if %2 {
      %cst_18 = arith.constant 0.000000e+00 : f32
      %23 = vector.broadcast %cst_18 : f32 to vector<1x256xf32>
      %c0_19 = arith.constant 0 : index
      %c0_20 = arith.constant 0 : index
      %c0_21 = arith.constant 0 : index
      %24 = vector.load %arg4[%c0_19, %c0_20, %c0_21] : memref<1x1x256xf32, #tpu.memory_space<vmem>>, vector<1x1x256xf32>
      %25 = vector.shape_cast %24 : vector<1x1x256xf32> to vector<1x256xf32>
      %26 = vector.shape_cast %23 : vector<1x256xf32> to vector<1x1x256xf32>
      tpu.vector_store %arg4[%c0_19, %c0_20, %c0_21], %26 {strides = array<i32>} : memref<1x1x256xf32, #tpu.memory_space<vmem>>, vector<1x1x256xf32>,
      %cst_22 = arith.constant 0.000000e+00 : f32
      %27 = vector.broadcast %cst_22 : f32 to vector<1x256xf32>
      %c0_23 = arith.constant 0 : index
      %c0_24 = arith.constant 0 : index
      %c0_25 = arith.constant 0 : index
      %28 = vector.load %arg5[%c0_23, %c0_24, %c0_25] : memref<1x1x256xf32, #tpu.memory_space<vmem>>, vector<1x1x256xf32>
      %29 = vector.shape_cast %28 : vector<1x1x256xf32> to vector<1x256xf32>
      %30 = vector.shape_cast %27 : vector<1x256xf32> to vector<1x1x256xf32>
      tpu.vector_store %arg5[%c0_23, %c0_24, %c0_25], %30 {strides = array<i32>} : memref<1x1x256xf32, #tpu.memory_space<vmem>>, vector<1x1x256xf32>,
    } else {
    }
    %c0 = arith.constant 0 : index
    %c0_1 = arith.constant 0 : index
    %3 = vector.load %arg2[%c0, %c0_1] : memref<512x128xbf16, #tpu.memory_space<vmem>>, vector<512x128xbf16>
    %c0_2 = arith.constant 0 : index
    %c0_3 = arith.constant 0 : index
    %4 = vector.load %arg3[%c0_2, %c0_3] : memref<128x256xbf16, #tpu.memory_space<vmem>>, vector<128x256xbf16>
    %cst = arith.constant dense<0.000000e+00> : vector<512x256xf32>
    %5 = tpu.matmul %3, %4, %cst {dimension_numbers = #tpu.dot_dimension_numbers<[1], [0], [0], [1], [0, 0, 1, 1], [], []>} : vector<512x128xbf16>, vector<128x256xbf16>, vector<512x256xf32> -> vector<512x256xf32>
    %c0_4 = arith.constant 0 : index
    %c0_5 = arith.constant 0 : index
    %c0_6 = arith.constant 0 : index
    %6 = vector.load %arg4[%c0_4, %c0_5, %c0_6] : memref<1x1x256xf32, #tpu.memory_space<vmem>>, vector<1x1x256xf32>
    %7 = vector.shape_cast %6 : vector<1x1x256xf32> to vector<1x256xf32>
    %cst_7 = arith.constant dense<0.000000e+00> : vector<256xf32>
    %8 = vector.multi_reduction <add>, %5, %cst_7 [0] : vector<512x256xf32> to vector<256xf32>
    %9 = vector.shape_cast %8 : vector<256xf32> to vector<1x256xf32>
    %10 = arith.addf %7, %9 : vector<1x256xf32>
    %c0_8 = arith.constant 0 : index
    %c0_9 = arith.constant 0 : index
    %c0_10 = arith.constant 0 : index
    %11 = vector.load %arg4[%c0_8, %c0_9, %c0_10] : memref<1x1x256xf32, #tpu.memory_space<vmem>>, vector<1x1x256xf32>
    %12 = vector.shape_cast %11 : vector<1x1x256xf32> to vector<1x256xf32>
    %13 = vector.shape_cast %10 : vector<1x256xf32> to vector<1x1x256xf32>
    tpu.vector_store %arg4[%c0_8, %c0_9, %c0_10], %13 {strides = array<i32>} : memref<1x1x256xf32, #tpu.memory_space<vmem>>, vector<1x1x256xf32>,
    %c0_11 = arith.constant 0 : index
    %c0_12 = arith.constant 0 : index
    %c0_13 = arith.constant 0 : index
    %14 = vector.load %arg5[%c0_11, %c0_12, %c0_13] : memref<1x1x256xf32, #tpu.memory_space<vmem>>, vector<1x1x256xf32>
    %15 = vector.shape_cast %14 : vector<1x1x256xf32> to vector<1x256xf32>
    %16 = arith.mulf %5, %5 : vector<512x256xf32>
    %cst_14 = arith.constant dense<0.000000e+00> : vector<256xf32>
    %17 = vector.multi_reduction <add>, %16, %cst_14 [0] : vector<512x256xf32> to vector<256xf32>
    %18 = vector.shape_cast %17 : vector<256xf32> to vector<1x256xf32>
    %19 = arith.addf %15, %18 : vector<1x256xf32>
    %c0_15 = arith.constant 0 : index
    %c0_16 = arith.constant 0 : index
    %c0_17 = arith.constant 0 : index
    %20 = vector.load %arg5[%c0_15, %c0_16, %c0_17] : memref<1x1x256xf32, #tpu.memory_space<vmem>>, vector<1x1x256xf32>
    %21 = vector.shape_cast %20 : vector<1x1x256xf32> to vector<1x256xf32>
    %22 = vector.shape_cast %19 : vector<1x256xf32> to vector<1x1x256xf32>
    tpu.vector_store %arg5[%c0_15, %c0_16, %c0_17], %22 {strides = array<i32>} : memref<1x1x256xf32, #tpu.memory_space<vmem>>, vector<1x1x256xf32>,
    return
  }
  func.func @transform_0(%arg0: i32, %arg1: i32) -> (i32, i32) {
    %c1_i32 = arith.constant 1 : i32
    %0 = arith.muli %arg0, %c1_i32 : i32
    %1 = arith.addi %0, %arg1 : i32
    %c0_i32 = arith.constant 0 : i32
    %c0_i32_0 = arith.constant 0 : i32
    return %1, %c0_i32 : i32, i32
  }
  func.func @transform_1(%arg0: i32, %arg1: i32) -> (i32, i32) {
    %c0_i32 = arith.constant 0 : i32
    %c0_i32_0 = arith.constant 0 : i32
    %c0_i32_1 = arith.constant 0 : i32
    return %c0_i32, %c0_i32_0 : i32, i32
  }
  func.func @transform_2(%arg0: i32, %arg1: i32) -> (i32, i32, i32) {
    %c0_i32 = arith.constant 0 : i32
    %c0_i32_0 = arith.constant 0 : i32
    %c0_i32_1 = arith.constant 0 : i32
    return %arg0, %c0_i32, %c0_i32_0 : i32, i32, i32
  }
  func.func @transform_3(%arg0: i32, %arg1: i32) -> (i32, i32, i32) {
    %c0_i32 = arith.constant 0 : i32
    %c0_i32_0 = arith.constant 0 : i32
    %c0_i32_1 = arith.constant 0 : i32
    return %arg0, %c0_i32, %c0_i32_0 : i32, i32, i32
  }
}

module attributes {stable_mosaic.version = 11 : i64} {
  func.func @_fused_mlp_kernel(%arg0: i32, %arg1: memref<512x128xbf16, #tpu.memory_space<vmem>>, %arg2: memref<128x256xbf16, #tpu.memory_space<vmem>>, %arg3: memref<1x256xf32, #tpu.memory_space<vmem>>, %arg4: memref<1x256xf32, #tpu.memory_space<vmem>>, %arg5: memref<256x256xbf16, #tpu.memory_space<vmem>>, %arg6: memref<1x256xf32, #tpu.memory_space<vmem>>, %arg7: memref<256x128xbf16, #tpu.memory_space<vmem>>, %arg8: memref<1x128xf32, #tpu.memory_space<vmem>>, %arg9: memref<512x128xf32, #tpu.memory_space<vmem>>) attributes {dimension_semantics = [#tpu.dimension_semantics<parallel>], iteration_bounds = array<i64: 2>, scalar_prefetch = 0 : i64, scratch_operands = 0 : i64, tpu.core_type = #tpu.core_type<tc>, window_params = [{transform_indices = @transform_0, window_bounds = array<i64: 512, 128>}, {pipeline_mode = #tpu.pipeline_mode<synchronous>, transform_indices = @transform_1, window_bounds = array<i64: 128, 256>}, {pipeline_mode = #tpu.pipeline_mode<synchronous>, transform_indices = @transform_2, window_bounds = array<i64: 1, 256>}, {pipeline_mode = #tpu.pipeline_mode<synchronous>, transform_indices = @transform_3, window_bounds = array<i64: 1, 256>}, {pipeline_mode = #tpu.pipeline_mode<synchronous>, transform_indices = @transform_4, window_bounds = array<i64: 256, 256>}, {pipeline_mode = #tpu.pipeline_mode<synchronous>, transform_indices = @transform_5, window_bounds = array<i64: 1, 256>}, {pipeline_mode = #tpu.pipeline_mode<synchronous>, transform_indices = @transform_6, window_bounds = array<i64: 256, 128>}, {pipeline_mode = #tpu.pipeline_mode<synchronous>, transform_indices = @transform_7, window_bounds = array<i64: 1, 128>}, {transform_indices = @transform_8, window_bounds = array<i64: 512, 128>}]} {
    %c0 = arith.constant 0 : index
    %c0_0 = arith.constant 0 : index
    %0 = vector.load %arg1[%c0, %c0_0] : memref<512x128xbf16, #tpu.memory_space<vmem>>, vector<512x128xbf16>
    %c0_1 = arith.constant 0 : index
    %c0_2 = arith.constant 0 : index
    %1 = vector.load %arg2[%c0_1, %c0_2] : memref<128x256xbf16, #tpu.memory_space<vmem>>, vector<128x256xbf16>
    %cst = arith.constant dense<0.000000e+00> : vector<512x256xf32>
    %2 = tpu.matmul %0, %1, %cst {dimension_numbers = #tpu.dot_dimension_numbers<[1], [0], [0], [1], [0, 0, 1, 1], [], []>} : vector<512x128xbf16>, vector<128x256xbf16>, vector<512x256xf32> -> vector<512x256xf32>
    %c0_3 = arith.constant 0 : index
    %c0_4 = arith.constant 0 : index
    %3 = vector.load %arg3[%c0_3, %c0_4] : memref<1x256xf32, #tpu.memory_space<vmem>>, vector<1x256xf32>
    %4 = vector.broadcast %3 : vector<1x256xf32> to vector<512x256xf32>
    %5 = arith.mulf %2, %4 : vector<512x256xf32>
    %c0_5 = arith.constant 0 : index
    %c0_6 = arith.constant 0 : index
    %6 = vector.load %arg4[%c0_5, %c0_6] : memref<1x256xf32, #tpu.memory_space<vmem>>, vector<1x256xf32>
    %7 = vector.broadcast %6 : vector<1x256xf32> to vector<512x256xf32>
    %8 = arith.addf %5, %7 : vector<512x256xf32>
    %cst_7 = arith.constant 0.000000e+00 : f32
    %9 = vector.broadcast %cst_7 : f32 to vector<512x256xf32>
    %10 = arith.maximumf %8, %9 : vector<512x256xf32>
    %11 = arith.truncf %10 : vector<512x256xf32> to vector<512x256xbf16>
    %c0_8 = arith.constant 0 : index
    %c0_9 = arith.constant 0 : index
    %12 = vector.load %arg5[%c0_8, %c0_9] : memref<256x256xbf16, #tpu.memory_space<vmem>>, vector<256x256xbf16>
    %cst_10 = arith.constant dense<0.000000e+00> : vector<512x256xf32>
    %13 = tpu.matmul %11, %12, %cst_10 {dimension_numbers = #tpu.dot_dimension_numbers<[1], [0], [0], [1], [0, 0, 1, 1], [], []>} : vector<512x256xbf16>, vector<256x256xbf16>, vector<512x256xf32> -> vector<512x256xf32>
    %c0_11 = arith.constant 0 : index
    %c0_12 = arith.constant 0 : index
    %14 = vector.load %arg6[%c0_11, %c0_12] : memref<1x256xf32, #tpu.memory_space<vmem>>, vector<1x256xf32>
    %15 = vector.broadcast %14 : vector<1x256xf32> to vector<512x256xf32>
    %16 = arith.addf %13, %15 : vector<512x256xf32>
    %cst_13 = arith.constant 0.000000e+00 : f32
    %17 = vector.broadcast %cst_13 : f32 to vector<512x256xf32>
    %18 = arith.maximumf %16, %17 : vector<512x256xf32>
    %19 = arith.truncf %18 : vector<512x256xf32> to vector<512x256xbf16>
    %c0_14 = arith.constant 0 : index
    %c0_15 = arith.constant 0 : index
    %20 = vector.load %arg7[%c0_14, %c0_15] : memref<256x128xbf16, #tpu.memory_space<vmem>>, vector<256x128xbf16>
    %cst_16 = arith.constant dense<0.000000e+00> : vector<512x128xf32>
    %21 = tpu.matmul %19, %20, %cst_16 {dimension_numbers = #tpu.dot_dimension_numbers<[1], [0], [0], [1], [0, 0, 1, 1], [], []>} : vector<512x256xbf16>, vector<256x128xbf16>, vector<512x128xf32> -> vector<512x128xf32>
    %c0_17 = arith.constant 0 : index
    %c0_18 = arith.constant 0 : index
    %22 = vector.load %arg8[%c0_17, %c0_18] : memref<1x128xf32, #tpu.memory_space<vmem>>, vector<1x128xf32>
    %23 = vector.broadcast %22 : vector<1x128xf32> to vector<512x128xf32>
    %24 = arith.addf %21, %23 : vector<512x128xf32>
    %c0_19 = arith.constant 0 : index
    %c0_20 = arith.constant 0 : index
    %25 = vector.load %arg9[%c0_19, %c0_20] : memref<512x128xf32, #tpu.memory_space<vmem>>, vector<512x128xf32>
    tpu.vector_store %arg9[%c0_19, %c0_20], %24 {strides = array<i32>} : memref<512x128xf32, #tpu.memory_space<vmem>>, vector<512x128xf32>,
    return
  }
  func.func @transform_0(%arg0: i32) -> (i32, i32) {
    %c0_i32 = arith.constant 0 : i32
    %c0_i32_0 = arith.constant 0 : i32
    return %arg0, %c0_i32 : i32, i32
  }
  func.func @transform_1(%arg0: i32) -> (i32, i32) {
    %c0_i32 = arith.constant 0 : i32
    %c0_i32_0 = arith.constant 0 : i32
    %c0_i32_1 = arith.constant 0 : i32
    return %c0_i32, %c0_i32_0 : i32, i32
  }
  func.func @transform_2(%arg0: i32) -> (i32, i32) {
    %c0_i32 = arith.constant 0 : i32
    %c0_i32_0 = arith.constant 0 : i32
    %c0_i32_1 = arith.constant 0 : i32
    return %c0_i32, %c0_i32_0 : i32, i32
  }
  func.func @transform_3(%arg0: i32) -> (i32, i32) {
    %c0_i32 = arith.constant 0 : i32
    %c0_i32_0 = arith.constant 0 : i32
    %c0_i32_1 = arith.constant 0 : i32
    return %c0_i32, %c0_i32_0 : i32, i32
  }
  func.func @transform_4(%arg0: i32) -> (i32, i32) {
    %c0_i32 = arith.constant 0 : i32
    %c0_i32_0 = arith.constant 0 : i32
    %c0_i32_1 = arith.constant 0 : i32
    return %c0_i32, %c0_i32_0 : i32, i32
  }
  func.func @transform_5(%arg0: i32) -> (i32, i32) {
    %c0_i32 = arith.constant 0 : i32
    %c0_i32_0 = arith.constant 0 : i32
    %c0_i32_1 = arith.constant 0 : i32
    return %c0_i32, %c0_i32_0 : i32, i32
  }
  func.func @transform_6(%arg0: i32) -> (i32, i32) {
    %c0_i32 = arith.constant 0 : i32
    %c0_i32_0 = arith.constant 0 : i32
    %c0_i32_1 = arith.constant 0 : i32
    return %c0_i32, %c0_i32_0 : i32, i32
  }
  func.func @transform_7(%arg0: i32) -> (i32, i32) {
    %c0_i32 = arith.constant 0 : i32
    %c0_i32_0 = arith.constant 0 : i32
    %c0_i32_1 = arith.constant 0 : i32
    return %c0_i32, %c0_i32_0 : i32, i32
  }
  func.func @transform_8(%arg0: i32) -> (i32, i32) {
    %c0_i32 = arith.constant 0 : i32
    %c0_i32_0 = arith.constant 0 : i32
    return %arg0, %c0_i32 : i32, i32
  }
}

</mosaic_0001>

<llo_original>
// kernel: mlp_forward.2
$region0: #{mlp_forward.2}
  #allocation0 [shape = 'u32[]', space=smem, size = 0x4, offset = 0x4, fixed_abs, tag = 'smem constant byte address 0x4 - core index']
  #allocation1 [shape = 'u32[144,128]{1,0:T(1,128)}', space=vmem, size = 0x12000, scoped, tag = 'internal scratch']
  %s0 = inlined_call_operand.vmem [shape: bf16[1024,128], index: 0, kind: input, shape index: {}]
  %s1 = inlined_call_operand.vmem [shape: bf16[128,256], index: 1, kind: input, shape index: {}]
  %s2 = inlined_call_operand.vmem [shape: f32[2,1,256], index: 2, kind: output, shape index: {0}]
  %s3 = inlined_call_operand.vmem [shape: f32[2,1,256], index: 3, kind: output, shape index: {1}]
  %4 = xla_tuple %s2, %s3
  %s5 = sld [smem:[#allocation0]]
  $region53: #{mlp_forward.2} parent=0
    _
  %s7 = ssub.s32 1, %s5
  %s8 = scalar_select 0, %s7, %s5
  loop: start=0, step=1, limit=4
  $region2: #{mlp_forward.2} parent=0 // loop_pre_header
    _
  $region3: #{mlp_forward.2} parent=0 // loop_header
    %s10 = sphi 0, %s14
    %p11 = scmp.ge.s32.totalorder %s10, 4
    %s17 = sphi 0, %s29
    %s18 = sphi 0, %s25
    %s19 = sphi 0, %s17
    %s20 = sphi 0, %s18
    %s21 = sphi 0, %s19
    %s22 = sphi 0, %s20
    %s34 = sphi 0, %s36
    %s37 = sphi 0, %s34
    %s38 = sphi 0, %s37
    %s54 = sphi 0, %s38
    %s58 = sphi 0, %s58
    %s60 = sphi 0, %s58
    %s61 = sphi 0, %s60
    %s75 = sphi 0, %s61
    %s81 = sphi 0, %s83
    %s84 = sphi 0, %s81
    %s85 = sphi 0, %s84
    %s101 = sphi 0, %s85
    %s107 = sphi 0, %s109
    %s110 = sphi 0, %s107
    %s111 = sphi 0, %s110
    %s127 = sphi 0, %s111
  $region4: #{mlp_forward.2} parent=0 // loop_header_branch
    %13 = sbr.rel (%p11) target = $region8
  $region5: #{mlp_forward.2} parent=0 // loop_body
    %s15 = ssub.s32 %s10, 1
    %s16 = ssub.s32 %s10, 2
    %s23 = sadd.s32 1, %s18
    %p24 = scmp.ge.s32.totalorder %s23, 1
    %s25 = scalar_select %p24, 0, %s23
    %s26 = sadd.s32 1, %s17
    %s27 = scalar_select %p24, %s26, %s17
    %p28 = scmp.ge.s32.totalorder %s27, 2
    %s29 = scalar_select %p28, 0, %s27
    %s30 = sadd.s32 %s17, %s18
    %s31 = sadd.s32 %s29, %s25
    %s32 = ssub.s32 %s30, %s31
    %p33 = scmp.eq.s32.totalorder %s32, 0
    %s35 = sadd.s32 %s34, 1
    %s36 = scalar_select %p33, %s34, %s35
    %p39 = pneg %p33
    %p40 = scmp.eq.s32.totalorder %s10, 1
    %p41 = por %p39, %p40
    %p42 = scmp.ne.s32.totalorder %s34, %s37
    %p43 = scmp.eq.s32.totalorder %s10, 0
    %p44 = por %p42, %p43
    %p45 = scmp.ne.s32.totalorder %s34, %s37
    %p46 = scmp.eq.s32.totalorder %s15, 1
    %p47 = por %p45, %p46
    %p48 = scmp.ne.s32.totalorder %s37, %s38
    %p49 = scmp.eq.s32.totalorder %s15, 0
    %p50 = por %p48, %p49
    %p51 = scmp.ne.s32.totalorder %s37, %s38
    %p52 = scmp.eq.s32.totalorder %s16, 1
    %p53 = por %p51, %p52
    %p55 = scmp.ne.s32.totalorder %s38, %s54
    %p56 = scmp.eq.s32.totalorder %s16, 0
    %p57 = por %p55, %p56
    %s59 = sadd.s32 %s58, 1
    %p62 = scmp.eq.s32.totalorder %s10, 1
    %p63 = scmp.ne.s32.totalorder %s58, %s60
    %p64 = scmp.eq.s32.totalorder %s10, 0
    %p65 = por %p63, %p64
    %p66 = scmp.ne.s32.totalorder %s58, %s60
    %p67 = scmp.eq.s32.totalorder %s15, 1
    %p68 = por %p66, %p67
    %p69 = scmp.ne.s32.totalorder %s60, %s61
    %p70 = scmp.eq.s32.totalorder %s15, 0
    %p71 = por %p69, %p70
    %p72 = scmp.ne.s32.totalorder %s60, %s61
    %p73 = scmp.eq.s32.totalorder %s16, 1
    %p74 = por %p72, %p73
    %p76 = scmp.ne.s32.totalorder %s61, %s75
    %p77 = scmp.eq.s32.totalorder %s16, 0
    %p78 = por %p76, %p77
    %s79 = ssub.s32 %s17, %s29
    %p80 = scmp.eq.s32.totalorder %s79, 0
    %s82 = sadd.s32 %s81, 1
    %s83 = scalar_select %p80, %s81, %s82
    %p86 = pneg %p80
    %p87 = scmp.eq.s32.totalorder %s10, 1
    %p88 = por %p86, %p87
    %p89 = scmp.ne.s32.totalorder %s81, %s84
    %p90 = scmp.eq.s32.totalorder %s10, 0
    %p91 = por %p89, %p90
    %p92 = scmp.ne.s32.totalorder %s81, %s84
    %p93 = scmp.eq.s32.totalorder %s15, 1
    %p94 = por %p92, %p93
    %p95 = scmp.ne.s32.totalorder %s84, %s85
    %p96 = scmp.eq.s32.totalorder %s15, 0
    %p97 = por %p95, %p96
    %p98 = scmp.ne.s32.totalorder %s84, %s85
    %p99 = scmp.eq.s32.totalorder %s16, 1
    %p100 = por %p98, %p99
    %p102 = scmp.ne.s32.totalorder %s85, %s101
    %p103 = scmp.eq.s32.totalorder %s16, 0
    %p104 = por %p102, %p103
    %s105 = ssub.s32 %s17, %s29
    %p106 = scmp.eq.s32.totalorder %s105, 0
    %s108 = sadd.s32 %s107, 1
    %s109 = scalar_select %p106, %s107, %s108
    %p112 = pneg %p106
    %p113 = scmp.eq.s32.totalorder %s10, 1
    %p114 = por %p112, %p113
    %p115 = scmp.ne.s32.totalorder %s107, %s110
    %p116 = scmp.eq.s32.totalorder %s10, 0
    %p117 = por %p115, %p116
    %p118 = scmp.ne.s32.totalorder %s107, %s110
    %p119 = scmp.eq.s32.totalorder %s15, 1
    %p120 = por %p118, %p119
    %p121 = scmp.ne.s32.totalorder %s110, %s111
    %p122 = scmp.eq.s32.totalorder %s15, 0
    %p123 = por %p121, %p122
    %p124 = scmp.ne.s32.totalorder %s110, %s111
    %p125 = scmp.eq.s32.totalorder %s16, 1
    %p126 = por %p124, %p125
    %p128 = scmp.ne.s32.totalorder %s111, %s127
    %p129 = scmp.eq.s32.totalorder %s16, 0
    %p130 = por %p128, %p129
    %p131 = scmp.le.s32.totalorder 1, %s10
    %p132 = scmp.lt.s32.totalorder %s10, 3
    %p133 = pnand %p131, %p132
    %p134 = pneg %p133
    // Predicated region
    $region9: #{mlp_forward.2} parent=5 // pred_check
      _
    $region10: #{mlp_forward.2} parent=5 // pred_check_branch
      %136 = sbr.rel (%p133) target = $region12
    $region11: #{mlp_forward.2} parent=5 // pred_region
      %s137 = ssub.s32 %s10, 1
      // Predicated region
      $region13: #{mlp_forward.2} parent=11 // pred_check
        %p138 = pneg %p71
      $region14: #{mlp_forward.2} parent=11 // pred_check_branch
        %140 = sbr.rel (%p138) target = $region16
      $region15: #{mlp_forward.2} parent=11 // pred_region
        _
      $region16: #{mlp_forward.2} parent=11 // pred_fallthru
        _
    $region12: #{mlp_forward.2} parent=5 // pred_fallthru
      _
    %p141 = scmp.lt.s32.totalorder %s10, 2
    // Predicated region
    $region17: #{mlp_forward.2} parent=5 // pred_check
      %p142 = pneg %p141
    $region18: #{mlp_forward.2} parent=5 // pred_check_branch
      %144 = sbr.rel (%p142) target = $region20
    $region19: #{mlp_forward.2} parent=5 // pred_region
      // Predicated region
      $region21: #{mlp_forward.2} parent=19 // pred_check
        %p145 = pneg %p44
      $region22: #{mlp_forward.2} parent=19 // pred_check_branch
        %147 = sbr.rel (%p145) target = $region24
      $region23: #{mlp_forward.2} parent=19 // pred_region
        %s148 = sadd.s32 %s17, %s18
        %s149 = smul.u32 64, %s148
        %p150 = scmp.lt.s32.totalorder %s149, 127
        %s151 = scalar_select %p150, %s149, 127
        %s152 = smul.addr %s151, 4
        %s153 = scalar_lea.vmem %s0, %s152
        %s154 = sadd.s32 %s17, %s18
        %s155 = smul.u32 64, %s154
      $region24: #{mlp_forward.2} parent=19 // pred_fallthru
        _
    $region20: #{mlp_forward.2} parent=5 // pred_fallthru
      _
    %p156 = scmp.le.s32.totalorder 1, %s10
    %p157 = scmp.lt.s32.totalorder %s10, 3
    %p158 = pnand %p156, %p157
    %p159 = pneg %p158
    // Predicated region
    $region25: #{mlp_forward.2} parent=5 // pred_check
      _
    $region26: #{mlp_forward.2} parent=5 // pred_check_branch
      %161 = sbr.rel (%p158) target = $region28
    $region27: #{mlp_forward.2} parent=5 // pred_region
      %s162 = ssub.s32 %s10, 1
      %s163 = sadd.s32 %s19, %s20
      %s164 = smul.u32 64, %s163
      %p165 = scmp.lt.s32.totalorder %s164, 127
      %s166 = scalar_select %p165, %s164, 127
      %s167 = smul.addr %s166, 4
      %s168 = scalar_lea.vmem %s0, %s167
      %p169 = pneg %p50
      %p170 = pneg %p47
      %p171 = pneg %p71
      %p172 = pneg %p68
      %p173 = pneg %p97
      %p174 = pneg %p94
      %p175 = scmp.lt.s32.totalorder %s19, 1
      %s176 = scalar_select %p175, %s19, 1
      %s177 = smul.addr %s176, 2
      %s178 = scalar_lea.vmem %s2, %s177
      %p179 = pneg %p123
      %p180 = pneg %p120
      %p181 = scmp.lt.s32.totalorder %s19, 1
      %s182 = scalar_select %p181, %s19, 1
      %s183 = smul.addr %s182, 2
      %s184 = scalar_lea.vmem %s3, %s183
      %s185 = sadd.s32 %s19, %s20
      %s186 = smul.u32 64, %s185
      %p187 = scmp.lt.s32.totalorder %s186, 127
      %s188 = scalar_select %p187, %s186, 127
      %s189 = smul.addr %s188, 4
      %s190 = scalar_lea.vmem %s0, %s189
      %s191 = sadd.s32 %s19, %s20
      %s192 = smul.u32 64, %s191
      %p193 = scmp.lt.s32.totalorder %s19, 1
      %s194 = scalar_select %p193, %s19, 1
      %s195 = smul.addr %s194, 2
      %s196 = scalar_lea.vmem %s2, %s195
      %p197 = scmp.lt.s32.totalorder %s19, 1
      %s198 = scalar_select %p197, %s19, 1
      %s199 = smul.addr %s198, 2
      %s200 = scalar_lea.vmem %s3, %s199
      %p202 = scmp.eq.s32.totalorder %s20, 0
      // Predicated region
      $region29: #{mlp_forward.2} parent=27 // pred_check
        %p203 = pneg %p202
      $region30: #{mlp_forward.2} parent=27 // pred_check_branch
        %205 = sbr.rel (%p203) target = $region32
      $region31: #{mlp_forward.2} parent=27 // pred_region
        %v206 = vlaneseq
        %vm207 = vcmp.ge.s32.totalorder %v206, 0
        %vm208 = vcmp.lt.s32.totalorder %v206, 256
        %vm209 = vmand %vm207, %vm208
        %210 = vst.msk [vmem:[%s196] sm:$0x3] %vm209, 0.0
        %211 = vst.msk [vmem:[%s200] sm:$0x3] %vm209, 0.0
      $region32: #{mlp_forward.2} parent=27 // pred_fallthru
        _
      %v212 = vld [vmem:[%s190] sm:$0xf]
      %v213 = vld [vmem:[%s190 + $0x4] sm:$0xf]
      %v214 = vld [vmem:[%s190 + $0x8] sm:$0xf]
      %v215 = vld [vmem:[%s190 + $0xc] sm:$0xf]
      %v216 = vld [vmem:[%s190 + $0x10] sm:$0xf]
      %v217 = vld [vmem:[%s190 + $0x14] sm:$0xf]
      %v218 = vld [vmem:[%s190 + $0x18] sm:$0xf]
      %v219 = vld [vmem:[%s190 + $0x1c] sm:$0xf]
      %v220 = vld [vmem:[%s190 + $0x20] sm:$0xf]
      %v221 = vld [vmem:[%s190 + $0x24] sm:$0xf]
      %v222 = vld [vmem:[%s190 + $0x28] sm:$0xf]
      %v223 = vld [vmem:[%s190 + $0x2c] sm:$0xf]
      %v224 = vld [vmem:[%s190 + $0x30] sm:$0xf]
      %v225 = vld [vmem:[%s190 + $0x34] sm:$0xf]
      %v226 = vld [vmem:[%s190 + $0x38] sm:$0xf]
      %v227 = vld [vmem:[%s190 + $0x3c] sm:$0xf]
      %v228 = vld [vmem:[%s190 + $0x40] sm:$0xf]
      %v229 = vld [vmem:[%s190 + $0x44] sm:$0xf]
      %v230 = vld [vmem:[%s190 + $0x48] sm:$0xf]
      %v231 = vld [vmem:[%s190 + $0x4c] sm:$0xf]
      %v232 = vld [vmem:[%s190 + $0x50] sm:$0xf]
      %v233 = vld [vmem:[%s190 + $0x54] sm:$0xf]
      %v234 = vld [vmem:[%s190 + $0x58] sm:$0xf]
      %v235 = vld [vmem:[%s190 + $0x5c] sm:$0xf]
      %v236 = vld [vmem:[%s190 + $0x60] sm:$0xf]
      %v237 = vld [vmem:[%s190 + $0x64] sm:$0xf]
      %v238 = vld [vmem:[%s190 + $0x68] sm:$0xf]
      %v239 = vld [vmem:[%s190 + $0x6c] sm:$0xf]
      %v240 = vld [vmem:[%s190 + $0x70] sm:$0xf]
      %v241 = vld [vmem:[%s190 + $0x74] sm:$0xf]
      %v242 = vld [vmem:[%s190 + $0x78] sm:$0xf]
      %v243 = vld [vmem:[%s190 + $0x7c] sm:$0xf]
      %v244 = vld [vmem:[%s190 + $0x80] sm:$0xf]
      %v245 = vld [vmem:[%s190 + $0x84] sm:$0xf]
      %v246 = vld [vmem:[%s190 + $0x88] sm:$0xf]
      %v247 = vld [vmem:[%s190 + $0x8c] sm:$0xf]
      %v248 = vld [vmem:[%s190 + $0x90] sm:$0xf]
      %v249 = vld [vmem:[%s190 + $0x94] sm:$0xf]
      %v250 = vld [vmem:[%s190 + $0x98] sm:$0xf]
      %v251 = vld [vmem:[%s190 + $0x9c] sm:$0xf]
      %v252 = vld [vmem:[%s190 + $0xa0] sm:$0xf]
      %v253 = vld [vmem:[%s190 + $0xa4] sm:$0xf]
      %v254 = vld [vmem:[%s190 + $0xa8] sm:$0xf]
      %v255 = vld [vmem:[%s190 + $0xac] sm:$0xf]
      %v256 = vld [vmem:[%s190 + $0xb0] sm:$0xf]
      %v257 = vld [vmem:[%s190 + $0xb4] sm:$0xf]
      %v258 = vld [vmem:[%s190 + $0xb8] sm:$0xf]
      %v259 = vld [vmem:[%s190 + $0xbc] sm:$0xf]
      %v260 = vld [vmem:[%s190 + $0xc0] sm:$0xf]
      %v261 = vld [vmem:[%s190 + $0xc4] sm:$0xf]
      %v262 = vld [vmem:[%s190 + $0xc8] sm:$0xf]
      %v263 = vld [vmem:[%s190 + $0xcc] sm:$0xf]
      %v264 = vld [vmem:[%s190 + $0xd0] sm:$0xf]
      %v265 = vld [vmem:[%s190 + $0xd4] sm:$0xf]
      %v266 = vld [vmem:[%s190 + $0xd8] sm:$0xf]
      %v267 = vld [vmem:[%s190 + $0xdc] sm:$0xf]
      %v268 = vld [vmem:[%s190 + $0xe0] sm:$0xf]
      %v269 = vld [vmem:[%s190 + $0xe4] sm:$0xf]
      %v270 = vld [vmem:[%s190 + $0xe8] sm:$0xf]
      %v271 = vld [vmem:[%s190 + $0xec] sm:$0xf]
      %v272 = vld [vmem:[%s190 + $0xf0] sm:$0xf]
      %v273 = vld [vmem:[%s190 + $0xf4] sm:$0xf]
      %v274 = vld [vmem:[%s190 + $0xf8] sm:$0xf]
      %v275 = vld [vmem:[%s190 + $0xfc] sm:$0xf]
      %v276 = vld [vmem:[%s1] sm:$0xff]
      %v277 = vld [vmem:[%s1 + $0x8] sm:$0xff]
      %v278 = vld [vmem:[%s1 + $0x10] sm:$0xff]
      %v279 = vld [vmem:[%s1 + $0x18] sm:$0xff]
      %v280 = vld [vmem:[%s1 + $0x20] sm:$0xff]
      %v281 = vld [vmem:[%s1 + $0x28] sm:$0xff]
      %v282 = vld [vmem:[%s1 + $0x30] sm:$0xff]
      %v283 = vld [vmem:[%s1 + $0x38] sm:$0xff]
      %v284 = vld [vmem:[%s1 + $0x40] sm:$0xff]
      %v285 = vld [vmem:[%s1 + $0x48] sm:$0xff]
      %v286 = vld [vmem:[%s1 + $0x50] sm:$0xff]
      %v287 = vld [vmem:[%s1 + $0x58] sm:$0xff]
      %v288 = vld [vmem:[%s1 + $0x60] sm:$0xff]
      %v289 = vld [vmem:[%s1 + $0x68] sm:$0xff]
      %v290 = vld [vmem:[%s1 + $0x70] sm:$0xff]
      %v291 = vld [vmem:[%s1 + $0x78] sm:$0xff]
      %v356 = vunpack.c.l.b16 %v212
      %v357 = vunpack.c.l.b16 %v213
      %v358 = vunpack.c.l.b16 %v214
      %v359 = vunpack.c.l.b16 %v215
      %v360 = vunpack.c.l.b16 %v216
      %v361 = vunpack.c.l.b16 %v217
      %v362 = vunpack.c.l.b16 %v218
      %v363 = vunpack.c.l.b16 %v219
      %v364 = vunpack.c.l.b16 %v220
      %v365 = vunpack.c.l.b16 %v221
      %v366 = vunpack.c.l.b16 %v222
      %v367 = vunpack.c.l.b16 %v223
      %v368 = vunpack.c.l.b16 %v224
      %v369 = vunpack.c.l.b16 %v225
      %v370 = vunpack.c.l.b16 %v226
      %v371 = vunpack.c.l.b16 %v227
      %v372 = vunpack.c.l.b16 %v228
      %v373 = vunpack.c.l.b16 %v229
      %v374 = vunpack.c.l.b16 %v230
      %v375 = vunpack.c.l.b16 %v231
      %v376 = vunpack.c.l.b16 %v232
      %v377 = vunpack.c.l.b16 %v233
      %v378 = vunpack.c.l.b16 %v234
      %v379 = vunpack.c.l.b16 %v235
      %v380 = vunpack.c.l.b16 %v236
      %v381 = vunpack.c.l.b16 %v237
      %v382 = vunpack.c.l.b16 %v238
      %v383 = vunpack.c.l.b16 %v239
      %v384 = vunpack.c.l.b16 %v240
      %v385 = vunpack.c.l.b16 %v241
      %v386 = vunpack.c.l.b16 %v242
      %v387 = vunpack.c.l.b16 %v243
      %v388 = vunpack.c.l.b16 %v244
      %v389 = vunpack.c.l.b16 %v245
      %v390 = vunpack.c.l.b16 %v246
      %v391 = vunpack.c.l.b16 %v247
      %v392 = vunpack.c.l.b16 %v248
      %v393 = vunpack.c.l.b16 %v249
      %v394 = vunpack.c.l.b16 %v250
      %v395 = vunpack.c.l.b16 %v251
      %v396 = vunpack.c.l.b16 %v252
      %v397 = vunpack.c.l.b16 %v253
      %v398 = vunpack.c.l.b16 %v254
      %v399 = vunpack.c.l.b16 %v255
      %v400 = vunpack.c.l.b16 %v256
      %v401 = vunpack.c.l.b16 %v257
      %v402 = vunpack.c.l.b16 %v258
      %v403 = vunpack.c.l.b16 %v259
      %v404 = vunpack.c.l.b16 %v260
      %v405 = vunpack.c.l.b16 %v261
      %v406 = vunpack.c.l.b16 %v262
      %v407 = vunpack.c.l.b16 %v263
      %v408 = vunpack.c.l.b16 %v264
      %v409 = vunpack.c.l.b16 %v265
      %v410 = vunpack.c.l.b16 %v266
      %v411 = vunpack.c.l.b16 %v267
      %v412 = vunpack.c.l.b16 %v268
      %v413 = vunpack.c.l.b16 %v269
      %v414 = vunpack.c.l.b16 %v270
      %v415 = vunpack.c.l.b16 %v271
      %v416 = vunpack.c.l.b16 %v272
      %v417 = vunpack.c.l.b16 %v273
      %v418 = vunpack.c.l.b16 %v274
      %v419 = vunpack.c.l.b16 %v275
      %v420 = vpack.c.b16 %v357, %v356
      %v421 = vpack.c.b16 %v359, %v358
      %v422 = vpack.c.b16 %v361, %v360
      %v423 = vpack.c.b16 %v363, %v362
      %v424 = vpack.c.b16 %v365, %v364
      %v425 = vpack.c.b16 %v367, %v366
      %v426 = vpack.c.b16 %v369, %v368
      %v427 = vpack.c.b16 %v371, %v370
      %v428 = vpack.c.b16 %v373, %v372
      %v429 = vpack.c.b16 %v375, %v374
      %v430 = vpack.c.b16 %v377, %v376
      %v431 = vpack.c.b16 %v379, %v378
      %v432 = vpack.c.b16 %v381, %v380
      %v433 = vpack.c.b16 %v383, %v382
      %v434 = vpack.c.b16 %v385, %v384
      %v435 = vpack.c.b16 %v387, %v386
      %v436 = vpack.c.b16 %v389, %v388
      %v437 = vpack.c.b16 %v391, %v390
      %v438 = vpack.c.b16 %v393, %v392
      %v439 = vpack.c.b16 %v395, %v394
      %v440 = vpack.c.b16 %v397, %v396
      %v441 = vpack.c.b16 %v399, %v398
      %v442 = vpack.c.b16 %v401, %v400
      %v443 = vpack.c.b16 %v403, %v402
      %v444 = vpack.c.b16 %v405, %v404
      %v445 = vpack.c.b16 %v407, %v406
      %v446 = vpack.c.b16 %v409, %v408
      %v447 = vpack.c.b16 %v411, %v410
      %v448 = vpack.c.b16 %v413, %v412
      %v449 = vpack.c.b16 %v415, %v414
      %v450 = vpack.c.b16 %v417, %v416
      %v451 = vpack.c.b16 %v419, %v418
      %v500 = vunpack.c.l.b16 %v276
      %v501 = vunpack.c.h.b16 %v276
      %v502 = vunpack.c.l.b16 %v277
      %v503 = vunpack.c.h.b16 %v277
      %v504 = vunpack.c.l.b16 %v278
      %v505 = vunpack.c.h.b16 %v278
      %v506 = vunpack.c.l.b16 %v279
      %v507 = vunpack.c.h.b16 %v279
      %v508 = vunpack.c.l.b16 %v280
      %v509 = vunpack.c.h.b16 %v280
      %v510 = vunpack.c.l.b16 %v281
      %v511 = vunpack.c.h.b16 %v281
      %v512 = vunpack.c.l.b16 %v282
      %v513 = vunpack.c.h.b16 %v282
      %v514 = vunpack.c.l.b16 %v283
      %v515 = vunpack.c.h.b16 %v283
      %v516 = vunpack.c.l.b16 %v284
      %v517 = vunpack.c.h.b16 %v284
      %v518 = vunpack.c.l.b16 %v285
      %v519 = vunpack.c.h.b16 %v285
      %v520 = vunpack.c.l.b16 %v286
      %v521 = vunpack.c.h.b16 %v286
      %v522 = vunpack.c.l.b16 %v287
      %v523 = vunpack.c.h.b16 %v287
      %v524 = vunpack.c.l.b16 %v288
      %v525 = vunpack.c.h.b16 %v288
      %v526 = vunpack.c.l.b16 %v289
      %v527 = vunpack.c.h.b16 %v289
      %v528 = vunpack.c.l.b16 %v290
      %v529 = vunpack.c.h.b16 %v290
      %v530 = vunpack.c.l.b16 %v291
      %v531 = vunpack.c.h.b16 %v291
      %v532 = vpack.c.b16 %v502, %v500
      %v533 = vpack.c.b16 %v503, %v501
      %v534 = vpack.c.b16 %v506, %v504
      %v535 = vpack.c.b16 %v507, %v505
      %v536 = vpack.c.b16 %v510, %v508
      %v537 = vpack.c.b16 %v511, %v509
      %v538 = vpack.c.b16 %v514, %v512
      %v539 = vpack.c.b16 %v515, %v513
      %v540 = vpack.c.b16 %v518, %v516
      %v541 = vpack.c.b16 %v519, %v517
      %v542 = vpack.c.b16 %v522, %v520
      %v543 = vpack.c.b16 %v523, %v521
      %v544 = vpack.c.b16 %v526, %v524
      %v545 = vpack.c.b16 %v527, %v525
      %v546 = vpack.c.b16 %v530, %v528
      %v547 = vpack.c.b16 %v531, %v529
      %564 = vmatprep.subr.bf16.mxu0 %v533
      %565 = vmatpush1.bf16.msra.mxu0 %v532
      %566 = vmatprep.subr.bf16.mxu0 %v535
      %567 = vmatpush1.bf16.msra.mxu0 %v534
      %568 = vmatprep.subr.bf16.mxu0 %v537
      %569 = vmatpush1.bf16.msra.mxu0 %v536
      %570 = vmatprep.subr.bf16.mxu0 %v539
      %571 = vmatpush1.bf16.msra.mxu0 %v538
      %572 = vmatprep.subr.bf16.mxu0 %v541
      %573 = vmatpush1.bf16.msra.mxu0 %v540
      %574 = vmatprep.subr.bf16.mxu0 %v543
      %575 = vmatpush1.bf16.msra.mxu0 %v542
      %576 = vmatprep.subr.bf16.mxu0 %v545
      %577 = vmatpush1.bf16.msra.mxu0 %v544
      %578 = vmatprep.subr.bf16.mxu0 %v547
      %579 = vmatpush1.bf16.msra.mxu0 %v546
      %580 = vmatprep.subr.bf16.mxu0 0
      %581 = vmatpush1.bf16.msra.mxu0 0
      %582 = vmatprep.subr.bf16.mxu0 0
      %583 = vmatpush1.bf16.msra.mxu0 0
      %584 = vmatprep.subr.bf16.mxu0 0
      %585 = vmatpush1.bf16.msra.mxu0 0
      %586 = vmatprep.subr.bf16.mxu0 0
      %587 = vmatpush1.bf16.msra.mxu0 0
      %588 = vmatprep.subr.bf16.mxu0 0
      %589 = vmatpush1.bf16.msra.mxu0 0
      %590 = vmatprep.subr.bf16.mxu0 0
      %591 = vmatpush1.bf16.msra.mxu0 0
      %592 = vmatprep.subr.bf16.mxu0 0
      %593 = vmatpush1.bf16.msra.mxu0 0
      %594 = vmatprep.subr.bf16.mxu0 0
      %595 = vmatpush1.bf16.msra.mxu0 0
      %596 = vmatprep.mubr.bf16.mxu0 0
      %597 = vmatmul.mubr.bf16.gmra.mrb[0].mxu0 %v420
      %v598 = vpop.f32.mrb[0].mxu0
      %v599 = vadd.f32 0.0, %v598
      %v600 = vpop.f32.mrb[0].mxu0
      %v601 = vadd.f32 0.0, %v600
      %v602 = vpop.f32.mrb[0].mxu0
      %v603 = vadd.f32 0.0, %v602
      %v604 = vpop.f32.mrb[0].mxu0
      %v605 = vadd.f32 0.0, %v604
      %606 = vmatprep.mubr.bf16.mxu0 0
      %607 = vmatmul.mubr.bf16.gmra.mrb[0].mxu0 %v421
      %v608 = vpop.f32.mrb[0].mxu0
      %v609 = vadd.f32 0.0, %v608
      %v610 = vpop.f32.mrb[0].mxu0
      %v611 = vadd.f32 0.0, %v610
      %v612 = vpop.f32.mrb[0].mxu0
      %v613 = vadd.f32 0.0, %v612
      %v614 = vpop.f32.mrb[0].mxu0
      %v615 = vadd.f32 0.0, %v614
      %616 = vmatprep.mubr.bf16.mxu0 0
      %617 = vmatmul.mubr.bf16.gmra.mrb[0].mxu0 %v422
      %v618 = vpop.f32.mrb[0].mxu0
      %v619 = vadd.f32 0.0, %v618
      %v620 = vpop.f32.mrb[0].mxu0
      %v621 = vadd.f32 0.0, %v620
      %v622 = vpop.f32.mrb[0].mxu0
      %v623 = vadd.f32 0.0, %v622
      %v624 = vpop.f32.mrb[0].mxu0
      %v625 = vadd.f32 0.0, %v624
      %626 = vmatprep.mubr.bf16.mxu0 0
      %627 = vmatmul.mubr.bf16.gmra.mrb[0].mxu0 %v423
      %v628 = vpop.f32.mrb[0].mxu0
      %v629 = vadd.f32 0.0, %v628
      %v630 = vpop.f32.mrb[0].mxu0
      %v631 = vadd.f32 0.0, %v630
      %v632 = vpop.f32.mrb[0].mxu0
      %v633 = vadd.f32 0.0, %v632
      %v634 = vpop.f32.mrb[0].mxu0
      %v635 = vadd.f32 0.0, %v634
      %636 = vmatprep.mubr.bf16.mxu0 0
      %637 = vmatmul.mubr.bf16.gmra.mrb[0].mxu0 %v424
      %v638 = vpop.f32.mrb[0].mxu0
      %v639 = vadd.f32 0.0, %v638
      %v640 = vpop.f32.mrb[0].mxu0
      %v641 = vadd.f32 0.0, %v640
      %v642 = vpop.f32.mrb[0].mxu0
      %v643 = vadd.f32 0.0, %v642
      %v644 = vpop.f32.mrb[0].mxu0
      %v645 = vadd.f32 0.0, %v644
      %646 = vmatprep.mubr.bf16.mxu0 0
      %647 = vmatmul.mubr.bf16.gmra.mrb[0].mxu0 %v425
      %v648 = vpop.f32.mrb[0].mxu0
      %v649 = vadd.f32 0.0, %v648
      %v650 = vpop.f32.mrb[0].mxu0
      %v651 = vadd.f32 0.0, %v650
      %v652 = vpop.f32.mrb[0].mxu0
      %v653 = vadd.f32 0.0, %v652
      %v654 = vpop.f32.mrb[0].mxu0
      %v655 = vadd.f32 0.0, %v654
      %656 = vmatprep.mubr.bf16.mxu0 0
      %657 = vmatmul.mubr.bf16.gmra.mrb[0].mxu0 %v426
      %v658 = vpop.f32.mrb[0].mxu0
      %v659 = vadd.f32 0.0, %v658
      %v660 = vpop.f32.mrb[0].mxu0
      %v661 = vadd.f32 0.0, %v660
      %v662 = vpop.f32.mrb[0].mxu0
      %v663 = vadd.f32 0.0, %v662
      %v664 = vpop.f32.mrb[0].mxu0
      %v665 = vadd.f32 0.0, %v664
      %666 = vmatprep.mubr.bf16.mxu0 0
      %667 = vmatmul.mubr.bf16.gmra.mrb[0].mxu0 %v427
      %v668 = vpop.f32.mrb[0].mxu0
      %v669 = vadd.f32 0.0, %v668
      %v670 = vpop.f32.mrb[0].mxu0
      %v671 = vadd.f32 0.0, %v670
      %v672 = vpop.f32.mrb[0].mxu0
      %v673 = vadd.f32 0.0, %v672
      %v674 = vpop.f32.mrb[0].mxu0
      %v675 = vadd.f32 0.0, %v674
      %676 = vmatprep.mubr.bf16.mxu0 0
      %677 = vmatmul.mubr.bf16.gmra.mrb[0].mxu0 %v428
      %v678 = vpop.f32.mrb[0].mxu0
      %v679 = vadd.f32 0.0, %v678
      %v680 = vpop.f32.mrb[0].mxu0
      %v681 = vadd.f32 0.0, %v680
      %v682 = vpop.f32.mrb[0].mxu0
      %v683 = vadd.f32 0.0, %v682
      %v684 = vpop.f32.mrb[0].mxu0
      %v685 = vadd.f32 0.0, %v684
      %686 = vmatprep.mubr.bf16.mxu0 0
      %687 = vmatmul.mubr.bf16.gmra.mrb[0].mxu0 %v429
      %v688 = vpop.f32.mrb[0].mxu0
      %v689 = vadd.f32 0.0, %v688
      %v690 = vpop.f32.mrb[0].mxu0
      %v691 = vadd.f32 0.0, %v690
      %v692 = vpop.f32.mrb[0].mxu0
      %v693 = vadd.f32 0.0, %v692
      %v694 = vpop.f32.mrb[0].mxu0
      %v695 = vadd.f32 0.0, %v694
      %696 = vmatprep.mubr.bf16.mxu0 0
      %697 = vmatmul.mubr.bf16.gmra.mrb[0].mxu0 %v430
      %v698 = vpop.f32.mrb[0].mxu0
      %v699 = vadd.f32 0.0, %v698
      %v700 = vpop.f32.mrb[0].mxu0
      %v701 = vadd.f32 0.0, %v700
      %v702 = vpop.f32.mrb[0].mxu0
      %v703 = vadd.f32 0.0, %v702
      %v704 = vpop.f32.mrb[0].mxu0
      %v705 = vadd.f32 0.0, %v704
      %706 = vmatprep.mubr.bf16.mxu0 0
      %707 = vmatmul.mubr.bf16.gmra.mrb[0].mxu0 %v431
      %v708 = vpop.f32.mrb[0].mxu0
      %v709 = vadd.f32 0.0, %v708
      %v710 = vpop.f32.mrb[0].mxu0
      %v711 = vadd.f32 0.0, %v710
      %v712 = vpop.f32.mrb[0].mxu0
      %v713 = vadd.f32 0.0, %v712
      %v714 = vpop.f32.mrb[0].mxu0
      %v715 = vadd.f32 0.0, %v714
      %716 = vmatprep.mubr.bf16.mxu0 0
      %717 = vmatmul.mubr.bf16.gmra.mrb[0].mxu0 %v432
      %v718 = vpop.f32.mrb[0].mxu0
      %v719 = vadd.f32 0.0, %v718
      %v720 = vpop.f32.mrb[0].mxu0
      %v721 = vadd.f32 0.0, %v720
      %v722 = vpop.f32.mrb[0].mxu0
      %v723 = vadd.f32 0.0, %v722
      %v724 = vpop.f32.mrb[0].mxu0
      %v725 = vadd.f32 0.0, %v724
      %726 = vmatprep.mubr.bf16.mxu0 0
      %727 = vmatmul.mubr.bf16.gmra.mrb[0].mxu0 %v433
      %v728 = vpop.f32.mrb[0].mxu0
      %v729 = vadd.f32 0.0, %v728
      %v730 = vpop.f32.mrb[0].mxu0
      %v731 = vadd.f32 0.0, %v730
      %v732 = vpop.f32.mrb[0].mxu0
      %v733 = vadd.f32 0.0, %v732
      %v734 = vpop.f32.mrb[0].mxu0
      %v735 = vadd.f32 0.0, %v734
      %736 = vmatprep.mubr.bf16.mxu0 0
      %737 = vmatmul.mubr.bf16.gmra.mrb[0].mxu0 %v434
      %v738 = vpop.f32.mrb[0].mxu0
      %v739 = vadd.f32 0.0, %v738
      %v740 = vpop.f32.mrb[0].mxu0
      %v741 = vadd.f32 0.0, %v740
      %v742 = vpop.f32.mrb[0].mxu0
      %v743 = vadd.f32 0.0, %v742
      %v744 = vpop.f32.mrb[0].mxu0
      %v745 = vadd.f32 0.0, %v744
      %746 = vmatprep.mubr.bf16.mxu0 0
      %747 = vmatmul.mubr.bf16.gmra.mrb[0].mxu0 %v435
      %v748 = vpop.f32.mrb[0].mxu0
      %v749 = vadd.f32 0.0, %v748
      %v750 = vpop.f32.mrb[0].mxu0
      %v751 = vadd.f32 0.0, %v750
      %v752 = vpop.f32.mrb[0].mxu0
      %v753 = vadd.f32 0.0, %v752
      %v754 = vpop.f32.mrb[0].mxu0
      %v755 = vadd.f32 0.0, %v754
      %756 = vmatprep.mubr.bf16.mxu0 0
      %757 = vmatmul.mubr.bf16.gmra.mrb[0].mxu0 %v436
      %v758 = vpop.f32.mrb[0].mxu0
      %v759 = vadd.f32 0.0, %v758
      %v760 = vpop.f32.mrb[0].mxu0
      %v761 = vadd.f32 0.0, %v760
      %v762 = vpop.f32.mrb[0].mxu0
      %v763 = vadd.f32 0.0, %v762
      %v764 = vpop.f32.mrb[0].mxu0
      %v765 = vadd.f32 0.0, %v764
      %766 = vmatprep.mubr.bf16.mxu0 0
      %767 = vmatmul.mubr.bf16.gmra.mrb[0].mxu0 %v437
      %v768 = vpop.f32.mrb[0].mxu0
      %v769 = vadd.f32 0.0, %v768
      %v770 = vpop.f32.mrb[0].mxu0
      %v771 = vadd.f32 0.0, %v770
      %v772 = vpop.f32.mrb[0].mxu0
      %v773 = vadd.f32 0.0, %v772
      %v774 = vpop.f32.mrb[0].mxu0
      %v775 = vadd.f32 0.0, %v774
      %776 = vmatprep.mubr.bf16.mxu0 0
      %777 = vmatmul.mubr.bf16.gmra.mrb[0].mxu0 %v438
      %v778 = vpop.f32.mrb[0].mxu0
      %v779 = vadd.f32 0.0, %v778
      %v780 = vpop.f32.mrb[0].mxu0
      %v781 = vadd.f32 0.0, %v780
      %v782 = vpop.f32.mrb[0].mxu0
      %v783 = vadd.f32 0.0, %v782
      %v784 = vpop.f32.mrb[0].mxu0
      %v785 = vadd.f32 0.0, %v784
      %786 = vmatprep.mubr.bf16.mxu0 0
      %787 = vmatmul.mubr.bf16.gmra.mrb[0].mxu0 %v439
      %v788 = vpop.f32.mrb[0].mxu0
      %v789 = vadd.f32 0.0, %v788
      %v790 = vpop.f32.mrb[0].mxu0
      %v791 = vadd.f32 0.0, %v790
      %v792 = vpop.f32.mrb[0].mxu0
      %v793 = vadd.f32 0.0, %v792
      %v794 = vpop.f32.mrb[0].mxu0
      %v795 = vadd.f32 0.0, %v794
      %796 = vmatprep.mubr.bf16.mxu0 0
      %797 = vmatmul.mubr.bf16.gmra.mrb[0].mxu0 %v440
      %v798 = vpop.f32.mrb[0].mxu0
      %v799 = vadd.f32 0.0, %v798
      %v800 = vpop.f32.mrb[0].mxu0
      %v801 = vadd.f32 0.0, %v800
      %v802 = vpop.f32.mrb[0].mxu0
      %v803 = vadd.f32 0.0, %v802
      %v804 = vpop.f32.mrb[0].mxu0
      %v805 = vadd.f32 0.0, %v804
      %806 = vmatprep.mubr.bf16.mxu0 0
      %807 = vmatmul.mubr.bf16.gmra.mrb[0].mxu0 %v441
      %v808 = vpop.f32.mrb[0].mxu0
      %v809 = vadd.f32 0.0, %v808
      %v810 = vpop.f32.mrb[0].mxu0
      %v811 = vadd.f32 0.0, %v810
      %v812 = vpop.f32.mrb[0].mxu0
      %v813 = vadd.f32 0.0, %v812
      %v814 = vpop.f32.mrb[0].mxu0
      %v815 = vadd.f32 0.0, %v814
      %816 = vmatprep.mubr.bf16.mxu0 0
      %817 = vmatmul.mubr.bf16.gmra.mrb[0].mxu0 %v442
      %v818 = vpop.f32.mrb[0].mxu0
      %v819 = vadd.f32 0.0, %v818
      %v820 = vpop.f32.mrb[0].mxu0
      %v821 = vadd.f32 0.0, %v820
      %v822 = vpop.f32.mrb[0].mxu0
      %v823 = vadd.f32 0.0, %v822
      %v824 = vpop.f32.mrb[0].mxu0
      %v825 = vadd.f32 0.0, %v824
      %826 = vmatprep.mubr.bf16.mxu0 0
      %827 = vmatmul.mubr.bf16.gmra.mrb[0].mxu0 %v443
      %v828 = vpop.f32.mrb[0].mxu0
      %v829 = vadd.f32 0.0, %v828
      %v830 = vpop.f32.mrb[0].mxu0
      %v831 = vadd.f32 0.0, %v830
      %v832 = vpop.f32.mrb[0].mxu0
      %v833 = vadd.f32 0.0, %v832
      %v834 = vpop.f32.mrb[0].mxu0
      %v835 = vadd.f32 0.0, %v834
      %836 = vmatprep.mubr.bf16.mxu0 0
      %837 = vmatmul.mubr.bf16.gmra.mrb[0].mxu0 %v444
      %v838 = vpop.f32.mrb[0].mxu0
      %v839 = vadd.f32 0.0, %v838
      %v840 = vpop.f32.mrb[0].mxu0
      %v841 = vadd.f32 0.0, %v840
      %v842 = vpop.f32.mrb[0].mxu0
      %v843 = vadd.f32 0.0, %v842
      %v844 = vpop.f32.mrb[0].mxu0
      %v845 = vadd.f32 0.0, %v844
      %846 = vmatprep.mubr.bf16.mxu0 0
      %847 = vmatmul.mubr.bf16.gmra.mrb[0].mxu0 %v445
      %v848 = vpop.f32.mrb[0].mxu0
      %v849 = vadd.f32 0.0, %v848
      %v850 = vpop.f32.mrb[0].mxu0
      %v851 = vadd.f32 0.0, %v850
      %v852 = vpop.f32.mrb[0].mxu0
      %v853 = vadd.f32 0.0, %v852
      %v854 = vpop.f32.mrb[0].mxu0
      %v855 = vadd.f32 0.0, %v854
      %856 = vmatprep.mubr.bf16.mxu0 0
      %857 = vmatmul.mubr.bf16.gmra.mrb[0].mxu0 %v446
      %v858 = vpop.f32.mrb[0].mxu0
      %v859 = vadd.f32 0.0, %v858
      %v860 = vpop.f32.mrb[0].mxu0
      %v861 = vadd.f32 0.0, %v860
      %v862 = vpop.f32.mrb[0].mxu0
      %v863 = vadd.f32 0.0, %v862
      %v864 = vpop.f32.mrb[0].mxu0
      %v865 = vadd.f32 0.0, %v864
      %866 = vmatprep.mubr.bf16.mxu0 0
      %867 = vmatmul.mubr.bf16.gmra.mrb[0].mxu0 %v447
      %v868 = vpop.f32.mrb[0].mxu0
      %v869 = vadd.f32 0.0, %v868
      %v870 = vpop.f32.mrb[0].mxu0
      %v871 = vadd.f32 0.0, %v870
      %v872 = vpop.f32.mrb[0].mxu0
      %v873 = vadd.f32 0.0, %v872
      %v874 = vpop.f32.mrb[0].mxu0
      %v875 = vadd.f32 0.0, %v874
      %876 = vmatprep.mubr.bf16.mxu0 0
      %877 = vmatmul.mubr.bf16.gmra.mrb[0].mxu0 %v448
      %v878 = vpop.f32.mrb[0].mxu0
      %v879 = vadd.f32 0.0, %v878
      %v880 = vpop.f32.mrb[0].mxu0
      %v881 = vadd.f32 0.0, %v880
      %v882 = vpop.f32.mrb[0].mxu0
      %v883 = vadd.f32 0.0, %v882
      %v884 = vpop.f32.mrb[0].mxu0
      %v885 = vadd.f32 0.0, %v884
      %886 = vmatprep.mubr.bf16.mxu0 0
      %887 = vmatmul.mubr.bf16.gmra.mrb[0].mxu0 %v449
      %v888 = vpop.f32.mrb[0].mxu0
      %v889 = vadd.f32 0.0, %v888
      %v890 = vpop.f32.mrb[0].mxu0
      %v891 = vadd.f32 0.0, %v890
      %v892 = vpop.f32.mrb[0].mxu0
      %v893 = vadd.f32 0.0, %v892
      %v894 = vpop.f32.mrb[0].mxu0
      %v895 = vadd.f32 0.0, %v894
      %896 = vmatprep.mubr.bf16.mxu0 0
      %897 = vmatmul.mubr.bf16.gmra.mrb[0].mxu0 %v450
      %v898 = vpop.f32.mrb[0].mxu0
      %v899 = vadd.f32 0.0, %v898
      %v900 = vpop.f32.mrb[0].mxu0
      %v901 = vadd.f32 0.0, %v900
      %v902 = vpop.f32.mrb[0].mxu0
      %v903 = vadd.f32 0.0, %v902
      %v904 = vpop.f32.mrb[0].mxu0
      %v905 = vadd.f32 0.0, %v904
      %906 = vmatprep.mubr.bf16.mxu0 0
      %907 = vmatmul.mubr.bf16.gmra.mrb[0].mxu0 %v451
      %v908 = vpop.f32.mrb[0].mxu0
      %v909 = vadd.f32 0.0, %v908
      %v910 = vpop.f32.mrb[0].mxu0
      %v911 = vadd.f32 0.0, %v910
      %v912 = vpop.f32.mrb[0].mxu0
      %v913 = vadd.f32 0.0, %v912
      %v914 = vpop.f32.mrb[0].mxu0
      %v915 = vadd.f32 0.0, %v914
      %916 = vdwg.mxu0
      %v917 = vld [vmem:[%s196] sm:$0x3]
      %v918 = vadd.f32 %v599, %v603
      %v919 = vadd.f32 %v918, %v609
      %v920 = vadd.f32 %v919, %v613
      %v921 = vadd.f32 %v920, %v619
      %v922 = vadd.f32 %v921, %v623
      %v923 = vadd.f32 %v922, %v629
      %v924 = vadd.f32 %v923, %v633
      %v925 = vadd.f32 %v924, %v639
      %v926 = vadd.f32 %v925, %v643
      %v927 = vadd.f32 %v926, %v649
      %v928 = vadd.f32 %v927, %v653
      %v929 = vadd.f32 %v928, %v659
      %v930 = vadd.f32 %v929, %v663
      %v931 = vadd.f32 %v930, %v669
      %v932 = vadd.f32 %v931, %v673
      %v933 = vadd.f32 %v932, %v679
      %v934 = vadd.f32 %v933, %v683
      %v935 = vadd.f32 %v934, %v689
      %v936 = vadd.f32 %v935, %v693
      %v937 = vadd.f32 %v936, %v699
      %v938 = vadd.f32 %v937, %v703
      %v939 = vadd.f32 %v938, %v709
      %v940 = vadd.f32 %v939, %v713
      %v941 = vadd.f32 %v940, %v719
      %v942 = vadd.f32 %v941, %v723
      %v943 = vadd.f32 %v942, %v729
      %v944 = vadd.f32 %v943, %v733
      %v945 = vadd.f32 %v944, %v739
      %v946 = vadd.f32 %v945, %v743
      %v947 = vadd.f32 %v946, %v749
      %v948 = vadd.f32 %v947, %v753
      %v949 = vadd.f32 %v948, %v759
      %v950 = vadd.f32 %v949, %v763
      %v951 = vadd.f32 %v950, %v769
      %v952 = vadd.f32 %v951, %v773
      %v953 = vadd.f32 %v952, %v779
      %v954 = vadd.f32 %v953, %v783
      %v955 = vadd.f32 %v954, %v789
      %v956 = vadd.f32 %v955, %v793
      %v957 = vadd.f32 %v956, %v799
      %v958 = vadd.f32 %v957, %v803
      %v959 = vadd.f32 %v958, %v809
      %v960 = vadd.f32 %v959, %v813
      %v961 = vadd.f32 %v960, %v819
      %v962 = vadd.f32 %v961, %v823
      %v963 = vadd.f32 %v962, %v829
      %v964 = vadd.f32 %v963, %v833
      %v965 = vadd.f32 %v964, %v839
      %v966 = vadd.f32 %v965, %v843
      %v967 = vadd.f32 %v966, %v849
      %v968 = vadd.f32 %v967, %v853
      %v969 = vadd.f32 %v968, %v859
      %v970 = vadd.f32 %v969, %v863
      %v971 = vadd.f32 %v970, %v869
      %v972 = vadd.f32 %v971, %v873
      %v973 = vadd.f32 %v972, %v879
      %v974 = vadd.f32 %v973, %v883
      %v975 = vadd.f32 %v974, %v889
      %v976 = vadd.f32 %v975, %v893
      %v977 = vadd.f32 %v976, %v899
      %v978 = vadd.f32 %v977, %v903
      %v979 = vadd.f32 %v978, %v909
      %v980 = vadd.f32 %v979, %v913
      %v981 = vrot.slane %v980, 4
      %v982 = vadd.f32 %v980, %v981
      %v983 = vrot.slane %v982, 2
      %v984 = vadd.f32 %v982, %v983
      %v985 = vrot.slane %v984, 1
      %v986 = vadd.f32 %v984, %v985
      %v987 = vadd.f32 %v601, %v605
      %v988 = vadd.f32 %v987, %v611
      %v989 = vadd.f32 %v988, %v615
      %v990 = vadd.f32 %v989, %v621
      %v991 = vadd.f32 %v990, %v625
      %v992 = vadd.f32 %v991, %v631
      %v993 = vadd.f32 %v992, %v635
      %v994 = vadd.f32 %v993, %v641
      %v995 = vadd.f32 %v994, %v645
      %v996 = vadd.f32 %v995, %v651
      %v997 = vadd.f32 %v996, %v655
      %v998 = vadd.f32 %v997, %v661
      %v999 = vadd.f32 %v998, %v665
      %v1000 = vadd.f32 %v999, %v671
      %v1001 = vadd.f32 %v1000, %v675
      %v1002 = vadd.f32 %v1001, %v681
      %v1003 = vadd.f32 %v1002, %v685
      %v1004 = vadd.f32 %v1003, %v691
      %v1005 = vadd.f32 %v1004, %v695
      %v1006 = vadd.f32 %v1005, %v701
      %v1007 = vadd.f32 %v1006, %v705
      %v1008 = vadd.f32 %v1007, %v711
      %v1009 = vadd.f32 %v1008, %v715
      %v1010 = vadd.f32 %v1009, %v721
      %v1011 = vadd.f32 %v1010, %v725
      %v1012 = vadd.f32 %v1011, %v731
      %v1013 = vadd.f32 %v1012, %v735
      %v1014 = vadd.f32 %v1013, %v741
      %v1015 = vadd.f32 %v1014, %v745
      %v1016 = vadd.f32 %v1015, %v751
      %v1017 = vadd.f32 %v1016, %v755
      %v1018 = vadd.f32 %v1017, %v761
      %v1019 = vadd.f32 %v1018, %v765
      %v1020 = vadd.f32 %v1019, %v771
      %v1021 = vadd.f32 %v1020, %v775
      %v1022 = vadd.f32 %v1021, %v781
      %v1023 = vadd.f32 %v1022, %v785
      %v1024 = vadd.f32 %v1023, %v791
      %v1025 = vadd.f32 %v1024, %v795
      %v1026 = vadd.f32 %v1025, %v801
      %v1027 = vadd.f32 %v1026, %v805
      %v1028 = vadd.f32 %v1027, %v811
      %v1029 = vadd.f32 %v1028, %v815
      %v1030 = vadd.f32 %v1029, %v821
      %v1031 = vadd.f32 %v1030, %v825
      %v1032 = vadd.f32 %v1031, %v831
      %v1033 = vadd.f32 %v1032, %v835
      %v1034 = vadd.f32 %v1033, %v841
      %v1035 = vadd.f32 %v1034, %v845
      %v1036 = vadd.f32 %v1035, %v851
      %v1037 = vadd.f32 %v1036, %v855
      %v1038 = vadd.f32 %v1037, %v861
      %v1039 = vadd.f32 %v1038, %v865
      %v1040 = vadd.f32 %v1039, %v871
      %v1041 = vadd.f32 %v1040, %v875
      %v1042 = vadd.f32 %v1041, %v881
      %v1043 = vadd.f32 %v1042, %v885
      %v1044 = vadd.f32 %v1043, %v891
      %v1045 = vadd.f32 %v1044, %v895
      %v1046 = vadd.f32 %v1045, %v901
      %v1047 = vadd.f32 %v1046, %v905
      %v1048 = vadd.f32 %v1047, %v911
      %v1049 = vadd.f32 %v1048, %v915
      %v1050 = vrot.slane %v1049, 4
      %v1051 = vadd.f32 %v1049, %v1050
      %v1052 = vrot.slane %v1051, 2
      %v1053 = vadd.f32 %v1051, %v1052
      %v1054 = vrot.slane %v1053, 1
      %v1055 = vadd.f32 %v1053, %v1054
      %v1058 = vcombine.low %v986, %v1055
      %v1060 = vunpack.c.l.s4 1966171168
      %v1061 = vunpack.c.0.s8 %v1060
      %v1062 = vlaneseq
      %v1063 = vshrl.u32 %v1062, 7
      %v1064 = vsub.s32 %v1061, %v1063
      %v1065 = vrot.slane %v1058, %v1064
      %v1067 = vunpack.c.l.s4 1966171168
      %v1068 = vunpack.c.0.s8 %v1067
      %v1069 = vlaneseq
      %v1070 = vshrl.u32 %v1069, 7
      %v1071 = vsub.s32 %v1068, %v1070
      %v1072 = vrot.slane %v1065, %v1071
      %v1074 = vadd.f32 %v917, %v1072
      %v1075 = vlaneseq
      %vm1076 = vcmp.ge.s32.totalorder %v1075, 0
      %vm1077 = vcmp.lt.s32.totalorder %v1075, 256
      %vm1078 = vmand %vm1076, %vm1077
      %1079 = vst.msk [vmem:[%s196] sm:$0x3] %vm1078, %v1074
      %v1080 = vld [vmem:[%s200] sm:$0x3]
      %v1081 = vmul.f32 %v599, %v599
      %v1082 = vmul.f32 %v601, %v601
      %v1083 = vmul.f32 %v603, %v603
      %v1084 = vmul.f32 %v605, %v605
      %v1085 = vmul.f32 %v609, %v609
      %v1086 = vmul.f32 %v611, %v611
      %v1087 = vmul.f32 %v613, %v613
      %v1088 = vmul.f32 %v615, %v615
      %v1089 = vmul.f32 %v619, %v619
      %v1090 = vmul.f32 %v621, %v621
      %v1091 = vmul.f32 %v623, %v623
      %v1092 = vmul.f32 %v625, %v625
      %v1093 = vmul.f32 %v629, %v629
      %v1094 = vmul.f32 %v631, %v631
      %v1095 = vmul.f32 %v633, %v633
      %v1096 = vmul.f32 %v635, %v635
      %v1097 = vmul.f32 %v639, %v639
      %v1098 = vmul.f32 %v641, %v641
      %v1099 = vmul.f32 %v643, %v643
      %v1100 = vmul.f32 %v645, %v645
      %v1101 = vmul.f32 %v649, %v649
      %v1102 = vmul.f32 %v651, %v651
      %v1103 = vmul.f32 %v653, %v653
      %v1104 = vmul.f32 %v655, %v655
      %v1105 = vmul.f32 %v659, %v659
      %v1106 = vmul.f32 %v661, %v661
      %v1107 = vmul.f32 %v663, %v663
      %v1108 = vmul.f32 %v665, %v665
      %v1109 = vmul.f32 %v669, %v669
      %v1110 = vmul.f32 %v671, %v671
      %v1111 = vmul.f32 %v673, %v673
      %v1112 = vmul.f32 %v675, %v675
      %v1113 = vmul.f32 %v679, %v679
      %v1114 = vmul.f32 %v681, %v681
      %v1115 = vmul.f32 %v683, %v683
      %v1116 = vmul.f32 %v685, %v685
      %v1117 = vmul.f32 %v689, %v689
      %v1118 = vmul.f32 %v691, %v691
      %v1119 = vmul.f32 %v693, %v693
      %v1120 = vmul.f32 %v695, %v695
      %v1121 = vmul.f32 %v699, %v699
      %v1122 = vmul.f32 %v701, %v701
      %v1123 = vmul.f32 %v703, %v703
      %v1124 = vmul.f32 %v705, %v705
      %v1125 = vmul.f32 %v709, %v709
      %v1126 = vmul.f32 %v711, %v711
      %v1127 = vmul.f32 %v713, %v713
      %v1128 = vmul.f32 %v715, %v715
      %v1129 = vmul.f32 %v719, %v719
      %v1130 = vmul.f32 %v721, %v721
      %v1131 = vmul.f32 %v723, %v723
      %v1132 = vmul.f32 %v725, %v725
      %v1133 = vmul.f32 %v729, %v729
      %v1134 = vmul.f32 %v731, %v731
      %v1135 = vmul.f32 %v733, %v733
      %v1136 = vmul.f32 %v735, %v735
      %v1137 = vmul.f32 %v739, %v739
      %v1138 = vmul.f32 %v741, %v741
      %v1139 = vmul.f32 %v743, %v743
      %v1140 = vmul.f32 %v745, %v745
      %v1141 = vmul.f32 %v749, %v749
      %v1142 = vmul.f32 %v751, %v751
      %v1143 = vmul.f32 %v753, %v753
      %v1144 = vmul.f32 %v755, %v755
      %v1145 = vmul.f32 %v759, %v759
      %v1146 = vmul.f32 %v761, %v761
      %v1147 = vmul.f32 %v763, %v763
      %v1148 = vmul.f32 %v765, %v765
      %v1149 = vmul.f32 %v769, %v769
      %v1150 = vmul.f32 %v771, %v771
      %v1151 = vmul.f32 %v773, %v773
      %v1152 = vmul.f32 %v775, %v775
      %v1153 = vmul.f32 %v779, %v779
      %v1154 = vmul.f32 %v781, %v781
      %v1155 = vmul.f32 %v783, %v783
      %v1156 = vmul.f32 %v785, %v785
      %v1157 = vmul.f32 %v789, %v789
      %v1158 = vmul.f32 %v791, %v791
      %v1159 = vmul.f32 %v793, %v793
      %v1160 = vmul.f32 %v795, %v795
      %v1161 = vmul.f32 %v799, %v799
      %v1162 = vmul.f32 %v801, %v801
      %v1163 = vmul.f32 %v803, %v803
      %v1164 = vmul.f32 %v805, %v805
      %v1165 = vmul.f32 %v809, %v809
      %v1166 = vmul.f32 %v811, %v811
      %v1167 = vmul.f32 %v813, %v813
      %v1168 = vmul.f32 %v815, %v815
      %v1169 = vmul.f32 %v819, %v819
      %v1170 = vmul.f32 %v821, %v821
      %v1171 = vmul.f32 %v823, %v823
      %v1172 = vmul.f32 %v825, %v825
      %v1173 = vmul.f32 %v829, %v829
      %v1174 = vmul.f32 %v831, %v831
      %v1175 = vmul.f32 %v833, %v833
      %v1176 = vmul.f32 %v835, %v835
      %v1177 = vmul.f32 %v839, %v839
      %v1178 = vmul.f32 %v841, %v841
      %v1179 = vmul.f32 %v843, %v843
      %v1180 = vmul.f32 %v845, %v845
      %v1181 = vmul.f32 %v849, %v849
      %v1182 = vmul.f32 %v851, %v851
      %v1183 = vmul.f32 %v853, %v853
      %v1184 = vmul.f32 %v855, %v855
      %v1185 = vmul.f32 %v859, %v859
      %v1186 = vmul.f32 %v861, %v861
      %v1187 = vmul.f32 %v863, %v863
      %v1188 = vmul.f32 %v865, %v865
      %v1189 = vmul.f32 %v869, %v869
      %v1190 = vmul.f32 %v871, %v871
      %v1191 = vmul.f32 %v873, %v873
      %v1192 = vmul.f32 %v875, %v875
      %v1193 = vmul.f32 %v879, %v879
      %v1194 = vmul.f32 %v881, %v881
      %v1195 = vmul.f32 %v883, %v883
      %v1196 = vmul.f32 %v885, %v885
      %v1197 = vmul.f32 %v889, %v889
      %v1198 = vmul.f32 %v891, %v891
      %v1199 = vmul.f32 %v893, %v893
      %v1200 = vmul.f32 %v895, %v895
      %v1201 = vmul.f32 %v899, %v899
      %v1202 = vmul.f32 %v901, %v901
      %v1203 = vmul.f32 %v903, %v903
      %v1204 = vmul.f32 %v905, %v905
      %v1205 = vmul.f32 %v909, %v909
      %v1206 = vmul.f32 %v911, %v911
      %v1207 = vmul.f32 %v913, %v913
      %v1208 = vmul.f32 %v915, %v915
      %v1209 = vadd.f32 %v1081, %v1083
      %v1210 = vadd.f32 %v1209, %v1085
      %v1211 = vadd.f32 %v1210, %v1087
      %v1212 = vadd.f32 %v1211, %v1089
      %v1213 = vadd.f32 %v1212, %v1091
      %v1214 = vadd.f32 %v1213, %v1093
      %v1215 = vadd.f32 %v1214, %v1095
      %v1216 = vadd.f32 %v1215, %v1097
      %v1217 = vadd.f32 %v1216, %v1099
      %v1218 = vadd.f32 %v1217, %v1101
      %v1219 = vadd.f32 %v1218, %v1103
      %v1220 = vadd.f32 %v1219, %v1105
      %v1221 = vadd.f32 %v1220, %v1107
      %v1222 = vadd.f32 %v1221, %v1109
      %v1223 = vadd.f32 %v1222, %v1111
      %v1224 = vadd.f32 %v1223, %v1113
      %v1225 = vadd.f32 %v1224, %v1115
      %v1226 = vadd.f32 %v1225, %v1117
      %v1227 = vadd.f32 %v1226, %v1119
      %v1228 = vadd.f32 %v1227, %v1121
      %v1229 = vadd.f32 %v1228, %v1123
      %v1230 = vadd.f32 %v1229, %v1125
      %v1231 = vadd.f32 %v1230, %v1127
      %v1232 = vadd.f32 %v1231, %v1129
      %v1233 = vadd.f32 %v1232, %v1131
      %v1234 = vadd.f32 %v1233, %v1133
      %v1235 = vadd.f32 %v1234, %v1135
      %v1236 = vadd.f32 %v1235, %v1137
      %v1237 = vadd.f32 %v1236, %v1139
      %v1238 = vadd.f32 %v1237, %v1141
      %v1239 = vadd.f32 %v1238, %v1143
      %v1240 = vadd.f32 %v1239, %v1145
      %v1241 = vadd.f32 %v1240, %v1147
      %v1242 = vadd.f32 %v1241, %v1149
      %v1243 = vadd.f32 %v1242, %v1151
      %v1244 = vadd.f32 %v1243, %v1153
      %v1245 = vadd.f32 %v1244, %v1155
      %v1246 = vadd.f32 %v1245, %v1157
      %v1247 = vadd.f32 %v1246, %v1159
      %v1248 = vadd.f32 %v1247, %v1161
      %v1249 = vadd.f32 %v1248, %v1163
      %v1250 = vadd.f32 %v1249, %v1165
      %v1251 = vadd.f32 %v1250, %v1167
      %v1252 = vadd.f32 %v1251, %v1169
      %v1253 = vadd.f32 %v1252, %v1171
      %v1254 = vadd.f32 %v1253, %v1173
      %v1255 = vadd.f32 %v1254, %v1175
      %v1256 = vadd.f32 %v1255, %v1177
      %v1257 = vadd.f32 %v1256, %v1179
      %v1258 = vadd.f32 %v1257, %v1181
      %v1259 = vadd.f32 %v1258, %v1183
      %v1260 = vadd.f32 %v1259, %v1185
      %v1261 = vadd.f32 %v1260, %v1187
      %v1262 = vadd.f32 %v1261, %v1189
      %v1263 = vadd.f32 %v1262, %v1191
      %v1264 = vadd.f32 %v1263, %v1193
      %v1265 = vadd.f32 %v1264, %v1195
      %v1266 = vadd.f32 %v1265, %v1197
      %v1267 = vadd.f32 %v1266, %v1199
      %v1268 = vadd.f32 %v1267, %v1201
      %v1269 = vadd.f32 %v1268, %v1203
      %v1270 = vadd.f32 %v1269, %v1205
      %v1271 = vadd.f32 %v1270, %v1207
      %v1272 = vrot.slane %v1271, 4
      %v1273 = vadd.f32 %v1271, %v1272
      %v1274 = vrot.slane %v1273, 2
      %v1275 = vadd.f32 %v1273, %v1274
      %v1276 = vrot.slane %v1275, 1
      %v1277 = vadd.f32 %v1275, %v1276
      %v1278 = vadd.f32 %v1082, %v1084
      %v1279 = vadd.f32 %v1278, %v1086
      %v1280 = vadd.f32 %v1279, %v1088
      %v1281 = vadd.f32 %v1280, %v1090
      %v1282 = vadd.f32 %v1281, %v1092
      %v1283 = vadd.f32 %v1282, %v1094
      %v1284 = vadd.f32 %v1283, %v1096
      %v1285 = vadd.f32 %v1284, %v1098
      %v1286 = vadd.f32 %v1285, %v1100
      %v1287 = vadd.f32 %v1286, %v1102
      %v1288 = vadd.f32 %v1287, %v1104
      %v1289 = vadd.f32 %v1288, %v1106
      %v1290 = vadd.f32 %v1289, %v1108
      %v1291 = vadd.f32 %v1290, %v1110
      %v1292 = vadd.f32 %v1291, %v1112
      %v1293 = vadd.f32 %v1292, %v1114
      %v1294 = vadd.f32 %v1293, %v1116
      %v1295 = vadd.f32 %v1294, %v1118
      %v1296 = vadd.f32 %v1295, %v1120
      %v1297 = vadd.f32 %v1296, %v1122
      %v1298 = vadd.f32 %v1297, %v1124
      %v1299 = vadd.f32 %v1298, %v1126
      %v1300 = vadd.f32 %v1299, %v1128
      %v1301 = vadd.f32 %v1300, %v1130
      %v1302 = vadd.f32 %v1301, %v1132
      %v1303 = vadd.f32 %v1302, %v1134
      %v1304 = vadd.f32 %v1303, %v1136
      %v1305 = vadd.f32 %v1304, %v1138
      %v1306 = vadd.f32 %v1305, %v1140
      %v1307 = vadd.f32 %v1306, %v1142
      %v1308 = vadd.f32 %v1307, %v1144
      %v1309 = vadd.f32 %v1308, %v1146
      %v1310 = vadd.f32 %v1309, %v1148
      %v1311 = vadd.f32 %v1310, %v1150
      %v1312 = vadd.f32 %v1311, %v1152
      %v1313 = vadd.f32 %v1312, %v1154
      %v1314 = vadd.f32 %v1313, %v1156
      %v1315 = vadd.f32 %v1314, %v1158
      %v1316 = vadd.f32 %v1315, %v1160
      %v1317 = vadd.f32 %v1316, %v1162
      %v1318 = vadd.f32 %v1317, %v1164
      %v1319 = vadd.f32 %v1318, %v1166
      %v1320 = vadd.f32 %v1319, %v1168
      %v1321 = vadd.f32 %v1320, %v1170
      %v1322 = vadd.f32 %v1321, %v1172
      %v1323 = vadd.f32 %v1322, %v1174
      %v1324 = vadd.f32 %v1323, %v1176
      %v1325 = vadd.f32 %v1324, %v1178
      %v1326 = vadd.f32 %v1325, %v1180
      %v1327 = vadd.f32 %v1326, %v1182
      %v1328 = vadd.f32 %v1327, %v1184
      %v1329 = vadd.f32 %v1328, %v1186
      %v1330 = vadd.f32 %v1329, %v1188
      %v1331 = vadd.f32 %v1330, %v1190
      %v1332 = vadd.f32 %v1331, %v1192
      %v1333 = vadd.f32 %v1332, %v1194
      %v1334 = vadd.f32 %v1333, %v1196
      %v1335 = vadd.f32 %v1334, %v1198
      %v1336 = vadd.f32 %v1335, %v1200
      %v1337 = vadd.f32 %v1336, %v1202
      %v1338 = vadd.f32 %v1337, %v1204
      %v1339 = vadd.f32 %v1338, %v1206
      %v1340 = vadd.f32 %v1339, %v1208
      %v1341 = vrot.slane %v1340, 4
      %v1342 = vadd.f32 %v1340, %v1341
      %v1343 = vrot.slane %v1342, 2
      %v1344 = vadd.f32 %v1342, %v1343
      %v1345 = vrot.slane %v1344, 1
      %v1346 = vadd.f32 %v1344, %v1345
      %v1349 = vcombine.low %v1277, %v1346
      %v1351 = vunpack.c.l.s4 1966171168
      %v1352 = vunpack.c.0.s8 %v1351
      %v1353 = vlaneseq
      %v1354 = vshrl.u32 %v1353, 7
      %v1355 = vsub.s32 %v1352, %v1354
      %v1356 = vrot.slane %v1349, %v1355
      %v1358 = vunpack.c.l.s4 1966171168
      %v1359 = vunpack.c.0.s8 %v1358
      %v1360 = vlaneseq
      %v1361 = vshrl.u32 %v1360, 7
      %v1362 = vsub.s32 %v1359, %v1361
      %v1363 = vrot.slane %v1356, %v1362
      %v1365 = vadd.f32 %v1080, %v1363
      %1366 = vst.msk [vmem:[%s200] sm:$0x3] %vm1078, %v1365
      %p1367 = scmp.lt.s32.totalorder %s19, 1
      %s1368 = scalar_select %p1367, %s19, 1
      %s1369 = smul.addr %s1368, 2
      %s1370 = scalar_lea.vmem %s2, %s1369
      %p1371 = scmp.lt.s32.totalorder %s19, 1
      %s1372 = scalar_select %p1371, %s19, 1
      %s1373 = smul.addr %s1372, 2
      %s1374 = scalar_lea.vmem %s3, %s1373
      // Predicated region
      $region33: #{mlp_forward.2} parent=27 // pred_check
        %p1375 = pneg %p94
      $region34: #{mlp_forward.2} parent=27 // pred_check_branch
        %1377 = sbr.rel (%p1375) target = $region36
      $region35: #{mlp_forward.2} parent=27 // pred_region
        _
      $region36: #{mlp_forward.2} parent=27 // pred_fallthru
        _
      // Predicated region
      $region37: #{mlp_forward.2} parent=27 // pred_check
        %p1378 = pneg %p120
      $region38: #{mlp_forward.2} parent=27 // pred_check_branch
        %1380 = sbr.rel (%p1378) target = $region40
      $region39: #{mlp_forward.2} parent=27 // pred_region
        _
      $region40: #{mlp_forward.2} parent=27 // pred_fallthru
        _
    $region28: #{mlp_forward.2} parent=5 // pred_fallthru
      _
    %p1381 = scmp.le.s32.totalorder 2, %s10
    // Predicated region
    $region41: #{mlp_forward.2} parent=5 // pred_check
      %p1382 = pneg %p1381
    $region42: #{mlp_forward.2} parent=5 // pred_check_branch
      %1384 = sbr.rel (%p1382) target = $region44
    $region43: #{mlp_forward.2} parent=5 // pred_region
      %s1385 = ssub.s32 %s10, 2
      // Predicated region
      $region45: #{mlp_forward.2} parent=43 // pred_check
        %p1386 = pneg %p100
      $region46: #{mlp_forward.2} parent=43 // pred_check_branch
        %1388 = sbr.rel (%p1386) target = $region48
      $region47: #{mlp_forward.2} parent=43 // pred_region
        %p1389 = scmp.lt.s32.totalorder %s21, 1
        %s1390 = scalar_select %p1389, %s21, 1
        %s1391 = smul.addr %s1390, 2
        %s1392 = scalar_lea.vmem %s2, %s1391
      $region48: #{mlp_forward.2} parent=43 // pred_fallthru
        _
      // Predicated region
      $region49: #{mlp_forward.2} parent=43 // pred_check
        %p1393 = pneg %p126
      $region50: #{mlp_forward.2} parent=43 // pred_check_branch
        %1395 = sbr.rel (%p1393) target = $region52
      $region51: #{mlp_forward.2} parent=43 // pred_region
        %p1396 = scmp.lt.s32.totalorder %s21, 1
        %s1397 = scalar_select %p1396, %s21, 1
        %s1398 = smul.addr %s1397, 2
        %s1399 = scalar_lea.vmem %s3, %s1398
      $region52: #{mlp_forward.2} parent=43 // pred_fallthru
        _
    $region44: #{mlp_forward.2} parent=5 // pred_fallthru
      _
  $region6: #{mlp_forward.2} parent=0 // loop_footer
    %s14 = sadd.s32 1, %s10
  $region7: #{mlp_forward.2} parent=0 // loop_footer_branch
    %9 = sbr.rel target = $region3
  $region8: #{mlp_forward.2} parent=0 // loop_exit
    _

// kernel: mlp_forward.3
$region0: #{mlp_forward.3}
  #allocation0 [shape = 'u32[]', space=smem, size = 0x4, offset = 0x4, fixed_abs, tag = 'smem constant byte address 0x4 - core index']
  #allocation1 [shape = 'u32[144,128]{1,0:T(1,128)}', space=vmem, size = 0x12000, scoped, tag = 'internal scratch']
  %s0 = inlined_call_operand.vmem [shape: bf16[1024,128], index: 0, kind: input, shape index: {}]
  %s1 = inlined_call_operand.vmem [shape: bf16[128,256], index: 1, kind: input, shape index: {}]
  %s2 = inlined_call_operand.vmem [shape: f32[1,256], index: 2, kind: input, shape index: {}]
  %s3 = inlined_call_operand.vmem [shape: f32[1,256], index: 3, kind: input, shape index: {}]
  %s4 = inlined_call_operand.vmem [shape: bf16[256,256], index: 4, kind: input, shape index: {}]
  %s5 = inlined_call_operand.vmem [shape: f32[1,256], index: 5, kind: input, shape index: {}]
  %s6 = inlined_call_operand.vmem [shape: bf16[256,128], index: 6, kind: input, shape index: {}]
  %s7 = inlined_call_operand.vmem [shape: f32[1,128], index: 7, kind: input, shape index: {}]
  %s8 = inlined_call_operand.hbm [shape: f32[1024,128], index: 8, kind: output, shape index: {}]
  %s9 = sld [smem:[#allocation0]]
  $region65: #{mlp_forward.3} parent=0
    _
  %s11 = ssub.s32 1, %s9
  %s12 = scalar_select 0, %s11, %s9
  $region1: #{mlp_forward.3} parent=0
    #allocation2 [shape = 'u8[524288]{0}', space=vmem, size = 0x80000, scoped, tag = 'output window, operand 0']
    #allocation3 [shape = 's32[2]{0}', space=sflag, size = 0x8, scoped, tag = 'scoped memory for mlp_forward.3']
    %13 = vsyncpa [#allocation3], 0
    %s14 = scalar_lea.sflag [#allocation3], 1
    %15 = vsyncpa %s14, 0
    loop: start=0, step=1, limit=4
    $region2: #{mlp_forward.3} parent=1 // loop_pre_header
      _
    $region3: #{mlp_forward.3} parent=1 // loop_header
      %s17 = sphi 0, %s21
      %p18 = scmp.ge.s32.totalorder %s17, 4
      %s27 = sphi 0, %s29
      %s30 = sphi 0, %s27
      %s31 = sphi 0, %s30
      %s47 = sphi 0, %s31
      %s51 = sphi 0, %s51
      %s53 = sphi 0, %s51
      %s54 = sphi 0, %s53
      %s68 = sphi 0, %s54
      %s72 = sphi 0, %s72
      %s74 = sphi 0, %s72
      %s75 = sphi 0, %s74
      %s89 = sphi 0, %s75
      %s93 = sphi 0, %s93
      %s95 = sphi 0, %s93
      %s96 = sphi 0, %s95
      %s110 = sphi 0, %s96
      %s114 = sphi 0, %s114
      %s116 = sphi 0, %s114
      %s117 = sphi 0, %s116
      %s131 = sphi 0, %s117
      %s135 = sphi 0, %s135
      %s137 = sphi 0, %s135
      %s138 = sphi 0, %s137
      %s152 = sphi 0, %s138
      %s156 = sphi 0, %s156
      %s158 = sphi 0, %s156
      %s159 = sphi 0, %s158
      %s173 = sphi 0, %s159
      %s177 = sphi 0, %s177
      %s179 = sphi 0, %s177
      %s180 = sphi 0, %s179
      %s194 = sphi 0, %s180
      %s200 = sphi 0, %s202
      %s203 = sphi 0, %s200
      %s204 = sphi 0, %s203
      %s220 = sphi 0, %s204
    $region4: #{mlp_forward.3} parent=1 // loop_header_branch
      %20 = sbr.rel (%p18) target = $region8
    $region5: #{mlp_forward.3} parent=1 // loop_body
      %s22 = ssub.s32 %s17, 1
      %s23 = ssub.s32 %s17, 2
      %s24 = sadd.s32 %s17, 1
      %s25 = ssub.s32 %s17, %s24
      %p26 = scmp.eq.s32.totalorder %s25, 0
      %s28 = sadd.s32 %s27, 1
      %s29 = scalar_select %p26, %s27, %s28
      %p32 = pneg %p26
      %p33 = scmp.eq.s32.totalorder %s17, 1
      %p34 = por %p32, %p33
      %p35 = scmp.ne.s32.totalorder %s27, %s30
      %p36 = scmp.eq.s32.totalorder %s17, 0
      %p37 = por %p35, %p36
      %p38 = scmp.ne.s32.totalorder %s27, %s30
      %p39 = scmp.eq.s32.totalorder %s22, 1
      %p40 = por %p38, %p39
      %p41 = scmp.ne.s32.totalorder %s30, %s31
      %p42 = scmp.eq.s32.totalorder %s22, 0
      %p43 = por %p41, %p42
      %p44 = scmp.ne.s32.totalorder %s30, %s31
      %p45 = scmp.eq.s32.totalorder %s23, 1
      %p46 = por %p44, %p45
      %p48 = scmp.ne.s32.totalorder %s31, %s47
      %p49 = scmp.eq.s32.totalorder %s23, 0
      %p50 = por %p48, %p49
      %s52 = sadd.s32 %s51, 1
      %p55 = scmp.eq.s32.totalorder %s17, 1
      %p56 = scmp.ne.s32.totalorder %s51, %s53
      %p57 = scmp.eq.s32.totalorder %s17, 0
      %p58 = por %p56, %p57
      %p59 = scmp.ne.s32.totalorder %s51, %s53
      %p60 = scmp.eq.s32.totalorder %s22, 1
      %p61 = por %p59, %p60
      %p62 = scmp.ne.s32.totalorder %s53, %s54
      %p63 = scmp.eq.s32.totalorder %s22, 0
      %p64 = por %p62, %p63
      %p65 = scmp.ne.s32.totalorder %s53, %s54
      %p66 = scmp.eq.s32.totalorder %s23, 1
      %p67 = por %p65, %p66
      %p69 = scmp.ne.s32.totalorder %s54, %s68
      %p70 = scmp.eq.s32.totalorder %s23, 0
      %p71 = por %p69, %p70
      %s73 = sadd.s32 %s72, 1
      %p76 = scmp.eq.s32.totalorder %s17, 1
      %p77 = scmp.ne.s32.totalorder %s72, %s74
      %p78 = scmp.eq.s32.totalorder %s17, 0
      %p79 = por %p77, %p78
      %p80 = scmp.ne.s32.totalorder %s72, %s74
      %p81 = scmp.eq.s32.totalorder %s22, 1
      %p82 = por %p80, %p81
      %p83 = scmp.ne.s32.totalorder %s74, %s75
      %p84 = scmp.eq.s32.totalorder %s22, 0
      %p85 = por %p83, %p84
      %p86 = scmp.ne.s32.totalorder %s74, %s75
      %p87 = scmp.eq.s32.totalorder %s23, 1
      %p88 = por %p86, %p87
      %p90 = scmp.ne.s32.totalorder %s75, %s89
      %p91 = scmp.eq.s32.totalorder %s23, 0
      %p92 = por %p90, %p91
      %s94 = sadd.s32 %s93, 1
      %p97 = scmp.eq.s32.totalorder %s17, 1
      %p98 = scmp.ne.s32.totalorder %s93, %s95
      %p99 = scmp.eq.s32.totalorder %s17, 0
      %p100 = por %p98, %p99
      %p101 = scmp.ne.s32.totalorder %s93, %s95
      %p102 = scmp.eq.s32.totalorder %s22, 1
      %p103 = por %p101, %p102
      %p104 = scmp.ne.s32.totalorder %s95, %s96
      %p105 = scmp.eq.s32.totalorder %s22, 0
      %p106 = por %p104, %p105
      %p107 = scmp.ne.s32.totalorder %s95, %s96
      %p108 = scmp.eq.s32.totalorder %s23, 1
      %p109 = por %p107, %p108
      %p111 = scmp.ne.s32.totalorder %s96, %s110
      %p112 = scmp.eq.s32.totalorder %s23, 0
      %p113 = por %p111, %p112
      %s115 = sadd.s32 %s114, 1
      %p118 = scmp.eq.s32.totalorder %s17, 1
      %p119 = scmp.ne.s32.totalorder %s114, %s116
      %p120 = scmp.eq.s32.totalorder %s17, 0
      %p121 = por %p119, %p120
      %p122 = scmp.ne.s32.totalorder %s114, %s116
      %p123 = scmp.eq.s32.totalorder %s22, 1
      %p124 = por %p122, %p123
      %p125 = scmp.ne.s32.totalorder %s116, %s117
      %p126 = scmp.eq.s32.totalorder %s22, 0
      %p127 = por %p125, %p126
      %p128 = scmp.ne.s32.totalorder %s116, %s117
      %p129 = scmp.eq.s32.totalorder %s23, 1
      %p130 = por %p128, %p129
      %p132 = scmp.ne.s32.totalorder %s117, %s131
      %p133 = scmp.eq.s32.totalorder %s23, 0
      %p134 = por %p132, %p133
      %s136 = sadd.s32 %s135, 1
      %p139 = scmp.eq.s32.totalorder %s17, 1
      %p140 = scmp.ne.s32.totalorder %s135, %s137
      %p141 = scmp.eq.s32.totalorder %s17, 0
      %p142 = por %p140, %p141
      %p143 = scmp.ne.s32.totalorder %s135, %s137
      %p144 = scmp.eq.s32.totalorder %s22, 1
      %p145 = por %p143, %p144
      %p146 = scmp.ne.s32.totalorder %s137, %s138
      %p147 = scmp.eq.s32.totalorder %s22, 0
      %p148 = por %p146, %p147
      %p149 = scmp.ne.s32.totalorder %s137, %s138
      %p150 = scmp.eq.s32.totalorder %s23, 1
      %p151 = por %p149, %p150
      %p153 = scmp.ne.s32.totalorder %s138, %s152
      %p154 = scmp.eq.s32.totalorder %s23, 0
      %p155 = por %p153, %p154
      %s157 = sadd.s32 %s156, 1
      %p160 = scmp.eq.s32.totalorder %s17, 1
      %p161 = scmp.ne.s32.totalorder %s156, %s158
      %p162 = scmp.eq.s32.totalorder %s17, 0
      %p163 = por %p161, %p162
      %p164 = scmp.ne.s32.totalorder %s156, %s158
      %p165 = scmp.eq.s32.totalorder %s22, 1
      %p166 = por %p164, %p165
      %p167 = scmp.ne.s32.totalorder %s158, %s159
      %p168 = scmp.eq.s32.totalorder %s22, 0
      %p169 = por %p167, %p168
      %p170 = scmp.ne.s32.totalorder %s158, %s159
      %p171 = scmp.eq.s32.totalorder %s23, 1
      %p172 = por %p170, %p171
      %p174 = scmp.ne.s32.totalorder %s159, %s173
      %p175 = scmp.eq.s32.totalorder %s23, 0
      %p176 = por %p174, %p175
      %s178 = sadd.s32 %s177, 1
      %p181 = scmp.eq.s32.totalorder %s17, 1
      %p182 = scmp.ne.s32.totalorder %s177, %s179
      %p183 = scmp.eq.s32.totalorder %s17, 0
      %p184 = por %p182, %p183
      %p185 = scmp.ne.s32.totalorder %s177, %s179
      %p186 = scmp.eq.s32.totalorder %s22, 1
      %p187 = por %p185, %p186
      %p188 = scmp.ne.s32.totalorder %s179, %s180
      %p189 = scmp.eq.s32.totalorder %s22, 0
      %p190 = por %p188, %p189
      %p191 = scmp.ne.s32.totalorder %s179, %s180
      %p192 = scmp.eq.s32.totalorder %s23, 1
      %p193 = por %p191, %p192
      %p195 = scmp.ne.s32.totalorder %s180, %s194
      %p196 = scmp.eq.s32.totalorder %s23, 0
      %p197 = por %p195, %p196
      %s198 = ssub.s32 %s17, %s24
      %p199 = scmp.eq.s32.totalorder %s198, 0
      %s201 = sadd.s32 %s200, 1
      %s202 = scalar_select %p199, %s200, %s201
      %p205 = pneg %p199
      %p206 = scmp.eq.s32.totalorder %s17, 1
      %p207 = por %p205, %p206
      %p208 = scmp.ne.s32.totalorder %s200, %s203
      %p209 = scmp.eq.s32.totalorder %s17, 0
      %p210 = por %p208, %p209
      %p211 = scmp.ne.s32.totalorder %s200, %s203
      %p212 = scmp.eq.s32.totalorder %s22, 1
      %p213 = por %p211, %p212
      %p214 = scmp.ne.s32.totalorder %s203, %s204
      %p215 = scmp.eq.s32.totalorder %s22, 0
      %p216 = por %p214, %p215
      %p217 = scmp.ne.s32.totalorder %s203, %s204
      %p218 = scmp.eq.s32.totalorder %s23, 1
      %p219 = por %p217, %p218
      %p221 = scmp.ne.s32.totalorder %s204, %s220
      %p222 = scmp.eq.s32.totalorder %s23, 0
      %p223 = por %p221, %p222
      %p224 = scmp.le.s32.totalorder 1, %s17
      %p225 = scmp.lt.s32.totalorder %s17, 3
      %p226 = pnand %p224, %p225
      %p227 = pneg %p226
      // Predicated region
      $region9: #{mlp_forward.3} parent=5 // pred_check
        _
      $region10: #{mlp_forward.3} parent=5 // pred_check_branch
        %229 = sbr.rel (%p226) target = $region12
      $region11: #{mlp_forward.3} parent=5 // pred_region
        %s230 = ssub.s32 %s17, 1
        // Predicated region
        $region13: #{mlp_forward.3} parent=11 // pred_check
          %p231 = pneg %p64
        $region14: #{mlp_forward.3} parent=11 // pred_check_branch
          %233 = sbr.rel (%p231) target = $region16
        $region15: #{mlp_forward.3} parent=11 // pred_region
          _
        $region16: #{mlp_forward.3} parent=11 // pred_fallthru
          _
        // Predicated region
        $region17: #{mlp_forward.3} parent=11 // pred_check
          %p234 = pneg %p85
        $region18: #{mlp_forward.3} parent=11 // pred_check_branch
          %236 = sbr.rel (%p234) target = $region20
        $region19: #{mlp_forward.3} parent=11 // pred_region
          _
        $region20: #{mlp_forward.3} parent=11 // pred_fallthru
          _
        // Predicated region
        $region21: #{mlp_forward.3} parent=11 // pred_check
          %p237 = pneg %p106
        $region22: #{mlp_forward.3} parent=11 // pred_check_branch
          %239 = sbr.rel (%p237) target = $region24
        $region23: #{mlp_forward.3} parent=11 // pred_region
          _
        $region24: #{mlp_forward.3} parent=11 // pred_fallthru
          _
        // Predicated region
        $region25: #{mlp_forward.3} parent=11 // pred_check
          %p240 = pneg %p127
        $region26: #{mlp_forward.3} parent=11 // pred_check_branch
          %242 = sbr.rel (%p240) target = $region28
        $region27: #{mlp_forward.3} parent=11 // pred_region
          _
        $region28: #{mlp_forward.3} parent=11 // pred_fallthru
          _
        // Predicated region
        $region29: #{mlp_forward.3} parent=11 // pred_check
          %p243 = pneg %p148
        $region30: #{mlp_forward.3} parent=11 // pred_check_branch
          %245 = sbr.rel (%p243) target = $region32
        $region31: #{mlp_forward.3} parent=11 // pred_region
          _
        $region32: #{mlp_forward.3} parent=11 // pred_fallthru
          _
        // Predicated region
        $region33: #{mlp_forward.3} parent=11 // pred_check
          %p246 = pneg %p169
        $region34: #{mlp_forward.3} parent=11 // pred_check_branch
          %248 = sbr.rel (%p246) target = $region36
        $region35: #{mlp_forward.3} parent=11 // pred_region
          _
        $region36: #{mlp_forward.3} parent=11 // pred_fallthru
          _
        // Predicated region
        $region37: #{mlp_forward.3} parent=11 // pred_check
          %p249 = pneg %p190
        $region38: #{mlp_forward.3} parent=11 // pred_check_branch
          %251 = sbr.rel (%p249) target = $region40
        $region39: #{mlp_forward.3} parent=11 // pred_region
          _
        $region40: #{mlp_forward.3} parent=11 // pred_fallthru
          _
      $region12: #{mlp_forward.3} parent=5 // pred_fallthru
        _
      %p252 = scmp.lt.s32.totalorder %s17, 2
      // Predicated region
      $region41: #{mlp_forward.3} parent=5 // pred_check
        %p253 = pneg %p252
      $region42: #{mlp_forward.3} parent=5 // pred_check_branch
        %255 = sbr.rel (%p253) target = $region44
      $region43: #{mlp_forward.3} parent=5 // pred_region
        // Predicated region
        $region45: #{mlp_forward.3} parent=43 // pred_check
          %p256 = pneg %p37
        $region46: #{mlp_forward.3} parent=43 // pred_check_branch
          %258 = sbr.rel (%p256) target = $region48
        $region47: #{mlp_forward.3} parent=43 // pred_region
          %s259 = smul.u32 64, %s17
          %p260 = scmp.lt.s32.totalorder %s259, 127
          %s261 = scalar_select %p260, %s259, 127
          %s262 = smul.addr %s261, 4
          %s263 = scalar_lea.vmem %s0, %s262
          %s264 = smul.u32 64, %s17
        $region48: #{mlp_forward.3} parent=43 // pred_fallthru
          _
      $region44: #{mlp_forward.3} parent=5 // pred_fallthru
        _
      %p265 = scmp.le.s32.totalorder 1, %s17
      %p266 = scmp.lt.s32.totalorder %s17, 3
      %p267 = pnand %p265, %p266
      %p268 = pneg %p267
      // Predicated region
      $region49: #{mlp_forward.3} parent=5 // pred_check
        _
      $region50: #{mlp_forward.3} parent=5 // pred_check_branch
        %270 = sbr.rel (%p267) target = $region52
      $region51: #{mlp_forward.3} parent=5 // pred_region
        %s271 = ssub.s32 %s17, 1
        %s272 = smul.u32 64, %s22
        %p273 = scmp.lt.s32.totalorder %s272, 127
        %s274 = scalar_select %p273, %s272, 127
        %s275 = smul.addr %s274, 4
        %s276 = scalar_lea.vmem %s0, %s275
        %p277 = pneg %p43
        %p278 = pneg %p40
        %p279 = pneg %p64
        %p280 = pneg %p61
        %p281 = pneg %p85
        %p282 = pneg %p82
        %p283 = pneg %p106
        %p284 = pneg %p103
        %p285 = pneg %p127
        %p286 = pneg %p124
        %p287 = pneg %p148
        %p288 = pneg %p145
        %p289 = pneg %p169
        %p290 = pneg %p166
        %p291 = pneg %p190
        %p292 = pneg %p187
        %p293 = pneg %p216
        %p294 = pneg %p213
        %s295 = sand.u32 %s203, 1
        %s296 = scalar_lea.sflag [#allocation3], %s295
        %s297 = sand.u32 %s203, 1
        %s298 = smul.addr %s297, 512
        %s299 = scalar_lea.vmem [#allocation2], %s298
        %s300 = smul.u32 64, %s22
        %p301 = scmp.lt.s32.totalorder %s300, 127
        %s302 = scalar_select %p301, %s300, 127
        %s303 = smul.addr %s302, 4
        %s304 = scalar_lea.vmem %s0, %s303
        %s305 = smul.u32 64, %s22
        %s306 = smul.u32 64, %s22
        %v308 = vld [vmem:[%s304] sm:$0xf]
        %v309 = vld [vmem:[%s304 + $0x4] sm:$0xf]
        %v310 = vld [vmem:[%s304 + $0x8] sm:$0xf]
        %v311 = vld [vmem:[%s304 + $0xc] sm:$0xf]
        %v312 = vld [vmem:[%s304 + $0x10] sm:$0xf]
        %v313 = vld [vmem:[%s304 + $0x14] sm:$0xf]
        %v314 = vld [vmem:[%s304 + $0x18] sm:$0xf]
        %v315 = vld [vmem:[%s304 + $0x1c] sm:$0xf]
        %v316 = vld [vmem:[%s304 + $0x20] sm:$0xf]
        %v317 = vld [vmem:[%s304 + $0x24] sm:$0xf]
        %v318 = vld [vmem:[%s304 + $0x28] sm:$0xf]
        %v319 = vld [vmem:[%s304 + $0x2c] sm:$0xf]
        %v320 = vld [vmem:[%s304 + $0x30] sm:$0xf]
        %v321 = vld [vmem:[%s304 + $0x34] sm:$0xf]
        %v322 = vld [vmem:[%s304 + $0x38] sm:$0xf]
        %v323 = vld [vmem:[%s304 + $0x3c] sm:$0xf]
        %v324 = vld [vmem:[%s304 + $0x40] sm:$0xf]
        %v325 = vld [vmem:[%s304 + $0x44] sm:$0xf]
        %v326 = vld [vmem:[%s304 + $0x48] sm:$0xf]
        %v327 = vld [vmem:[%s304 + $0x4c] sm:$0xf]
        %v328 = vld [vmem:[%s304 + $0x50] sm:$0xf]
        %v329 = vld [vmem:[%s304 + $0x54] sm:$0xf]
        %v330 = vld [vmem:[%s304 + $0x58] sm:$0xf]
        %v331 = vld [vmem:[%s304 + $0x5c] sm:$0xf]
        %v332 = vld [vmem:[%s304 + $0x60] sm:$0xf]
        %v333 = vld [vmem:[%s304 + $0x64] sm:$0xf]
        %v334 = vld [vmem:[%s304 + $0x68] sm:$0xf]
        %v335 = vld [vmem:[%s304 + $0x6c] sm:$0xf]
        %v336 = vld [vmem:[%s304 + $0x70] sm:$0xf]
        %v337 = vld [vmem:[%s304 + $0x74] sm:$0xf]
        %v338 = vld [vmem:[%s304 + $0x78] sm:$0xf]
        %v339 = vld [vmem:[%s304 + $0x7c] sm:$0xf]
        %v340 = vld [vmem:[%s304 + $0x80] sm:$0xf]
        %v341 = vld [vmem:[%s304 + $0x84] sm:$0xf]
        %v342 = vld [vmem:[%s304 + $0x88] sm:$0xf]
        %v343 = vld [vmem:[%s304 + $0x8c] sm:$0xf]
        %v344 = vld [vmem:[%s304 + $0x90] sm:$0xf]
        %v345 = vld [vmem:[%s304 + $0x94] sm:$0xf]
        %v346 = vld [vmem:[%s304 + $0x98] sm:$0xf]
        %v347 = vld [vmem:[%s304 + $0x9c] sm:$0xf]
        %v348 = vld [vmem:[%s304 + $0xa0] sm:$0xf]
        %v349 = vld [vmem:[%s304 + $0xa4] sm:$0xf]
        %v350 = vld [vmem:[%s304 + $0xa8] sm:$0xf]
        %v351 = vld [vmem:[%s304 + $0xac] sm:$0xf]
        %v352 = vld [vmem:[%s304 + $0xb0] sm:$0xf]
        %v353 = vld [vmem:[%s304 + $0xb4] sm:$0xf]
        %v354 = vld [vmem:[%s304 + $0xb8] sm:$0xf]
        %v355 = vld [vmem:[%s304 + $0xbc] sm:$0xf]
        %v356 = vld [vmem:[%s304 + $0xc0] sm:$0xf]
        %v357 = vld [vmem:[%s304 + $0xc4] sm:$0xf]
        %v358 = vld [vmem:[%s304 + $0xc8] sm:$0xf]
        %v359 = vld [vmem:[%s304 + $0xcc] sm:$0xf]
        %v360 = vld [vmem:[%s304 + $0xd0] sm:$0xf]
        %v361 = vld [vmem:[%s304 + $0xd4] sm:$0xf]
        %v362 = vld [vmem:[%s304 + $0xd8] sm:$0xf]
        %v363 = vld [vmem:[%s304 + $0xdc] sm:$0xf]
        %v364 = vld [vmem:[%s304 + $0xe0] sm:$0xf]
        %v365 = vld [vmem:[%s304 + $0xe4] sm:$0xf]
        %v366 = vld [vmem:[%s304 + $0xe8] sm:$0xf]
        %v367 = vld [vmem:[%s304 + $0xec] sm:$0xf]
        %v368 = vld [vmem:[%s304 + $0xf0] sm:$0xf]
        %v369 = vld [vmem:[%s304 + $0xf4] sm:$0xf]
        %v370 = vld [vmem:[%s304 + $0xf8] sm:$0xf]
        %v371 = vld [vmem:[%s304 + $0xfc] sm:$0xf]
        %v372 = vld [vmem:[%s1] sm:$0xff]
        %v373 = vld [vmem:[%s1 + $0x8] sm:$0xff]
        %v374 = vld [vmem:[%s1 + $0x10] sm:$0xff]
        %v375 = vld [vmem:[%s1 + $0x18] sm:$0xff]
        %v376 = vld [vmem:[%s1 + $0x20] sm:$0xff]
        %v377 = vld [vmem:[%s1 + $0x28] sm:$0xff]
        %v378 = vld [vmem:[%s1 + $0x30] sm:$0xff]
        %v379 = vld [vmem:[%s1 + $0x38] sm:$0xff]
        %v380 = vld [vmem:[%s1 + $0x40] sm:$0xff]
        %v381 = vld [vmem:[%s1 + $0x48] sm:$0xff]
        %v382 = vld [vmem:[%s1 + $0x50] sm:$0xff]
        %v383 = vld [vmem:[%s1 + $0x58] sm:$0xff]
        %v384 = vld [vmem:[%s1 + $0x60] sm:$0xff]
        %v385 = vld [vmem:[%s1 + $0x68] sm:$0xff]
        %v386 = vld [vmem:[%s1 + $0x70] sm:$0xff]
        %v387 = vld [vmem:[%s1 + $0x78] sm:$0xff]
        %v452 = vunpack.c.l.b16 %v308
        %v453 = vunpack.c.l.b16 %v309
        %v454 = vunpack.c.l.b16 %v310
        %v455 = vunpack.c.l.b16 %v311
        %v456 = vunpack.c.l.b16 %v312
        %v457 = vunpack.c.l.b16 %v313
        %v458 = vunpack.c.l.b16 %v314
        %v459 = vunpack.c.l.b16 %v315
        %v460 = vunpack.c.l.b16 %v316
        %v461 = vunpack.c.l.b16 %v317
        %v462 = vunpack.c.l.b16 %v318
        %v463 = vunpack.c.l.b16 %v319
        %v464 = vunpack.c.l.b16 %v320
        %v465 = vunpack.c.l.b16 %v321
        %v466 = vunpack.c.l.b16 %v322
        %v467 = vunpack.c.l.b16 %v323
        %v468 = vunpack.c.l.b16 %v324
        %v469 = vunpack.c.l.b16 %v325
        %v470 = vunpack.c.l.b16 %v326
        %v471 = vunpack.c.l.b16 %v327
        %v472 = vunpack.c.l.b16 %v328
        %v473 = vunpack.c.l.b16 %v329
        %v474 = vunpack.c.l.b16 %v330
        %v475 = vunpack.c.l.b16 %v331
        %v476 = vunpack.c.l.b16 %v332
        %v477 = vunpack.c.l.b16 %v333
        %v478 = vunpack.c.l.b16 %v334
        %v479 = vunpack.c.l.b16 %v335
        %v480 = vunpack.c.l.b16 %v336
        %v481 = vunpack.c.l.b16 %v337
        %v482 = vunpack.c.l.b16 %v338
        %v483 = vunpack.c.l.b16 %v339
        %v484 = vunpack.c.l.b16 %v340
        %v485 = vunpack.c.l.b16 %v341
        %v486 = vunpack.c.l.b16 %v342
        %v487 = vunpack.c.l.b16 %v343
        %v488 = vunpack.c.l.b16 %v344
        %v489 = vunpack.c.l.b16 %v345
        %v490 = vunpack.c.l.b16 %v346
        %v491 = vunpack.c.l.b16 %v347
        %v492 = vunpack.c.l.b16 %v348
        %v493 = vunpack.c.l.b16 %v349
        %v494 = vunpack.c.l.b16 %v350
        %v495 = vunpack.c.l.b16 %v351
        %v496 = vunpack.c.l.b16 %v352
        %v497 = vunpack.c.l.b16 %v353
        %v498 = vunpack.c.l.b16 %v354
        %v499 = vunpack.c.l.b16 %v355
        %v500 = vunpack.c.l.b16 %v356
        %v501 = vunpack.c.l.b16 %v357
        %v502 = vunpack.c.l.b16 %v358
        %v503 = vunpack.c.l.b16 %v359
        %v504 = vunpack.c.l.b16 %v360
        %v505 = vunpack.c.l.b16 %v361
        %v506 = vunpack.c.l.b16 %v362
        %v507 = vunpack.c.l.b16 %v363
        %v508 = vunpack.c.l.b16 %v364
        %v509 = vunpack.c.l.b16 %v365
        %v510 = vunpack.c.l.b16 %v366
        %v511 = vunpack.c.l.b16 %v367
        %v512 = vunpack.c.l.b16 %v368
        %v513 = vunpack.c.l.b16 %v369
        %v514 = vunpack.c.l.b16 %v370
        %v515 = vunpack.c.l.b16 %v371
        %v516 = vpack.c.b16 %v453, %v452
        %v517 = vpack.c.b16 %v455, %v454
        %v518 = vpack.c.b16 %v457, %v456
        %v519 = vpack.c.b16 %v459, %v458
        %v520 = vpack.c.b16 %v461, %v460
        %v521 = vpack.c.b16 %v463, %v462
        %v522 = vpack.c.b16 %v465, %v464
        %v523 = vpack.c.b16 %v467, %v466
        %v524 = vpack.c.b16 %v469, %v468
        %v525 = vpack.c.b16 %v471, %v470
        %v526 = vpack.c.b16 %v473, %v472
        %v527 = vpack.c.b16 %v475, %v474
        %v528 = vpack.c.b16 %v477, %v476
        %v529 = vpack.c.b16 %v479, %v478
        %v530 = vpack.c.b16 %v481, %v480
        %v531 = vpack.c.b16 %v483, %v482
        %v532 = vpack.c.b16 %v485, %v484
        %v533 = vpack.c.b16 %v487, %v486
        %v534 = vpack.c.b16 %v489, %v488
        %v535 = vpack.c.b16 %v491, %v490
        %v536 = vpack.c.b16 %v493, %v492
        %v537 = vpack.c.b16 %v495, %v494
        %v538 = vpack.c.b16 %v497, %v496
        %v539 = vpack.c.b16 %v499, %v498
        %v540 = vpack.c.b16 %v501, %v500
        %v541 = vpack.c.b16 %v503, %v502
        %v542 = vpack.c.b16 %v505, %v504
        %v543 = vpack.c.b16 %v507, %v506
        %v544 = vpack.c.b16 %v509, %v508
        %v545 = vpack.c.b16 %v511, %v510
        %v546 = vpack.c.b16 %v513, %v512
        %v547 = vpack.c.b16 %v515, %v514
        %v596 = vunpack.c.l.b16 %v372
        %v597 = vunpack.c.h.b16 %v372
        %v598 = vunpack.c.l.b16 %v373
        %v599 = vunpack.c.h.b16 %v373
        %v600 = vunpack.c.l.b16 %v374
        %v601 = vunpack.c.h.b16 %v374
        %v602 = vunpack.c.l.b16 %v375
        %v603 = vunpack.c.h.b16 %v375
        %v604 = vunpack.c.l.b16 %v376
        %v605 = vunpack.c.h.b16 %v376
        %v606 = vunpack.c.l.b16 %v377
        %v607 = vunpack.c.h.b16 %v377
        %v608 = vunpack.c.l.b16 %v378
        %v609 = vunpack.c.h.b16 %v378
        %v610 = vunpack.c.l.b16 %v379
        %v611 = vunpack.c.h.b16 %v379
        %v612 = vunpack.c.l.b16 %v380
        %v613 = vunpack.c.h.b16 %v380
        %v614 = vunpack.c.l.b16 %v381
        %v615 = vunpack.c.h.b16 %v381
        %v616 = vunpack.c.l.b16 %v382
        %v617 = vunpack.c.h.b16 %v382
        %v618 = vunpack.c.l.b16 %v383
        %v619 = vunpack.c.h.b16 %v383
        %v620 = vunpack.c.l.b16 %v384
        %v621 = vunpack.c.h.b16 %v384
        %v622 = vunpack.c.l.b16 %v385
        %v623 = vunpack.c.h.b16 %v385
        %v624 = vunpack.c.l.b16 %v386
        %v625 = vunpack.c.h.b16 %v386
        %v626 = vunpack.c.l.b16 %v387
        %v627 = vunpack.c.h.b16 %v387
        %v628 = vpack.c.b16 %v598, %v596
        %v629 = vpack.c.b16 %v599, %v597
        %v630 = vpack.c.b16 %v602, %v600
        %v631 = vpack.c.b16 %v603, %v601
        %v632 = vpack.c.b16 %v606, %v604
        %v633 = vpack.c.b16 %v607, %v605
        %v634 = vpack.c.b16 %v610, %v608
        %v635 = vpack.c.b16 %v611, %v609
        %v636 = vpack.c.b16 %v614, %v612
        %v637 = vpack.c.b16 %v615, %v613
        %v638 = vpack.c.b16 %v618, %v616
        %v639 = vpack.c.b16 %v619, %v617
        %v640 = vpack.c.b16 %v622, %v620
        %v641 = vpack.c.b16 %v623, %v621
        %v642 = vpack.c.b16 %v626, %v624
        %v643 = vpack.c.b16 %v627, %v625
        %660 = vmatprep.subr.bf16.mxu0 %v629
        %661 = vmatpush1.bf16.msra.mxu0 %v628
        %662 = vmatprep.subr.bf16.mxu0 %v631
        %663 = vmatpush1.bf16.msra.mxu0 %v630
        %664 = vmatprep.subr.bf16.mxu0 %v633
        %665 = vmatpush1.bf16.msra.mxu0 %v632
        %666 = vmatprep.subr.bf16.mxu0 %v635
        %667 = vmatpush1.bf16.msra.mxu0 %v634
        %668 = vmatprep.subr.bf16.mxu0 %v637
        %669 = vmatpush1.bf16.msra.mxu0 %v636
        %670 = vmatprep.subr.bf16.mxu0 %v639
        %671 = vmatpush1.bf16.msra.mxu0 %v638
        %672 = vmatprep.subr.bf16.mxu0 %v641
        %673 = vmatpush1.bf16.msra.mxu0 %v640
        %674 = vmatprep.subr.bf16.mxu0 %v643
        %675 = vmatpush1.bf16.msra.mxu0 %v642
        %676 = vmatprep.subr.bf16.mxu0 0
        %677 = vmatpush1.bf16.msra.mxu0 0
        %678 = vmatprep.subr.bf16.mxu0 0
        %679 = vmatpush1.bf16.msra.mxu0 0
        %680 = vmatprep.subr.bf16.mxu0 0
        %681 = vmatpush1.bf16.msra.mxu0 0
        %682 = vmatprep.subr.bf16.mxu0 0
        %683 = vmatpush1.bf16.msra.mxu0 0
        %684 = vmatprep.subr.bf16.mxu0 0
        %685 = vmatpush1.bf16.msra.mxu0 0
        %686 = vmatprep.subr.bf16.mxu0 0
        %687 = vmatpush1.bf16.msra.mxu0 0
        %688 = vmatprep.subr.bf16.mxu0 0
        %689 = vmatpush1.bf16.msra.mxu0 0
        %690 = vmatprep.subr.bf16.mxu0 0
        %691 = vmatpush1.bf16.msra.mxu0 0
        %692 = vmatprep.mubr.bf16.mxu0 0
        %693 = vmatmul.mubr.bf16.gmra.mrb[0].mxu0 %v516
        %v694 = vpop.f32.mrb[0].mxu0
        %v695 = vadd.f32 0.0, %v694
        %v696 = vpop.f32.mrb[0].mxu0
        %v697 = vadd.f32 0.0, %v696
        %v698 = vpop.f32.mrb[0].mxu0
        %v699 = vadd.f32 0.0, %v698
        %v700 = vpop.f32.mrb[0].mxu0
        %v701 = vadd.f32 0.0, %v700
        %702 = vmatprep.mubr.bf16.mxu0 0
        %703 = vmatmul.mubr.bf16.gmra.mrb[0].mxu0 %v517
        %v704 = vpop.f32.mrb[0].mxu0
        %v705 = vadd.f32 0.0, %v704
        %v706 = vpop.f32.mrb[0].mxu0
        %v707 = vadd.f32 0.0, %v706
        %v708 = vpop.f32.mrb[0].mxu0
        %v709 = vadd.f32 0.0, %v708
        %v710 = vpop.f32.mrb[0].mxu0
        %v711 = vadd.f32 0.0, %v710
        %712 = vmatprep.mubr.bf16.mxu0 0
        %713 = vmatmul.mubr.bf16.gmra.mrb[0].mxu0 %v518
        %v714 = vpop.f32.mrb[0].mxu0
        %v715 = vadd.f32 0.0, %v714
        %v716 = vpop.f32.mrb[0].mxu0
        %v717 = vadd.f32 0.0, %v716
        %v718 = vpop.f32.mrb[0].mxu0
        %v719 = vadd.f32 0.0, %v718
        %v720 = vpop.f32.mrb[0].mxu0
        %v721 = vadd.f32 0.0, %v720
        %722 = vmatprep.mubr.bf16.mxu0 0
        %723 = vmatmul.mubr.bf16.gmra.mrb[0].mxu0 %v519
        %v724 = vpop.f32.mrb[0].mxu0
        %v725 = vadd.f32 0.0, %v724
        %v726 = vpop.f32.mrb[0].mxu0
        %v727 = vadd.f32 0.0, %v726
        %v728 = vpop.f32.mrb[0].mxu0
        %v729 = vadd.f32 0.0, %v728
        %v730 = vpop.f32.mrb[0].mxu0
        %v731 = vadd.f32 0.0, %v730
        %732 = vmatprep.mubr.bf16.mxu0 0
        %733 = vmatmul.mubr.bf16.gmra.mrb[0].mxu0 %v520
        %v734 = vpop.f32.mrb[0].mxu0
        %v735 = vadd.f32 0.0, %v734
        %v736 = vpop.f32.mrb[0].mxu0
        %v737 = vadd.f32 0.0, %v736
        %v738 = vpop.f32.mrb[0].mxu0
        %v739 = vadd.f32 0.0, %v738
        %v740 = vpop.f32.mrb[0].mxu0
        %v741 = vadd.f32 0.0, %v740
        %742 = vmatprep.mubr.bf16.mxu0 0
        %743 = vmatmul.mubr.bf16.gmra.mrb[0].mxu0 %v521
        %v744 = vpop.f32.mrb[0].mxu0
        %v745 = vadd.f32 0.0, %v744
        %v746 = vpop.f32.mrb[0].mxu0
        %v747 = vadd.f32 0.0, %v746
        %v748 = vpop.f32.mrb[0].mxu0
        %v749 = vadd.f32 0.0, %v748
        %v750 = vpop.f32.mrb[0].mxu0
        %v751 = vadd.f32 0.0, %v750
        %752 = vmatprep.mubr.bf16.mxu0 0
        %753 = vmatmul.mubr.bf16.gmra.mrb[0].mxu0 %v522
        %v754 = vpop.f32.mrb[0].mxu0
        %v755 = vadd.f32 0.0, %v754
        %v756 = vpop.f32.mrb[0].mxu0
        %v757 = vadd.f32 0.0, %v756
        %v758 = vpop.f32.mrb[0].mxu0
        %v759 = vadd.f32 0.0, %v758
        %v760 = vpop.f32.mrb[0].mxu0
        %v761 = vadd.f32 0.0, %v760
        %762 = vmatprep.mubr.bf16.mxu0 0
        %763 = vmatmul.mubr.bf16.gmra.mrb[0].mxu0 %v523
        %v764 = vpop.f32.mrb[0].mxu0
        %v765 = vadd.f32 0.0, %v764
        %v766 = vpop.f32.mrb[0].mxu0
        %v767 = vadd.f32 0.0, %v766
        %v768 = vpop.f32.mrb[0].mxu0
        %v769 = vadd.f32 0.0, %v768
        %v770 = vpop.f32.mrb[0].mxu0
        %v771 = vadd.f32 0.0, %v770
        %772 = vmatprep.mubr.bf16.mxu0 0
        %773 = vmatmul.mubr.bf16.gmra.mrb[0].mxu0 %v524
        %v774 = vpop.f32.mrb[0].mxu0
        %v775 = vadd.f32 0.0, %v774
        %v776 = vpop.f32.mrb[0].mxu0
        %v777 = vadd.f32 0.0, %v776
        %v778 = vpop.f32.mrb[0].mxu0
        %v779 = vadd.f32 0.0, %v778
        %v780 = vpop.f32.mrb[0].mxu0
        %v781 = vadd.f32 0.0, %v780
        %782 = vmatprep.mubr.bf16.mxu0 0
        %783 = vmatmul.mubr.bf16.gmra.mrb[0].mxu0 %v525
        %v784 = vpop.f32.mrb[0].mxu0
        %v785 = vadd.f32 0.0, %v784
        %v786 = vpop.f32.mrb[0].mxu0
        %v787 = vadd.f32 0.0, %v786
        %v788 = vpop.f32.mrb[0].mxu0
        %v789 = vadd.f32 0.0, %v788
        %v790 = vpop.f32.mrb[0].mxu0
        %v791 = vadd.f32 0.0, %v790
        %792 = vmatprep.mubr.bf16.mxu0 0
        %793 = vmatmul.mubr.bf16.gmra.mrb[0].mxu0 %v526
        %v794 = vpop.f32.mrb[0].mxu0
        %v795 = vadd.f32 0.0, %v794
        %v796 = vpop.f32.mrb[0].mxu0
        %v797 = vadd.f32 0.0, %v796
        %v798 = vpop.f32.mrb[0].mxu0
        %v799 = vadd.f32 0.0, %v798
        %v800 = vpop.f32.mrb[0].mxu0
        %v801 = vadd.f32 0.0, %v800
        %802 = vmatprep.mubr.bf16.mxu0 0
        %803 = vmatmul.mubr.bf16.gmra.mrb[0].mxu0 %v527
        %v804 = vpop.f32.mrb[0].mxu0
        %v805 = vadd.f32 0.0, %v804
        %v806 = vpop.f32.mrb[0].mxu0
        %v807 = vadd.f32 0.0, %v806
        %v808 = vpop.f32.mrb[0].mxu0
        %v809 = vadd.f32 0.0, %v808
        %v810 = vpop.f32.mrb[0].mxu0
        %v811 = vadd.f32 0.0, %v810
        %812 = vmatprep.mubr.bf16.mxu0 0
        %813 = vmatmul.mubr.bf16.gmra.mrb[0].mxu0 %v528
        %v814 = vpop.f32.mrb[0].mxu0
        %v815 = vadd.f32 0.0, %v814
        %v816 = vpop.f32.mrb[0].mxu0
        %v817 = vadd.f32 0.0, %v816
        %v818 = vpop.f32.mrb[0].mxu0
        %v819 = vadd.f32 0.0, %v818
        %v820 = vpop.f32.mrb[0].mxu0
        %v821 = vadd.f32 0.0, %v820
        %822 = vmatprep.mubr.bf16.mxu0 0
        %823 = vmatmul.mubr.bf16.gmra.mrb[0].mxu0 %v529
        %v824 = vpop.f32.mrb[0].mxu0
        %v825 = vadd.f32 0.0, %v824
        %v826 = vpop.f32.mrb[0].mxu0
        %v827 = vadd.f32 0.0, %v826
        %v828 = vpop.f32.mrb[0].mxu0
        %v829 = vadd.f32 0.0, %v828
        %v830 = vpop.f32.mrb[0].mxu0
        %v831 = vadd.f32 0.0, %v830
        %832 = vmatprep.mubr.bf16.mxu0 0
        %833 = vmatmul.mubr.bf16.gmra.mrb[0].mxu0 %v530
        %v834 = vpop.f32.mrb[0].mxu0
        %v835 = vadd.f32 0.0, %v834
        %v836 = vpop.f32.mrb[0].mxu0
        %v837 = vadd.f32 0.0, %v836
        %v838 = vpop.f32.mrb[0].mxu0
        %v839 = vadd.f32 0.0, %v838
        %v840 = vpop.f32.mrb[0].mxu0
        %v841 = vadd.f32 0.0, %v840
        %842 = vmatprep.mubr.bf16.mxu0 0
        %843 = vmatmul.mubr.bf16.gmra.mrb[0].mxu0 %v531
        %v844 = vpop.f32.mrb[0].mxu0
        %v845 = vadd.f32 0.0, %v844
        %v846 = vpop.f32.mrb[0].mxu0
        %v847 = vadd.f32 0.0, %v846
        %v848 = vpop.f32.mrb[0].mxu0
        %v849 = vadd.f32 0.0, %v848
        %v850 = vpop.f32.mrb[0].mxu0
        %v851 = vadd.f32 0.0, %v850
        %852 = vmatprep.mubr.bf16.mxu0 0
        %853 = vmatmul.mubr.bf16.gmra.mrb[0].mxu0 %v532
        %v854 = vpop.f32.mrb[0].mxu0
        %v855 = vadd.f32 0.0, %v854
        %v856 = vpop.f32.mrb[0].mxu0
        %v857 = vadd.f32 0.0, %v856
        %v858 = vpop.f32.mrb[0].mxu0
        %v859 = vadd.f32 0.0, %v858
        %v860 = vpop.f32.mrb[0].mxu0
        %v861 = vadd.f32 0.0, %v860
        %862 = vmatprep.mubr.bf16.mxu0 0
        %863 = vmatmul.mubr.bf16.gmra.mrb[0].mxu0 %v533
        %v864 = vpop.f32.mrb[0].mxu0
        %v865 = vadd.f32 0.0, %v864
        %v866 = vpop.f32.mrb[0].mxu0
        %v867 = vadd.f32 0.0, %v866
        %v868 = vpop.f32.mrb[0].mxu0
        %v869 = vadd.f32 0.0, %v868
        %v870 = vpop.f32.mrb[0].mxu0
        %v871 = vadd.f32 0.0, %v870
        %872 = vmatprep.mubr.bf16.mxu0 0
        %873 = vmatmul.mubr.bf16.gmra.mrb[0].mxu0 %v534
        %v874 = vpop.f32.mrb[0].mxu0
        %v875 = vadd.f32 0.0, %v874
        %v876 = vpop.f32.mrb[0].mxu0
        %v877 = vadd.f32 0.0, %v876
        %v878 = vpop.f32.mrb[0].mxu0
        %v879 = vadd.f32 0.0, %v878
        %v880 = vpop.f32.mrb[0].mxu0
        %v881 = vadd.f32 0.0, %v880
        %882 = vmatprep.mubr.bf16.mxu0 0
        %883 = vmatmul.mubr.bf16.gmra.mrb[0].mxu0 %v535
        %v884 = vpop.f32.mrb[0].mxu0
        %v885 = vadd.f32 0.0, %v884
        %v886 = vpop.f32.mrb[0].mxu0
        %v887 = vadd.f32 0.0, %v886
        %v888 = vpop.f32.mrb[0].mxu0
        %v889 = vadd.f32 0.0, %v888
        %v890 = vpop.f32.mrb[0].mxu0
        %v891 = vadd.f32 0.0, %v890
        %892 = vmatprep.mubr.bf16.mxu0 0
        %893 = vmatmul.mubr.bf16.gmra.mrb[0].mxu0 %v536
        %v894 = vpop.f32.mrb[0].mxu0
        %v895 = vadd.f32 0.0, %v894
        %v896 = vpop.f32.mrb[0].mxu0
        %v897 = vadd.f32 0.0, %v896
        %v898 = vpop.f32.mrb[0].mxu0
        %v899 = vadd.f32 0.0, %v898
        %v900 = vpop.f32.mrb[0].mxu0
        %v901 = vadd.f32 0.0, %v900
        %902 = vmatprep.mubr.bf16.mxu0 0
        %903 = vmatmul.mubr.bf16.gmra.mrb[0].mxu0 %v537
        %v904 = vpop.f32.mrb[0].mxu0
        %v905 = vadd.f32 0.0, %v904
        %v906 = vpop.f32.mrb[0].mxu0
        %v907 = vadd.f32 0.0, %v906
        %v908 = vpop.f32.mrb[0].mxu0
        %v909 = vadd.f32 0.0, %v908
        %v910 = vpop.f32.mrb[0].mxu0
        %v911 = vadd.f32 0.0, %v910
        %912 = vmatprep.mubr.bf16.mxu0 0
        %913 = vmatmul.mubr.bf16.gmra.mrb[0].mxu0 %v538
        %v914 = vpop.f32.mrb[0].mxu0
        %v915 = vadd.f32 0.0, %v914
        %v916 = vpop.f32.mrb[0].mxu0
        %v917 = vadd.f32 0.0, %v916
        %v918 = vpop.f32.mrb[0].mxu0
        %v919 = vadd.f32 0.0, %v918
        %v920 = vpop.f32.mrb[0].mxu0
        %v921 = vadd.f32 0.0, %v920
        %922 = vmatprep.mubr.bf16.mxu0 0
        %923 = vmatmul.mubr.bf16.gmra.mrb[0].mxu0 %v539
        %v924 = vpop.f32.mrb[0].mxu0
        %v925 = vadd.f32 0.0, %v924
        %v926 = vpop.f32.mrb[0].mxu0
        %v927 = vadd.f32 0.0, %v926
        %v928 = vpop.f32.mrb[0].mxu0
        %v929 = vadd.f32 0.0, %v928
        %v930 = vpop.f32.mrb[0].mxu0
        %v931 = vadd.f32 0.0, %v930
        %932 = vmatprep.mubr.bf16.mxu0 0
        %933 = vmatmul.mubr.bf16.gmra.mrb[0].mxu0 %v540
        %v934 = vpop.f32.mrb[0].mxu0
        %v935 = vadd.f32 0.0, %v934
        %v936 = vpop.f32.mrb[0].mxu0
        %v937 = vadd.f32 0.0, %v936
        %v938 = vpop.f32.mrb[0].mxu0
        %v939 = vadd.f32 0.0, %v938
        %v940 = vpop.f32.mrb[0].mxu0
        %v941 = vadd.f32 0.0, %v940
        %942 = vmatprep.mubr.bf16.mxu0 0
        %943 = vmatmul.mubr.bf16.gmra.mrb[0].mxu0 %v541
        %v944 = vpop.f32.mrb[0].mxu0
        %v945 = vadd.f32 0.0, %v944
        %v946 = vpop.f32.mrb[0].mxu0
        %v947 = vadd.f32 0.0, %v946
        %v948 = vpop.f32.mrb[0].mxu0
        %v949 = vadd.f32 0.0, %v948
        %v950 = vpop.f32.mrb[0].mxu0
        %v951 = vadd.f32 0.0, %v950
        %952 = vmatprep.mubr.bf16.mxu0 0
        %953 = vmatmul.mubr.bf16.gmra.mrb[0].mxu0 %v542
        %v954 = vpop.f32.mrb[0].mxu0
        %v955 = vadd.f32 0.0, %v954
        %v956 = vpop.f32.mrb[0].mxu0
        %v957 = vadd.f32 0.0, %v956
        %v958 = vpop.f32.mrb[0].mxu0
        %v959 = vadd.f32 0.0, %v958
        %v960 = vpop.f32.mrb[0].mxu0
        %v961 = vadd.f32 0.0, %v960
        %962 = vmatprep.mubr.bf16.mxu0 0
        %963 = vmatmul.mubr.bf16.gmra.mrb[0].mxu0 %v543
        %v964 = vpop.f32.mrb[0].mxu0
        %v965 = vadd.f32 0.0, %v964
        %v966 = vpop.f32.mrb[0].mxu0
        %v967 = vadd.f32 0.0, %v966
        %v968 = vpop.f32.mrb[0].mxu0
        %v969 = vadd.f32 0.0, %v968
        %v970 = vpop.f32.mrb[0].mxu0
        %v971 = vadd.f32 0.0, %v970
        %972 = vmatprep.mubr.bf16.mxu0 0
        %973 = vmatmul.mubr.bf16.gmra.mrb[0].mxu0 %v544
        %v974 = vpop.f32.mrb[0].mxu0
        %v975 = vadd.f32 0.0, %v974
        %v976 = vpop.f32.mrb[0].mxu0
        %v977 = vadd.f32 0.0, %v976
        %v978 = vpop.f32.mrb[0].mxu0
        %v979 = vadd.f32 0.0, %v978
        %v980 = vpop.f32.mrb[0].mxu0
        %v981 = vadd.f32 0.0, %v980
        %982 = vmatprep.mubr.bf16.mxu0 0
        %983 = vmatmul.mubr.bf16.gmra.mrb[0].mxu0 %v545
        %v984 = vpop.f32.mrb[0].mxu0
        %v985 = vadd.f32 0.0, %v984
        %v986 = vpop.f32.mrb[0].mxu0
        %v987 = vadd.f32 0.0, %v986
        %v988 = vpop.f32.mrb[0].mxu0
        %v989 = vadd.f32 0.0, %v988
        %v990 = vpop.f32.mrb[0].mxu0
        %v991 = vadd.f32 0.0, %v990
        %992 = vmatprep.mubr.bf16.mxu0 0
        %993 = vmatmul.mubr.bf16.gmra.mrb[0].mxu0 %v546
        %v994 = vpop.f32.mrb[0].mxu0
        %v995 = vadd.f32 0.0, %v994
        %v996 = vpop.f32.mrb[0].mxu0
        %v997 = vadd.f32 0.0, %v996
        %v998 = vpop.f32.mrb[0].mxu0
        %v999 = vadd.f32 0.0, %v998
        %v1000 = vpop.f32.mrb[0].mxu0
        %v1001 = vadd.f32 0.0, %v1000
        %1002 = vmatprep.mubr.bf16.mxu0 0
        %1003 = vmatmul.mubr.bf16.gmra.mrb[0].mxu0 %v547
        %v1004 = vpop.f32.mrb[0].mxu0
        %v1005 = vadd.f32 0.0, %v1004
        %v1006 = vpop.f32.mrb[0].mxu0
        %v1007 = vadd.f32 0.0, %v1006
        %v1008 = vpop.f32.mrb[0].mxu0
        %v1009 = vadd.f32 0.0, %v1008
        %v1010 = vpop.f32.mrb[0].mxu0
        %v1011 = vadd.f32 0.0, %v1010
        %1012 = vdwg.mxu0
        %v1013 = vld [vmem:[%s2] sm:$0x3]
        %v1015 = vlaneseq
        %v1016 = vshrl.u32 %v1015, 7
        %v1017 = vsub.s32 0, %v1016
        %v1018 = vrot.slane %v1013, %v1017
        %v1019 = vlaneseq
        %v1020 = vshrl.u32 %v1019, 7
        %v1021 = vsub.s32 1, %v1020
        %v1022 = vrot.slane %v1013, %v1021
        %v1025 = vmul.f32 %v695, %v1018
        %v1026 = vmul.f32 %v697, %v1022
        %v1027 = vmul.f32 %v699, %v1018
        %v1028 = vmul.f32 %v701, %v1022
        %v1029 = vmul.f32 %v705, %v1018
        %v1030 = vmul.f32 %v707, %v1022
        %v1031 = vmul.f32 %v709, %v1018
        %v1032 = vmul.f32 %v711, %v1022
        %v1033 = vmul.f32 %v715, %v1018
        %v1034 = vmul.f32 %v717, %v1022
        %v1035 = vmul.f32 %v719, %v1018
        %v1036 = vmul.f32 %v721, %v1022
        %v1037 = vmul.f32 %v725, %v1018
        %v1038 = vmul.f32 %v727, %v1022
        %v1039 = vmul.f32 %v729, %v1018
        %v1040 = vmul.f32 %v731, %v1022
        %v1041 = vmul.f32 %v735, %v1018
        %v1042 = vmul.f32 %v737, %v1022
        %v1043 = vmul.f32 %v739, %v1018
        %v1044 = vmul.f32 %v741, %v1022
        %v1045 = vmul.f32 %v745, %v1018
        %v1046 = vmul.f32 %v747, %v1022
        %v1047 = vmul.f32 %v749, %v1018
        %v1048 = vmul.f32 %v751, %v1022
        %v1049 = vmul.f32 %v755, %v1018
        %v1050 = vmul.f32 %v757, %v1022
        %v1051 = vmul.f32 %v759, %v1018
        %v1052 = vmul.f32 %v761, %v1022
        %v1053 = vmul.f32 %v765, %v1018
        %v1054 = vmul.f32 %v767, %v1022
        %v1055 = vmul.f32 %v769, %v1018
        %v1056 = vmul.f32 %v771, %v1022
        %v1057 = vmul.f32 %v775, %v1018
        %v1058 = vmul.f32 %v777, %v1022
        %v1059 = vmul.f32 %v779, %v1018
        %v1060 = vmul.f32 %v781, %v1022
        %v1061 = vmul.f32 %v785, %v1018
        %v1062 = vmul.f32 %v787, %v1022
        %v1063 = vmul.f32 %v789, %v1018
        %v1064 = vmul.f32 %v791, %v1022
        %v1065 = vmul.f32 %v795, %v1018
        %v1066 = vmul.f32 %v797, %v1022
        %v1067 = vmul.f32 %v799, %v1018
        %v1068 = vmul.f32 %v801, %v1022
        %v1069 = vmul.f32 %v805, %v1018
        %v1070 = vmul.f32 %v807, %v1022
        %v1071 = vmul.f32 %v809, %v1018
        %v1072 = vmul.f32 %v811, %v1022
        %v1073 = vmul.f32 %v815, %v1018
        %v1074 = vmul.f32 %v817, %v1022
        %v1075 = vmul.f32 %v819, %v1018
        %v1076 = vmul.f32 %v821, %v1022
        %v1077 = vmul.f32 %v825, %v1018
        %v1078 = vmul.f32 %v827, %v1022
        %v1079 = vmul.f32 %v829, %v1018
        %v1080 = vmul.f32 %v831, %v1022
        %v1081 = vmul.f32 %v835, %v1018
        %v1082 = vmul.f32 %v837, %v1022
        %v1083 = vmul.f32 %v839, %v1018
        %v1084 = vmul.f32 %v841, %v1022
        %v1085 = vmul.f32 %v845, %v1018
        %v1086 = vmul.f32 %v847, %v1022
        %v1087 = vmul.f32 %v849, %v1018
        %v1088 = vmul.f32 %v851, %v1022
        %v1089 = vmul.f32 %v855, %v1018
        %v1090 = vmul.f32 %v857, %v1022
        %v1091 = vmul.f32 %v859, %v1018
        %v1092 = vmul.f32 %v861, %v1022
        %v1093 = vmul.f32 %v865, %v1018
        %v1094 = vmul.f32 %v867, %v1022
        %v1095 = vmul.f32 %v869, %v1018
        %v1096 = vmul.f32 %v871, %v1022
        %v1097 = vmul.f32 %v875, %v1018
        %v1098 = vmul.f32 %v877, %v1022
        %v1099 = vmul.f32 %v879, %v1018
        %v1100 = vmul.f32 %v881, %v1022
        %v1101 = vmul.f32 %v885, %v1018
        %v1102 = vmul.f32 %v887, %v1022
        %v1103 = vmul.f32 %v889, %v1018
        %v1104 = vmul.f32 %v891, %v1022
        %v1105 = vmul.f32 %v895, %v1018
        %v1106 = vmul.f32 %v897, %v1022
        %v1107 = vmul.f32 %v899, %v1018
        %v1108 = vmul.f32 %v901, %v1022
        %v1109 = vmul.f32 %v905, %v1018
        %v1110 = vmul.f32 %v907, %v1022
        %v1111 = vmul.f32 %v909, %v1018
        %v1112 = vmul.f32 %v911, %v1022
        %v1113 = vmul.f32 %v915, %v1018
        %v1114 = vmul.f32 %v917, %v1022
        %v1115 = vmul.f32 %v919, %v1018
        %v1116 = vmul.f32 %v921, %v1022
        %v1117 = vmul.f32 %v925, %v1018
        %v1118 = vmul.f32 %v927, %v1022
        %v1119 = vmul.f32 %v929, %v1018
        %v1120 = vmul.f32 %v931, %v1022
        %v1121 = vmul.f32 %v935, %v1018
        %v1122 = vmul.f32 %v937, %v1022
        %v1123 = vmul.f32 %v939, %v1018
        %v1124 = vmul.f32 %v941, %v1022
        %v1125 = vmul.f32 %v945, %v1018
        %v1126 = vmul.f32 %v947, %v1022
        %v1127 = vmul.f32 %v949, %v1018
        %v1128 = vmul.f32 %v951, %v1022
        %v1129 = vmul.f32 %v955, %v1018
        %v1130 = vmul.f32 %v957, %v1022
        %v1131 = vmul.f32 %v959, %v1018
        %v1132 = vmul.f32 %v961, %v1022
        %v1133 = vmul.f32 %v965, %v1018
        %v1134 = vmul.f32 %v967, %v1022
        %v1135 = vmul.f32 %v969, %v1018
        %v1136 = vmul.f32 %v971, %v1022
        %v1137 = vmul.f32 %v975, %v1018
        %v1138 = vmul.f32 %v977, %v1022
        %v1139 = vmul.f32 %v979, %v1018
        %v1140 = vmul.f32 %v981, %v1022
        %v1141 = vmul.f32 %v985, %v1018
        %v1142 = vmul.f32 %v987, %v1022
        %v1143 = vmul.f32 %v989, %v1018
        %v1144 = vmul.f32 %v991, %v1022
        %v1145 = vmul.f32 %v995, %v1018
        %v1146 = vmul.f32 %v997, %v1022
        %v1147 = vmul.f32 %v999, %v1018
        %v1148 = vmul.f32 %v1001, %v1022
        %v1149 = vmul.f32 %v1005, %v1018
        %v1150 = vmul.f32 %v1007, %v1022
        %v1151 = vmul.f32 %v1009, %v1018
        %v1152 = vmul.f32 %v1011, %v1022
        %v1153 = vld [vmem:[%s3] sm:$0x3]
        %v1155 = vlaneseq
        %v1156 = vshrl.u32 %v1155, 7
        %v1157 = vsub.s32 0, %v1156
        %v1158 = vrot.slane %v1153, %v1157
        %v1159 = vlaneseq
        %v1160 = vshrl.u32 %v1159, 7
        %v1161 = vsub.s32 1, %v1160
        %v1162 = vrot.slane %v1153, %v1161
        %v1165 = vadd.f32 %v1025, %v1158
        %v1166 = vadd.f32 %v1026, %v1162
        %v1167 = vadd.f32 %v1027, %v1158
        %v1168 = vadd.f32 %v1028, %v1162
        %v1169 = vadd.f32 %v1029, %v1158
        %v1170 = vadd.f32 %v1030, %v1162
        %v1171 = vadd.f32 %v1031, %v1158
        %v1172 = vadd.f32 %v1032, %v1162
        %v1173 = vadd.f32 %v1033, %v1158
        %v1174 = vadd.f32 %v1034, %v1162
        %v1175 = vadd.f32 %v1035, %v1158
        %v1176 = vadd.f32 %v1036, %v1162
        %v1177 = vadd.f32 %v1037, %v1158
        %v1178 = vadd.f32 %v1038, %v1162
        %v1179 = vadd.f32 %v1039, %v1158
        %v1180 = vadd.f32 %v1040, %v1162
        %v1181 = vadd.f32 %v1041, %v1158
        %v1182 = vadd.f32 %v1042, %v1162
        %v1183 = vadd.f32 %v1043, %v1158
        %v1184 = vadd.f32 %v1044, %v1162
        %v1185 = vadd.f32 %v1045, %v1158
        %v1186 = vadd.f32 %v1046, %v1162
        %v1187 = vadd.f32 %v1047, %v1158
        %v1188 = vadd.f32 %v1048, %v1162
        %v1189 = vadd.f32 %v1049, %v1158
        %v1190 = vadd.f32 %v1050, %v1162
        %v1191 = vadd.f32 %v1051, %v1158
        %v1192 = vadd.f32 %v1052, %v1162
        %v1193 = vadd.f32 %v1053, %v1158
        %v1194 = vadd.f32 %v1054, %v1162
        %v1195 = vadd.f32 %v1055, %v1158
        %v1196 = vadd.f32 %v1056, %v1162
        %v1197 = vadd.f32 %v1057, %v1158
        %v1198 = vadd.f32 %v1058, %v1162
        %v1199 = vadd.f32 %v1059, %v1158
        %v1200 = vadd.f32 %v1060, %v1162
        %v1201 = vadd.f32 %v1061, %v1158
        %v1202 = vadd.f32 %v1062, %v1162
        %v1203 = vadd.f32 %v1063, %v1158
        %v1204 = vadd.f32 %v1064, %v1162
        %v1205 = vadd.f32 %v1065, %v1158
        %v1206 = vadd.f32 %v1066, %v1162
        %v1207 = vadd.f32 %v1067, %v1158
        %v1208 = vadd.f32 %v1068, %v1162
        %v1209 = vadd.f32 %v1069, %v1158
        %v1210 = vadd.f32 %v1070, %v1162
        %v1211 = vadd.f32 %v1071, %v1158
        %v1212 = vadd.f32 %v1072, %v1162
        %v1213 = vadd.f32 %v1073, %v1158
        %v1214 = vadd.f32 %v1074, %v1162
        %v1215 = vadd.f32 %v1075, %v1158
        %v1216 = vadd.f32 %v1076, %v1162
        %v1217 = vadd.f32 %v1077, %v1158
        %v1218 = vadd.f32 %v1078, %v1162
        %v1219 = vadd.f32 %v1079, %v1158
        %v1220 = vadd.f32 %v1080, %v1162
        %v1221 = vadd.f32 %v1081, %v1158
        %v1222 = vadd.f32 %v1082, %v1162
        %v1223 = vadd.f32 %v1083, %v1158
        %v1224 = vadd.f32 %v1084, %v1162
        %v1225 = vadd.f32 %v1085, %v1158
        %v1226 = vadd.f32 %v1086, %v1162
        %v1227 = vadd.f32 %v1087, %v1158
        %v1228 = vadd.f32 %v1088, %v1162
        %v1229 = vadd.f32 %v1089, %v1158
        %v1230 = vadd.f32 %v1090, %v1162
        %v1231 = vadd.f32 %v1091, %v1158
        %v1232 = vadd.f32 %v1092, %v1162
        %v1233 = vadd.f32 %v1093, %v1158
        %v1234 = vadd.f32 %v1094, %v1162
        %v1235 = vadd.f32 %v1095, %v1158
        %v1236 = vadd.f32 %v1096, %v1162
        %v1237 = vadd.f32 %v1097, %v1158
        %v1238 = vadd.f32 %v1098, %v1162
        %v1239 = vadd.f32 %v1099, %v1158
        %v1240 = vadd.f32 %v1100, %v1162
        %v1241 = vadd.f32 %v1101, %v1158
        %v1242 = vadd.f32 %v1102, %v1162
        %v1243 = vadd.f32 %v1103, %v1158
        %v1244 = vadd.f32 %v1104, %v1162
        %v1245 = vadd.f32 %v1105, %v1158
        %v1246 = vadd.f32 %v1106, %v1162
        %v1247 = vadd.f32 %v1107, %v1158
        %v1248 = vadd.f32 %v1108, %v1162
        %v1249 = vadd.f32 %v1109, %v1158
        %v1250 = vadd.f32 %v1110, %v1162
        %v1251 = vadd.f32 %v1111, %v1158
        %v1252 = vadd.f32 %v1112, %v1162
        %v1253 = vadd.f32 %v1113, %v1158
        %v1254 = vadd.f32 %v1114, %v1162
        %v1255 = vadd.f32 %v1115, %v1158
        %v1256 = vadd.f32 %v1116, %v1162
        %v1257 = vadd.f32 %v1117, %v1158
        %v1258 = vadd.f32 %v1118, %v1162
        %v1259 = vadd.f32 %v1119, %v1158
        %v1260 = vadd.f32 %v1120, %v1162
        %v1261 = vadd.f32 %v1121, %v1158
        %v1262 = vadd.f32 %v1122, %v1162
        %v1263 = vadd.f32 %v1123, %v1158
        %v1264 = vadd.f32 %v1124, %v1162
        %v1265 = vadd.f32 %v1125, %v1158
        %v1266 = vadd.f32 %v1126, %v1162
        %v1267 = vadd.f32 %v1127, %v1158
        %v1268 = vadd.f32 %v1128, %v1162
        %v1269 = vadd.f32 %v1129, %v1158
        %v1270 = vadd.f32 %v1130, %v1162
        %v1271 = vadd.f32 %v1131, %v1158
        %v1272 = vadd.f32 %v1132, %v1162
        %v1273 = vadd.f32 %v1133, %v1158
        %v1274 = vadd.f32 %v1134, %v1162
        %v1275 = vadd.f32 %v1135, %v1158
        %v1276 = vadd.f32 %v1136, %v1162
        %v1277 = vadd.f32 %v1137, %v1158
        %v1278 = vadd.f32 %v1138, %v1162
        %v1279 = vadd.f32 %v1139, %v1158
        %v1280 = vadd.f32 %v1140, %v1162
        %v1281 = vadd.f32 %v1141, %v1158
        %v1282 = vadd.f32 %v1142, %v1162
        %v1283 = vadd.f32 %v1143, %v1158
        %v1284 = vadd.f32 %v1144, %v1162
        %v1285 = vadd.f32 %v1145, %v1158
        %v1286 = vadd.f32 %v1146, %v1162
        %v1287 = vadd.f32 %v1147, %v1158
        %v1288 = vadd.f32 %v1148, %v1162
        %v1289 = vadd.f32 %v1149, %v1158
        %v1290 = vadd.f32 %v1150, %v1162
        %v1291 = vadd.f32 %v1151, %v1158
        %v1292 = vadd.f32 %v1152, %v1162
        %v1293 = vmax.f32 %v1165, 0.0
        %v1294 = vmax.f32 %v1166, 0.0
        %v1295 = vmax.f32 %v1167, 0.0
        %v1296 = vmax.f32 %v1168, 0.0
        %v1297 = vmax.f32 %v1169, 0.0
        %v1298 = vmax.f32 %v1170, 0.0
        %v1299 = vmax.f32 %v1171, 0.0
        %v1300 = vmax.f32 %v1172, 0.0
        %v1301 = vmax.f32 %v1173, 0.0
        %v1302 = vmax.f32 %v1174, 0.0
        %v1303 = vmax.f32 %v1175, 0.0
        %v1304 = vmax.f32 %v1176, 0.0
        %v1305 = vmax.f32 %v1177, 0.0
        %v1306 = vmax.f32 %v1178, 0.0
        %v1307 = vmax.f32 %v1179, 0.0
        %v1308 = vmax.f32 %v1180, 0.0
        %v1309 = vmax.f32 %v1181, 0.0
        %v1310 = vmax.f32 %v1182, 0.0
        %v1311 = vmax.f32 %v1183, 0.0
        %v1312 = vmax.f32 %v1184, 0.0
        %v1313 = vmax.f32 %v1185, 0.0
        %v1314 = vmax.f32 %v1186, 0.0
        %v1315 = vmax.f32 %v1187, 0.0
        %v1316 = vmax.f32 %v1188, 0.0
        %v1317 = vmax.f32 %v1189, 0.0
        %v1318 = vmax.f32 %v1190, 0.0
        %v1319 = vmax.f32 %v1191, 0.0
        %v1320 = vmax.f32 %v1192, 0.0
        %v1321 = vmax.f32 %v1193, 0.0
        %v1322 = vmax.f32 %v1194, 0.0
        %v1323 = vmax.f32 %v1195, 0.0
        %v1324 = vmax.f32 %v1196, 0.0
        %v1325 = vmax.f32 %v1197, 0.0
        %v1326 = vmax.f32 %v1198, 0.0
        %v1327 = vmax.f32 %v1199, 0.0
        %v1328 = vmax.f32 %v1200, 0.0
        %v1329 = vmax.f32 %v1201, 0.0
        %v1330 = vmax.f32 %v1202, 0.0
        %v1331 = vmax.f32 %v1203, 0.0
        %v1332 = vmax.f32 %v1204, 0.0
        %v1333 = vmax.f32 %v1205, 0.0
        %v1334 = vmax.f32 %v1206, 0.0
        %v1335 = vmax.f32 %v1207, 0.0
        %v1336 = vmax.f32 %v1208, 0.0
        %v1337 = vmax.f32 %v1209, 0.0
        %v1338 = vmax.f32 %v1210, 0.0
        %v1339 = vmax.f32 %v1211, 0.0
        %v1340 = vmax.f32 %v1212, 0.0
        %v1341 = vmax.f32 %v1213, 0.0
        %v1342 = vmax.f32 %v1214, 0.0
        %v1343 = vmax.f32 %v1215, 0.0
        %v1344 = vmax.f32 %v1216, 0.0
        %v1345 = vmax.f32 %v1217, 0.0
        %v1346 = vmax.f32 %v1218, 0.0
        %v1347 = vmax.f32 %v1219, 0.0
        %v1348 = vmax.f32 %v1220, 0.0
        %v1349 = vmax.f32 %v1221, 0.0
        %v1350 = vmax.f32 %v1222, 0.0
        %v1351 = vmax.f32 %v1223, 0.0
        %v1352 = vmax.f32 %v1224, 0.0
        %v1353 = vmax.f32 %v1225, 0.0
        %v1354 = vmax.f32 %v1226, 0.0
        %v1355 = vmax.f32 %v1227, 0.0
        %v1356 = vmax.f32 %v1228, 0.0
        %v1357 = vmax.f32 %v1229, 0.0
        %v1358 = vmax.f32 %v1230, 0.0
        %v1359 = vmax.f32 %v1231, 0.0
        %v1360 = vmax.f32 %v1232, 0.0
        %v1361 = vmax.f32 %v1233, 0.0
        %v1362 = vmax.f32 %v1234, 0.0
        %v1363 = vmax.f32 %v1235, 0.0
        %v1364 = vmax.f32 %v1236, 0.0
        %v1365 = vmax.f32 %v1237, 0.0
        %v1366 = vmax.f32 %v1238, 0.0
        %v1367 = vmax.f32 %v1239, 0.0
        %v1368 = vmax.f32 %v1240, 0.0
        %v1369 = vmax.f32 %v1241, 0.0
        %v1370 = vmax.f32 %v1242, 0.0
        %v1371 = vmax.f32 %v1243, 0.0
        %v1372 = vmax.f32 %v1244, 0.0
        %v1373 = vmax.f32 %v1245, 0.0
        %v1374 = vmax.f32 %v1246, 0.0
        %v1375 = vmax.f32 %v1247, 0.0
        %v1376 = vmax.f32 %v1248, 0.0
        %v1377 = vmax.f32 %v1249, 0.0
        %v1378 = vmax.f32 %v1250, 0.0
        %v1379 = vmax.f32 %v1251, 0.0
        %v1380 = vmax.f32 %v1252, 0.0
        %v1381 = vmax.f32 %v1253, 0.0
        %v1382 = vmax.f32 %v1254, 0.0
        %v1383 = vmax.f32 %v1255, 0.0
        %v1384 = vmax.f32 %v1256, 0.0
        %v1385 = vmax.f32 %v1257, 0.0
        %v1386 = vmax.f32 %v1258, 0.0
        %v1387 = vmax.f32 %v1259, 0.0
        %v1388 = vmax.f32 %v1260, 0.0
        %v1389 = vmax.f32 %v1261, 0.0
        %v1390 = vmax.f32 %v1262, 0.0
        %v1391 = vmax.f32 %v1263, 0.0
        %v1392 = vmax.f32 %v1264, 0.0
        %v1393 = vmax.f32 %v1265, 0.0
        %v1394 = vmax.f32 %v1266, 0.0
        %v1395 = vmax.f32 %v1267, 0.0
        %v1396 = vmax.f32 %v1268, 0.0
        %v1397 = vmax.f32 %v1269, 0.0
        %v1398 = vmax.f32 %v1270, 0.0
        %v1399 = vmax.f32 %v1271, 0.0
        %v1400 = vmax.f32 %v1272, 0.0
        %v1401 = vmax.f32 %v1273, 0.0
        %v1402 = vmax.f32 %v1274, 0.0
        %v1403 = vmax.f32 %v1275, 0.0
        %v1404 = vmax.f32 %v1276, 0.0
        %v1405 = vmax.f32 %v1277, 0.0
        %v1406 = vmax.f32 %v1278, 0.0
        %v1407 = vmax.f32 %v1279, 0.0
        %v1408 = vmax.f32 %v1280, 0.0
        %v1409 = vmax.f32 %v1281, 0.0
        %v1410 = vmax.f32 %v1282, 0.0
        %v1411 = vmax.f32 %v1283, 0.0
        %v1412 = vmax.f32 %v1284, 0.0
        %v1413 = vmax.f32 %v1285, 0.0
        %v1414 = vmax.f32 %v1286, 0.0
        %v1415 = vmax.f32 %v1287, 0.0
        %v1416 = vmax.f32 %v1288, 0.0
        %v1417 = vmax.f32 %v1289, 0.0
        %v1418 = vmax.f32 %v1290, 0.0
        %v1419 = vmax.f32 %v1291, 0.0
        %v1420 = vmax.f32 %v1292, 0.0
        %v1421 = vpack.c.bf16 %v1295, %v1293
        %v1422 = vpack.c.bf16 %v1296, %v1294
        %v1423 = vpack.c.bf16 %v1299, %v1297
        %v1424 = vpack.c.bf16 %v1300, %v1298
        %v1425 = vpack.c.bf16 %v1303, %v1301
        %v1426 = vpack.c.bf16 %v1304, %v1302
        %v1427 = vpack.c.bf16 %v1307, %v1305
        %v1428 = vpack.c.bf16 %v1308, %v1306
        %v1429 = vpack.c.bf16 %v1311, %v1309
        %v1430 = vpack.c.bf16 %v1312, %v1310
        %v1431 = vpack.c.bf16 %v1315, %v1313
        %v1432 = vpack.c.bf16 %v1316, %v1314
        %v1433 = vpack.c.bf16 %v1319, %v1317
        %v1434 = vpack.c.bf16 %v1320, %v1318
        %v1435 = vpack.c.bf16 %v1323, %v1321
        %v1436 = vpack.c.bf16 %v1324, %v1322
        %v1437 = vpack.c.bf16 %v1327, %v1325
        %v1438 = vpack.c.bf16 %v1328, %v1326
        %v1439 = vpack.c.bf16 %v1331, %v1329
        %v1440 = vpack.c.bf16 %v1332, %v1330
        %v1441 = vpack.c.bf16 %v1335, %v1333
        %v1442 = vpack.c.bf16 %v1336, %v1334
        %v1443 = vpack.c.bf16 %v1339, %v1337
        %v1444 = vpack.c.bf16 %v1340, %v1338
        %v1445 = vpack.c.bf16 %v1343, %v1341
        %v1446 = vpack.c.bf16 %v1344, %v1342
        %v1447 = vpack.c.bf16 %v1347, %v1345
        %v1448 = vpack.c.bf16 %v1348, %v1346
        %v1449 = vpack.c.bf16 %v1351, %v1349
        %v1450 = vpack.c.bf16 %v1352, %v1350
        %v1451 = vpack.c.bf16 %v1355, %v1353
        %v1452 = vpack.c.bf16 %v1356, %v1354
        %v1453 = vpack.c.bf16 %v1359, %v1357
        %v1454 = vpack.c.bf16 %v1360, %v1358
        %v1455 = vpack.c.bf16 %v1363, %v1361
        %v1456 = vpack.c.bf16 %v1364, %v1362
        %v1457 = vpack.c.bf16 %v1367, %v1365
        %v1458 = vpack.c.bf16 %v1368, %v1366
        %v1459 = vpack.c.bf16 %v1371, %v1369
        %v1460 = vpack.c.bf16 %v1372, %v1370
        %v1461 = vpack.c.bf16 %v1375, %v1373
        %v1462 = vpack.c.bf16 %v1376, %v1374
        %v1463 = vpack.c.bf16 %v1379, %v1377
        %v1464 = vpack.c.bf16 %v1380, %v1378
        %v1465 = vpack.c.bf16 %v1383, %v1381
        %v1466 = vpack.c.bf16 %v1384, %v1382
        %v1467 = vpack.c.bf16 %v1387, %v1385
        %v1468 = vpack.c.bf16 %v1388, %v1386
        %v1469 = vpack.c.bf16 %v1391, %v1389
        %v1470 = vpack.c.bf16 %v1392, %v1390
        %v1471 = vpack.c.bf16 %v1395, %v1393
        %v1472 = vpack.c.bf16 %v1396, %v1394
        %v1473 = vpack.c.bf16 %v1399, %v1397
        %v1474 = vpack.c.bf16 %v1400, %v1398
        %v1475 = vpack.c.bf16 %v1403, %v1401
        %v1476 = vpack.c.bf16 %v1404, %v1402
        %v1477 = vpack.c.bf16 %v1407, %v1405
        %v1478 = vpack.c.bf16 %v1408, %v1406
        %v1479 = vpack.c.bf16 %v1411, %v1409
        %v1480 = vpack.c.bf16 %v1412, %v1410
        %v1481 = vpack.c.bf16 %v1415, %v1413
        %v1482 = vpack.c.bf16 %v1416, %v1414
        %v1483 = vpack.c.bf16 %v1419, %v1417
        %v1484 = vpack.c.bf16 %v1420, %v1418
        %v1485 = vld [vmem:[%s4] sm:$0xff]
        %v1486 = vld [vmem:[%s4 + $0x8] sm:$0xff]
        %v1487 = vld [vmem:[%s4 + $0x10] sm:$0xff]
        %v1488 = vld [vmem:[%s4 + $0x18] sm:$0xff]
        %v1489 = vld [vmem:[%s4 + $0x20] sm:$0xff]
        %v1490 = vld [vmem:[%s4 + $0x28] sm:$0xff]
        %v1491 = vld [vmem:[%s4 + $0x30] sm:$0xff]
        %v1492 = vld [vmem:[%s4 + $0x38] sm:$0xff]
        %v1493 = vld [vmem:[%s4 + $0x40] sm:$0xff]
        %v1494 = vld [vmem:[%s4 + $0x48] sm:$0xff]
        %v1495 = vld [vmem:[%s4 + $0x50] sm:$0xff]
        %v1496 = vld [vmem:[%s4 + $0x58] sm:$0xff]
        %v1497 = vld [vmem:[%s4 + $0x60] sm:$0xff]
        %v1498 = vld [vmem:[%s4 + $0x68] sm:$0xff]
        %v1499 = vld [vmem:[%s4 + $0x70] sm:$0xff]
        %v1500 = vld [vmem:[%s4 + $0x78] sm:$0xff]
        %v1501 = vld [vmem:[%s4 + $0x80] sm:$0xff]
        %v1502 = vld [vmem:[%s4 + $0x88] sm:$0xff]
        %v1503 = vld [vmem:[%s4 + $0x90] sm:$0xff]
        %v1504 = vld [vmem:[%s4 + $0x98] sm:$0xff]
        %v1505 = vld [vmem:[%s4 + $0xa0] sm:$0xff]
        %v1506 = vld [vmem:[%s4 + $0xa8] sm:$0xff]
        %v1507 = vld [vmem:[%s4 + $0xb0] sm:$0xff]
        %v1508 = vld [vmem:[%s4 + $0xb8] sm:$0xff]
        %v1509 = vld [vmem:[%s4 + $0xc0] sm:$0xff]
        %v1510 = vld [vmem:[%s4 + $0xc8] sm:$0xff]
        %v1511 = vld [vmem:[%s4 + $0xd0] sm:$0xff]
        %v1512 = vld [vmem:[%s4 + $0xd8] sm:$0xff]
        %v1513 = vld [vmem:[%s4 + $0xe0] sm:$0xff]
        %v1514 = vld [vmem:[%s4 + $0xe8] sm:$0xff]
        %v1515 = vld [vmem:[%s4 + $0xf0] sm:$0xff]
        %v1516 = vld [vmem:[%s4 + $0xf8] sm:$0xff]
        %v1517 = vld [vmem:[%s5] sm:$0x3]
        %v1519 = vlaneseq
        %v1520 = vshrl.u32 %v1519, 7
        %v1521 = vsub.s32 0, %v1520
        %v1522 = vrot.slane %v1517, %v1521
        %v1523 = vlaneseq
        %v1524 = vshrl.u32 %v1523, 7
        %v1525 = vsub.s32 1, %v1524
        %v1526 = vrot.slane %v1517, %v1525
        %v1561 = vunpack.c.l.b16 %v1485
        %v1562 = vunpack.c.h.b16 %v1485
        %v1563 = vunpack.c.l.b16 %v1486
        %v1564 = vunpack.c.h.b16 %v1486
        %v1565 = vunpack.c.l.b16 %v1487
        %v1566 = vunpack.c.h.b16 %v1487
        %v1567 = vunpack.c.l.b16 %v1488
        %v1568 = vunpack.c.h.b16 %v1488
        %v1569 = vunpack.c.l.b16 %v1489
        %v1570 = vunpack.c.h.b16 %v1489
        %v1571 = vunpack.c.l.b16 %v1490
        %v1572 = vunpack.c.h.b16 %v1490
        %v1573 = vunpack.c.l.b16 %v1491
        %v1574 = vunpack.c.h.b16 %v1491
        %v1575 = vunpack.c.l.b16 %v1492
        %v1576 = vunpack.c.h.b16 %v1492
        %v1577 = vunpack.c.l.b16 %v1493
        %v1578 = vunpack.c.h.b16 %v1493
        %v1579 = vunpack.c.l.b16 %v1494
        %v1580 = vunpack.c.h.b16 %v1494
        %v1581 = vunpack.c.l.b16 %v1495
        %v1582 = vunpack.c.h.b16 %v1495
        %v1583 = vunpack.c.l.b16 %v1496
        %v1584 = vunpack.c.h.b16 %v1496
        %v1585 = vunpack.c.l.b16 %v1497
        %v1586 = vunpack.c.h.b16 %v1497
        %v1587 = vunpack.c.l.b16 %v1498
        %v1588 = vunpack.c.h.b16 %v1498
        %v1589 = vunpack.c.l.b16 %v1499
        %v1590 = vunpack.c.h.b16 %v1499
        %v1591 = vunpack.c.l.b16 %v1500
        %v1592 = vunpack.c.h.b16 %v1500
        %v1593 = vunpack.c.l.b16 %v1501
        %v1594 = vunpack.c.h.b16 %v1501
        %v1595 = vunpack.c.l.b16 %v1502
        %v1596 = vunpack.c.h.b16 %v1502
        %v1597 = vunpack.c.l.b16 %v1503
        %v1598 = vunpack.c.h.b16 %v1503
        %v1599 = vunpack.c.l.b16 %v1504
        %v1600 = vunpack.c.h.b16 %v1504
        %v1601 = vunpack.c.l.b16 %v1505
        %v1602 = vunpack.c.h.b16 %v1505
        %v1603 = vunpack.c.l.b16 %v1506
        %v1604 = vunpack.c.h.b16 %v1506
        %v1605 = vunpack.c.l.b16 %v1507
        %v1606 = vunpack.c.h.b16 %v1507
        %v1607 = vunpack.c.l.b16 %v1508
        %v1608 = vunpack.c.h.b16 %v1508
        %v1609 = vunpack.c.l.b16 %v1509
        %v1610 = vunpack.c.h.b16 %v1509
        %v1611 = vunpack.c.l.b16 %v1510
        %v1612 = vunpack.c.h.b16 %v1510
        %v1613 = vunpack.c.l.b16 %v1511
        %v1614 = vunpack.c.h.b16 %v1511
        %v1615 = vunpack.c.l.b16 %v1512
        %v1616 = vunpack.c.h.b16 %v1512
        %v1617 = vunpack.c.l.b16 %v1513
        %v1618 = vunpack.c.h.b16 %v1513
        %v1619 = vunpack.c.l.b16 %v1514
        %v1620 = vunpack.c.h.b16 %v1514
        %v1621 = vunpack.c.l.b16 %v1515
        %v1622 = vunpack.c.h.b16 %v1515
        %v1623 = vunpack.c.l.b16 %v1516
        %v1624 = vunpack.c.h.b16 %v1516
        %v1625 = vpack.c.b16 %v1563, %v1561
        %v1626 = vpack.c.b16 %v1564, %v1562
        %v1627 = vpack.c.b16 %v1567, %v1565
        %v1628 = vpack.c.b16 %v1568, %v1566
        %v1629 = vpack.c.b16 %v1571, %v1569
        %v1630 = vpack.c.b16 %v1572, %v1570
        %v1631 = vpack.c.b16 %v1575, %v1573
        %v1632 = vpack.c.b16 %v1576, %v1574
        %v1633 = vpack.c.b16 %v1579, %v1577
        %v1634 = vpack.c.b16 %v1580, %v1578
        %v1635 = vpack.c.b16 %v1583, %v1581
        %v1636 = vpack.c.b16 %v1584, %v1582
        %v1637 = vpack.c.b16 %v1587, %v1585
        %v1638 = vpack.c.b16 %v1588, %v1586
        %v1639 = vpack.c.b16 %v1591, %v1589
        %v1640 = vpack.c.b16 %v1592, %v1590
        %v1641 = vpack.c.b16 %v1595, %v1593
        %v1642 = vpack.c.b16 %v1596, %v1594
        %v1643 = vpack.c.b16 %v1599, %v1597
        %v1644 = vpack.c.b16 %v1600, %v1598
        %v1645 = vpack.c.b16 %v1603, %v1601
        %v1646 = vpack.c.b16 %v1604, %v1602
        %v1647 = vpack.c.b16 %v1607, %v1605
        %v1648 = vpack.c.b16 %v1608, %v1606
        %v1649 = vpack.c.b16 %v1611, %v1609
        %v1650 = vpack.c.b16 %v1612, %v1610
        %v1651 = vpack.c.b16 %v1615, %v1613
        %v1652 = vpack.c.b16 %v1616, %v1614
        %v1653 = vpack.c.b16 %v1619, %v1617
        %v1654 = vpack.c.b16 %v1620, %v1618
        %v1655 = vpack.c.b16 %v1623, %v1621
        %v1656 = vpack.c.b16 %v1624, %v1622
        %1689 = vmatprep.subr.bf16.mxu0 %v1626
        %1690 = vmatpush1.bf16.msra.mxu0 %v1625
        %1691 = vmatprep.subr.bf16.mxu0 %v1628
        %1692 = vmatpush1.bf16.msra.mxu0 %v1627
        %1693 = vmatprep.subr.bf16.mxu0 %v1630
        %1694 = vmatpush1.bf16.msra.mxu0 %v1629
        %1695 = vmatprep.subr.bf16.mxu0 %v1632
        %1696 = vmatpush1.bf16.msra.mxu0 %v1631
        %1697 = vmatprep.subr.bf16.mxu0 %v1634
        %1698 = vmatpush1.bf16.msra.mxu0 %v1633
        %1699 = vmatprep.subr.bf16.mxu0 %v1636
        %1700 = vmatpush1.bf16.msra.mxu0 %v1635
        %1701 = vmatprep.subr.bf16.mxu0 %v1638
        %1702 = vmatpush1.bf16.msra.mxu0 %v1637
        %1703 = vmatprep.subr.bf16.mxu0 %v1640
        %1704 = vmatpush1.bf16.msra.mxu0 %v1639
        %1705 = vmatprep.subr.bf16.mxu0 %v1642
        %1706 = vmatpush1.bf16.msra.mxu0 %v1641
        %1707 = vmatprep.subr.bf16.mxu0 %v1644
        %1708 = vmatpush1.bf16.msra.mxu0 %v1643
        %1709 = vmatprep.subr.bf16.mxu0 %v1646
        %1710 = vmatpush1.bf16.msra.mxu0 %v1645
        %1711 = vmatprep.subr.bf16.mxu0 %v1648
        %1712 = vmatpush1.bf16.msra.mxu0 %v1647
        %1713 = vmatprep.subr.bf16.mxu0 %v1650
        %1714 = vmatpush1.bf16.msra.mxu0 %v1649
        %1715 = vmatprep.subr.bf16.mxu0 %v1652
        %1716 = vmatpush1.bf16.msra.mxu0 %v1651
        %1717 = vmatprep.subr.bf16.mxu0 %v1654
        %1718 = vmatpush1.bf16.msra.mxu0 %v1653
        %1719 = vmatprep.subr.bf16.mxu0 %v1656
        %1720 = vmatpush1.bf16.msra.mxu0 %v1655
        %1721 = vmatprep.mubr.bf16.mxu0 %v1422
        %1722 = vmatmul.mubr.bf16.gmra.mrb[0].mxu0 %v1421
        %v1723 = vpop.f32.mrb[0].mxu0
        %v1724 = vadd.f32 %v1522, %v1723
        %v1725 = vpop.f32.mrb[0].mxu0
        %v1726 = vadd.f32 %v1526, %v1725
        %v1727 = vpop.f32.mrb[0].mxu0
        %v1728 = vadd.f32 %v1522, %v1727
        %v1729 = vpop.f32.mrb[0].mxu0
        %v1730 = vadd.f32 %v1526, %v1729
        %1731 = vmatprep.mubr.bf16.mxu0 %v1424
        %1732 = vmatmul.mubr.bf16.gmra.mrb[0].mxu0 %v1423
        %v1733 = vpop.f32.mrb[0].mxu0
        %v1734 = vadd.f32 %v1522, %v1733
        %v1735 = vpop.f32.mrb[0].mxu0
        %v1736 = vadd.f32 %v1526, %v1735
        %v1737 = vpop.f32.mrb[0].mxu0
        %v1738 = vadd.f32 %v1522, %v1737
        %v1739 = vpop.f32.mrb[0].mxu0
        %v1740 = vadd.f32 %v1526, %v1739
        %1741 = vmatprep.mubr.bf16.mxu0 %v1426
        %1742 = vmatmul.mubr.bf16.gmra.mrb[0].mxu0 %v1425
        %v1743 = vpop.f32.mrb[0].mxu0
        %v1744 = vadd.f32 %v1522, %v1743
        %v1745 = vpop.f32.mrb[0].mxu0
        %v1746 = vadd.f32 %v1526, %v1745
        %v1747 = vpop.f32.mrb[0].mxu0
        %v1748 = vadd.f32 %v1522, %v1747
        %v1749 = vpop.f32.mrb[0].mxu0
        %v1750 = vadd.f32 %v1526, %v1749
        %1751 = vmatprep.mubr.bf16.mxu0 %v1428
        %1752 = vmatmul.mubr.bf16.gmra.mrb[0].mxu0 %v1427
        %v1753 = vpop.f32.mrb[0].mxu0
        %v1754 = vadd.f32 %v1522, %v1753
        %v1755 = vpop.f32.mrb[0].mxu0
        %v1756 = vadd.f32 %v1526, %v1755
        %v1757 = vpop.f32.mrb[0].mxu0
        %v1758 = vadd.f32 %v1522, %v1757
        %v1759 = vpop.f32.mrb[0].mxu0
        %v1760 = vadd.f32 %v1526, %v1759
        %1761 = vmatprep.mubr.bf16.mxu0 %v1430
        %1762 = vmatmul.mubr.bf16.gmra.mrb[0].mxu0 %v1429
        %v1763 = vpop.f32.mrb[0].mxu0
        %v1764 = vadd.f32 %v1522, %v1763
        %v1765 = vpop.f32.mrb[0].mxu0
        %v1766 = vadd.f32 %v1526, %v1765
        %v1767 = vpop.f32.mrb[0].mxu0
        %v1768 = vadd.f32 %v1522, %v1767
        %v1769 = vpop.f32.mrb[0].mxu0
        %v1770 = vadd.f32 %v1526, %v1769
        %1771 = vmatprep.mubr.bf16.mxu0 %v1432
        %1772 = vmatmul.mubr.bf16.gmra.mrb[0].mxu0 %v1431
        %v1773 = vpop.f32.mrb[0].mxu0
        %v1774 = vadd.f32 %v1522, %v1773
        %v1775 = vpop.f32.mrb[0].mxu0
        %v1776 = vadd.f32 %v1526, %v1775
        %v1777 = vpop.f32.mrb[0].mxu0
        %v1778 = vadd.f32 %v1522, %v1777
        %v1779 = vpop.f32.mrb[0].mxu0
        %v1780 = vadd.f32 %v1526, %v1779
        %1781 = vmatprep.mubr.bf16.mxu0 %v1434
        %1782 = vmatmul.mubr.bf16.gmra.mrb[0].mxu0 %v1433
        %v1783 = vpop.f32.mrb[0].mxu0
        %v1784 = vadd.f32 %v1522, %v1783
        %v1785 = vpop.f32.mrb[0].mxu0
        %v1786 = vadd.f32 %v1526, %v1785
        %v1787 = vpop.f32.mrb[0].mxu0
        %v1788 = vadd.f32 %v1522, %v1787
        %v1789 = vpop.f32.mrb[0].mxu0
        %v1790 = vadd.f32 %v1526, %v1789
        %1791 = vmatprep.mubr.bf16.mxu0 %v1436
        %1792 = vmatmul.mubr.bf16.gmra.mrb[0].mxu0 %v1435
        %v1793 = vpop.f32.mrb[0].mxu0
        %v1794 = vadd.f32 %v1522, %v1793
        %v1795 = vpop.f32.mrb[0].mxu0
        %v1796 = vadd.f32 %v1526, %v1795
        %v1797 = vpop.f32.mrb[0].mxu0
        %v1798 = vadd.f32 %v1522, %v1797
        %v1799 = vpop.f32.mrb[0].mxu0
        %v1800 = vadd.f32 %v1526, %v1799
        %1801 = vmatprep.mubr.bf16.mxu0 %v1438
        %1802 = vmatmul.mubr.bf16.gmra.mrb[0].mxu0 %v1437
        %v1803 = vpop.f32.mrb[0].mxu0
        %v1804 = vadd.f32 %v1522, %v1803
        %v1805 = vpop.f32.mrb[0].mxu0
        %v1806 = vadd.f32 %v1526, %v1805
        %v1807 = vpop.f32.mrb[0].mxu0
        %v1808 = vadd.f32 %v1522, %v1807
        %v1809 = vpop.f32.mrb[0].mxu0
        %v1810 = vadd.f32 %v1526, %v1809
        %1811 = vmatprep.mubr.bf16.mxu0 %v1440
        %1812 = vmatmul.mubr.bf16.gmra.mrb[0].mxu0 %v1439
        %v1813 = vpop.f32.mrb[0].mxu0
        %v1814 = vadd.f32 %v1522, %v1813
        %v1815 = vpop.f32.mrb[0].mxu0
        %v1816 = vadd.f32 %v1526, %v1815
        %v1817 = vpop.f32.mrb[0].mxu0
        %v1818 = vadd.f32 %v1522, %v1817
        %v1819 = vpop.f32.mrb[0].mxu0
        %v1820 = vadd.f32 %v1526, %v1819
        %1821 = vmatprep.mubr.bf16.mxu0 %v1442
        %1822 = vmatmul.mubr.bf16.gmra.mrb[0].mxu0 %v1441
        %v1823 = vpop.f32.mrb[0].mxu0
        %v1824 = vadd.f32 %v1522, %v1823
        %v1825 = vpop.f32.mrb[0].mxu0
        %v1826 = vadd.f32 %v1526, %v1825
        %v1827 = vpop.f32.mrb[0].mxu0
        %v1828 = vadd.f32 %v1522, %v1827
        %v1829 = vpop.f32.mrb[0].mxu0
        %v1830 = vadd.f32 %v1526, %v1829
        %1831 = vmatprep.mubr.bf16.mxu0 %v1444
        %1832 = vmatmul.mubr.bf16.gmra.mrb[0].mxu0 %v1443
        %v1833 = vpop.f32.mrb[0].mxu0
        %v1834 = vadd.f32 %v1522, %v1833
        %v1835 = vpop.f32.mrb[0].mxu0
        %v1836 = vadd.f32 %v1526, %v1835
        %v1837 = vpop.f32.mrb[0].mxu0
        %v1838 = vadd.f32 %v1522, %v1837
        %v1839 = vpop.f32.mrb[0].mxu0
        %v1840 = vadd.f32 %v1526, %v1839
        %1841 = vmatprep.mubr.bf16.mxu0 %v1446
        %1842 = vmatmul.mubr.bf16.gmra.mrb[0].mxu0 %v1445
        %v1843 = vpop.f32.mrb[0].mxu0
        %v1844 = vadd.f32 %v1522, %v1843
        %v1845 = vpop.f32.mrb[0].mxu0
        %v1846 = vadd.f32 %v1526, %v1845
        %v1847 = vpop.f32.mrb[0].mxu0
        %v1848 = vadd.f32 %v1522, %v1847
        %v1849 = vpop.f32.mrb[0].mxu0
        %v1850 = vadd.f32 %v1526, %v1849
        %1851 = vmatprep.mubr.bf16.mxu0 %v1448
        %1852 = vmatmul.mubr.bf16.gmra.mrb[0].mxu0 %v1447
        %v1853 = vpop.f32.mrb[0].mxu0
        %v1854 = vadd.f32 %v1522, %v1853
        %v1855 = vpop.f32.mrb[0].mxu0
        %v1856 = vadd.f32 %v1526, %v1855
        %v1857 = vpop.f32.mrb[0].mxu0
        %v1858 = vadd.f32 %v1522, %v1857
        %v1859 = vpop.f32.mrb[0].mxu0
        %v1860 = vadd.f32 %v1526, %v1859
        %1861 = vmatprep.mubr.bf16.mxu0 %v1450
        %1862 = vmatmul.mubr.bf16.gmra.mrb[0].mxu0 %v1449
        %v1863 = vpop.f32.mrb[0].mxu0
        %v1864 = vadd.f32 %v1522, %v1863
        %v1865 = vpop.f32.mrb[0].mxu0
        %v1866 = vadd.f32 %v1526, %v1865
        %v1867 = vpop.f32.mrb[0].mxu0
        %v1868 = vadd.f32 %v1522, %v1867
        %v1869 = vpop.f32.mrb[0].mxu0
        %v1870 = vadd.f32 %v1526, %v1869
        %1871 = vmatprep.mubr.bf16.mxu0 %v1452
        %1872 = vmatmul.mubr.bf16.gmra.mrb[0].mxu0 %v1451
        %v1873 = vpop.f32.mrb[0].mxu0
        %v1874 = vadd.f32 %v1522, %v1873
        %v1875 = vpop.f32.mrb[0].mxu0
        %v1876 = vadd.f32 %v1526, %v1875
        %v1877 = vpop.f32.mrb[0].mxu0
        %v1878 = vadd.f32 %v1522, %v1877
        %v1879 = vpop.f32.mrb[0].mxu0
        %v1880 = vadd.f32 %v1526, %v1879
        %1881 = vmatprep.mubr.bf16.mxu0 %v1454
        %1882 = vmatmul.mubr.bf16.gmra.mrb[0].mxu0 %v1453
        %v1883 = vpop.f32.mrb[0].mxu0
        %v1884 = vadd.f32 %v1522, %v1883
        %v1885 = vpop.f32.mrb[0].mxu0
        %v1886 = vadd.f32 %v1526, %v1885
        %v1887 = vpop.f32.mrb[0].mxu0
        %v1888 = vadd.f32 %v1522, %v1887
        %v1889 = vpop.f32.mrb[0].mxu0
        %v1890 = vadd.f32 %v1526, %v1889
        %1891 = vmatprep.mubr.bf16.mxu0 %v1456
        %1892 = vmatmul.mubr.bf16.gmra.mrb[0].mxu0 %v1455
        %v1893 = vpop.f32.mrb[0].mxu0
        %v1894 = vadd.f32 %v1522, %v1893
        %v1895 = vpop.f32.mrb[0].mxu0
        %v1896 = vadd.f32 %v1526, %v1895
        %v1897 = vpop.f32.mrb[0].mxu0
        %v1898 = vadd.f32 %v1522, %v1897
        %v1899 = vpop.f32.mrb[0].mxu0
        %v1900 = vadd.f32 %v1526, %v1899
        %1901 = vmatprep.mubr.bf16.mxu0 %v1458
        %1902 = vmatmul.mubr.bf16.gmra.mrb[0].mxu0 %v1457
        %v1903 = vpop.f32.mrb[0].mxu0
        %v1904 = vadd.f32 %v1522, %v1903
        %v1905 = vpop.f32.mrb[0].mxu0
        %v1906 = vadd.f32 %v1526, %v1905
        %v1907 = vpop.f32.mrb[0].mxu0
        %v1908 = vadd.f32 %v1522, %v1907
        %v1909 = vpop.f32.mrb[0].mxu0
        %v1910 = vadd.f32 %v1526, %v1909
        %1911 = vmatprep.mubr.bf16.mxu0 %v1460
        %1912 = vmatmul.mubr.bf16.gmra.mrb[0].mxu0 %v1459
        %v1913 = vpop.f32.mrb[0].mxu0
        %v1914 = vadd.f32 %v1522, %v1913
        %v1915 = vpop.f32.mrb[0].mxu0
        %v1916 = vadd.f32 %v1526, %v1915
        %v1917 = vpop.f32.mrb[0].mxu0
        %v1918 = vadd.f32 %v1522, %v1917
        %v1919 = vpop.f32.mrb[0].mxu0
        %v1920 = vadd.f32 %v1526, %v1919
        %1921 = vmatprep.mubr.bf16.mxu0 %v1462
        %1922 = vmatmul.mubr.bf16.gmra.mrb[0].mxu0 %v1461
        %v1923 = vpop.f32.mrb[0].mxu0
        %v1924 = vadd.f32 %v1522, %v1923
        %v1925 = vpop.f32.mrb[0].mxu0
        %v1926 = vadd.f32 %v1526, %v1925
        %v1927 = vpop.f32.mrb[0].mxu0
        %v1928 = vadd.f32 %v1522, %v1927
        %v1929 = vpop.f32.mrb[0].mxu0
        %v1930 = vadd.f32 %v1526, %v1929
        %1931 = vmatprep.mubr.bf16.mxu0 %v1464
        %1932 = vmatmul.mubr.bf16.gmra.mrb[0].mxu0 %v1463
        %v1933 = vpop.f32.mrb[0].mxu0
        %v1934 = vadd.f32 %v1522, %v1933
        %v1935 = vpop.f32.mrb[0].mxu0
        %v1936 = vadd.f32 %v1526, %v1935
        %v1937 = vpop.f32.mrb[0].mxu0
        %v1938 = vadd.f32 %v1522, %v1937
        %v1939 = vpop.f32.mrb[0].mxu0
        %v1940 = vadd.f32 %v1526, %v1939
        %1941 = vmatprep.mubr.bf16.mxu0 %v1466
        %1942 = vmatmul.mubr.bf16.gmra.mrb[0].mxu0 %v1465
        %v1943 = vpop.f32.mrb[0].mxu0
        %v1944 = vadd.f32 %v1522, %v1943
        %v1945 = vpop.f32.mrb[0].mxu0
        %v1946 = vadd.f32 %v1526, %v1945
        %v1947 = vpop.f32.mrb[0].mxu0
        %v1948 = vadd.f32 %v1522, %v1947
        %v1949 = vpop.f32.mrb[0].mxu0
        %v1950 = vadd.f32 %v1526, %v1949
        %1951 = vmatprep.mubr.bf16.mxu0 %v1468
        %1952 = vmatmul.mubr.bf16.gmra.mrb[0].mxu0 %v1467
        %v1953 = vpop.f32.mrb[0].mxu0
        %v1954 = vadd.f32 %v1522, %v1953
        %v1955 = vpop.f32.mrb[0].mxu0
        %v1956 = vadd.f32 %v1526, %v1955
        %v1957 = vpop.f32.mrb[0].mxu0
        %v1958 = vadd.f32 %v1522, %v1957
        %v1959 = vpop.f32.mrb[0].mxu0
        %v1960 = vadd.f32 %v1526, %v1959
        %1961 = vmatprep.mubr.bf16.mxu0 %v1470
        %1962 = vmatmul.mubr.bf16.gmra.mrb[0].mxu0 %v1469
        %v1963 = vpop.f32.mrb[0].mxu0
        %v1964 = vadd.f32 %v1522, %v1963
        %v1965 = vpop.f32.mrb[0].mxu0
        %v1966 = vadd.f32 %v1526, %v1965
        %v1967 = vpop.f32.mrb[0].mxu0
        %v1968 = vadd.f32 %v1522, %v1967
        %v1969 = vpop.f32.mrb[0].mxu0
        %v1970 = vadd.f32 %v1526, %v1969
        %1971 = vmatprep.mubr.bf16.mxu0 %v1472
        %1972 = vmatmul.mubr.bf16.gmra.mrb[0].mxu0 %v1471
        %v1973 = vpop.f32.mrb[0].mxu0
        %v1974 = vadd.f32 %v1522, %v1973
        %v1975 = vpop.f32.mrb[0].mxu0
        %v1976 = vadd.f32 %v1526, %v1975
        %v1977 = vpop.f32.mrb[0].mxu0
        %v1978 = vadd.f32 %v1522, %v1977
        %v1979 = vpop.f32.mrb[0].mxu0
        %v1980 = vadd.f32 %v1526, %v1979
        %1981 = vmatprep.mubr.bf16.mxu0 %v1474
        %1982 = vmatmul.mubr.bf16.gmra.mrb[0].mxu0 %v1473
        %v1983 = vpop.f32.mrb[0].mxu0
        %v1984 = vadd.f32 %v1522, %v1983
        %v1985 = vpop.f32.mrb[0].mxu0
        %v1986 = vadd.f32 %v1526, %v1985
        %v1987 = vpop.f32.mrb[0].mxu0
        %v1988 = vadd.f32 %v1522, %v1987
        %v1989 = vpop.f32.mrb[0].mxu0
        %v1990 = vadd.f32 %v1526, %v1989
        %1991 = vmatprep.mubr.bf16.mxu0 %v1476
        %1992 = vmatmul.mubr.bf16.gmra.mrb[0].mxu0 %v1475
        %v1993 = vpop.f32.mrb[0].mxu0
        %v1994 = vadd.f32 %v1522, %v1993
        %v1995 = vpop.f32.mrb[0].mxu0
        %v1996 = vadd.f32 %v1526, %v1995
        %v1997 = vpop.f32.mrb[0].mxu0
        %v1998 = vadd.f32 %v1522, %v1997
        %v1999 = vpop.f32.mrb[0].mxu0
        %v2000 = vadd.f32 %v1526, %v1999
        %2001 = vmatprep.mubr.bf16.mxu0 %v1478
        %2002 = vmatmul.mubr.bf16.gmra.mrb[0].mxu0 %v1477
        %v2003 = vpop.f32.mrb[0].mxu0
        %v2004 = vadd.f32 %v1522, %v2003
        %v2005 = vpop.f32.mrb[0].mxu0
        %v2006 = vadd.f32 %v1526, %v2005
        %v2007 = vpop.f32.mrb[0].mxu0
        %v2008 = vadd.f32 %v1522, %v2007
        %v2009 = vpop.f32.mrb[0].mxu0
        %v2010 = vadd.f32 %v1526, %v2009
        %2011 = vmatprep.mubr.bf16.mxu0 %v1480
        %2012 = vmatmul.mubr.bf16.gmra.mrb[0].mxu0 %v1479
        %v2013 = vpop.f32.mrb[0].mxu0
        %v2014 = vadd.f32 %v1522, %v2013
        %v2015 = vpop.f32.mrb[0].mxu0
        %v2016 = vadd.f32 %v1526, %v2015
        %v2017 = vpop.f32.mrb[0].mxu0
        %v2018 = vadd.f32 %v1522, %v2017
        %v2019 = vpop.f32.mrb[0].mxu0
        %v2020 = vadd.f32 %v1526, %v2019
        %2021 = vmatprep.mubr.bf16.mxu0 %v1482
        %2022 = vmatmul.mubr.bf16.gmra.mrb[0].mxu0 %v1481
        %v2023 = vpop.f32.mrb[0].mxu0
        %v2024 = vadd.f32 %v1522, %v2023
        %v2025 = vpop.f32.mrb[0].mxu0
        %v2026 = vadd.f32 %v1526, %v2025
        %v2027 = vpop.f32.mrb[0].mxu0
        %v2028 = vadd.f32 %v1522, %v2027
        %v2029 = vpop.f32.mrb[0].mxu0
        %v2030 = vadd.f32 %v1526, %v2029
        %2031 = vmatprep.mubr.bf16.mxu0 %v1484
        %2032 = vmatmul.mubr.bf16.gmra.mrb[0].mxu0 %v1483
        %v2033 = vpop.f32.mrb[0].mxu0
        %v2034 = vadd.f32 %v1522, %v2033
        %v2035 = vpop.f32.mrb[0].mxu0
        %v2036 = vadd.f32 %v1526, %v2035
        %v2037 = vpop.f32.mrb[0].mxu0
        %v2038 = vadd.f32 %v1522, %v2037
        %v2039 = vpop.f32.mrb[0].mxu0
        %v2040 = vadd.f32 %v1526, %v2039
        %2041 = vdwg.mxu0
        %v2042 = vmax.f32 %v1724, 0.0
        %v2043 = vmax.f32 %v1726, 0.0
        %v2044 = vmax.f32 %v1728, 0.0
        %v2045 = vmax.f32 %v1730, 0.0
        %v2046 = vmax.f32 %v1734, 0.0
        %v2047 = vmax.f32 %v1736, 0.0
        %v2048 = vmax.f32 %v1738, 0.0
        %v2049 = vmax.f32 %v1740, 0.0
        %v2050 = vmax.f32 %v1744, 0.0
        %v2051 = vmax.f32 %v1746, 0.0
        %v2052 = vmax.f32 %v1748, 0.0
        %v2053 = vmax.f32 %v1750, 0.0
        %v2054 = vmax.f32 %v1754, 0.0
        %v2055 = vmax.f32 %v1756, 0.0
        %v2056 = vmax.f32 %v1758, 0.0
        %v2057 = vmax.f32 %v1760, 0.0
        %v2058 = vmax.f32 %v1764, 0.0
        %v2059 = vmax.f32 %v1766, 0.0
        %v2060 = vmax.f32 %v1768, 0.0
        %v2061 = vmax.f32 %v1770, 0.0
        %v2062 = vmax.f32 %v1774, 0.0
        %v2063 = vmax.f32 %v1776, 0.0
        %v2064 = vmax.f32 %v1778, 0.0
        %v2065 = vmax.f32 %v1780, 0.0
        %v2066 = vmax.f32 %v1784, 0.0
        %v2067 = vmax.f32 %v1786, 0.0
        %v2068 = vmax.f32 %v1788, 0.0
        %v2069 = vmax.f32 %v1790, 0.0
        %v2070 = vmax.f32 %v1794, 0.0
        %v2071 = vmax.f32 %v1796, 0.0
        %v2072 = vmax.f32 %v1798, 0.0
        %v2073 = vmax.f32 %v1800, 0.0
        %v2074 = vmax.f32 %v1804, 0.0
        %v2075 = vmax.f32 %v1806, 0.0
        %v2076 = vmax.f32 %v1808, 0.0
        %v2077 = vmax.f32 %v1810, 0.0
        %v2078 = vmax.f32 %v1814, 0.0
        %v2079 = vmax.f32 %v1816, 0.0
        %v2080 = vmax.f32 %v1818, 0.0
        %v2081 = vmax.f32 %v1820, 0.0
        %v2082 = vmax.f32 %v1824, 0.0
        %v2083 = vmax.f32 %v1826, 0.0
        %v2084 = vmax.f32 %v1828, 0.0
        %v2085 = vmax.f32 %v1830, 0.0
        %v2086 = vmax.f32 %v1834, 0.0
        %v2087 = vmax.f32 %v1836, 0.0
        %v2088 = vmax.f32 %v1838, 0.0
        %v2089 = vmax.f32 %v1840, 0.0
        %v2090 = vmax.f32 %v1844, 0.0
        %v2091 = vmax.f32 %v1846, 0.0
        %v2092 = vmax.f32 %v1848, 0.0
        %v2093 = vmax.f32 %v1850, 0.0
        %v2094 = vmax.f32 %v1854, 0.0
        %v2095 = vmax.f32 %v1856, 0.0
        %v2096 = vmax.f32 %v1858, 0.0
        %v2097 = vmax.f32 %v1860, 0.0
        %v2098 = vmax.f32 %v1864, 0.0
        %v2099 = vmax.f32 %v1866, 0.0
        %v2100 = vmax.f32 %v1868, 0.0
        %v2101 = vmax.f32 %v1870, 0.0
        %v2102 = vmax.f32 %v1874, 0.0
        %v2103 = vmax.f32 %v1876, 0.0
        %v2104 = vmax.f32 %v1878, 0.0
        %v2105 = vmax.f32 %v1880, 0.0
        %v2106 = vmax.f32 %v1884, 0.0
        %v2107 = vmax.f32 %v1886, 0.0
        %v2108 = vmax.f32 %v1888, 0.0
        %v2109 = vmax.f32 %v1890, 0.0
        %v2110 = vmax.f32 %v1894, 0.0
        %v2111 = vmax.f32 %v1896, 0.0
        %v2112 = vmax.f32 %v1898, 0.0
        %v2113 = vmax.f32 %v1900, 0.0
        %v2114 = vmax.f32 %v1904, 0.0
        %v2115 = vmax.f32 %v1906, 0.0
        %v2116 = vmax.f32 %v1908, 0.0
        %v2117 = vmax.f32 %v1910, 0.0
        %v2118 = vmax.f32 %v1914, 0.0
        %v2119 = vmax.f32 %v1916, 0.0
        %v2120 = vmax.f32 %v1918, 0.0
        %v2121 = vmax.f32 %v1920, 0.0
        %v2122 = vmax.f32 %v1924, 0.0
        %v2123 = vmax.f32 %v1926, 0.0
        %v2124 = vmax.f32 %v1928, 0.0
        %v2125 = vmax.f32 %v1930, 0.0
        %v2126 = vmax.f32 %v1934, 0.0
        %v2127 = vmax.f32 %v1936, 0.0
        %v2128 = vmax.f32 %v1938, 0.0
        %v2129 = vmax.f32 %v1940, 0.0
        %v2130 = vmax.f32 %v1944, 0.0
        %v2131 = vmax.f32 %v1946, 0.0
        %v2132 = vmax.f32 %v1948, 0.0
        %v2133 = vmax.f32 %v1950, 0.0
        %v2134 = vmax.f32 %v1954, 0.0
        %v2135 = vmax.f32 %v1956, 0.0
        %v2136 = vmax.f32 %v1958, 0.0
        %v2137 = vmax.f32 %v1960, 0.0
        %v2138 = vmax.f32 %v1964, 0.0
        %v2139 = vmax.f32 %v1966, 0.0
        %v2140 = vmax.f32 %v1968, 0.0
        %v2141 = vmax.f32 %v1970, 0.0
        %v2142 = vmax.f32 %v1974, 0.0
        %v2143 = vmax.f32 %v1976, 0.0
        %v2144 = vmax.f32 %v1978, 0.0
        %v2145 = vmax.f32 %v1980, 0.0
        %v2146 = vmax.f32 %v1984, 0.0
        %v2147 = vmax.f32 %v1986, 0.0
        %v2148 = vmax.f32 %v1988, 0.0
        %v2149 = vmax.f32 %v1990, 0.0
        %v2150 = vmax.f32 %v1994, 0.0
        %v2151 = vmax.f32 %v1996, 0.0
        %v2152 = vmax.f32 %v1998, 0.0
        %v2153 = vmax.f32 %v2000, 0.0
        %v2154 = vmax.f32 %v2004, 0.0
        %v2155 = vmax.f32 %v2006, 0.0
        %v2156 = vmax.f32 %v2008, 0.0
        %v2157 = vmax.f32 %v2010, 0.0
        %v2158 = vmax.f32 %v2014, 0.0
        %v2159 = vmax.f32 %v2016, 0.0
        %v2160 = vmax.f32 %v2018, 0.0
        %v2161 = vmax.f32 %v2020, 0.0
        %v2162 = vmax.f32 %v2024, 0.0
        %v2163 = vmax.f32 %v2026, 0.0
        %v2164 = vmax.f32 %v2028, 0.0
        %v2165 = vmax.f32 %v2030, 0.0
        %v2166 = vmax.f32 %v2034, 0.0
        %v2167 = vmax.f32 %v2036, 0.0
        %v2168 = vmax.f32 %v2038, 0.0
        %v2169 = vmax.f32 %v2040, 0.0
        %v2170 = vpack.c.bf16 %v2044, %v2042
        %v2171 = vpack.c.bf16 %v2045, %v2043
        %v2172 = vpack.c.bf16 %v2048, %v2046
        %v2173 = vpack.c.bf16 %v2049, %v2047
        %v2174 = vpack.c.bf16 %v2052, %v2050
        %v2175 = vpack.c.bf16 %v2053, %v2051
        %v2176 = vpack.c.bf16 %v2056, %v2054
        %v2177 = vpack.c.bf16 %v2057, %v2055
        %v2178 = vpack.c.bf16 %v2060, %v2058
        %v2179 = vpack.c.bf16 %v2061, %v2059
        %v2180 = vpack.c.bf16 %v2064, %v2062
        %v2181 = vpack.c.bf16 %v2065, %v2063
        %v2182 = vpack.c.bf16 %v2068, %v2066
        %v2183 = vpack.c.bf16 %v2069, %v2067
        %v2184 = vpack.c.bf16 %v2072, %v2070
        %v2185 = vpack.c.bf16 %v2073, %v2071
        %v2186 = vpack.c.bf16 %v2076, %v2074
        %v2187 = vpack.c.bf16 %v2077, %v2075
        %v2188 = vpack.c.bf16 %v2080, %v2078
        %v2189 = vpack.c.bf16 %v2081, %v2079
        %v2190 = vpack.c.bf16 %v2084, %v2082
        %v2191 = vpack.c.bf16 %v2085, %v2083
        %v2192 = vpack.c.bf16 %v2088, %v2086
        %v2193 = vpack.c.bf16 %v2089, %v2087
        %v2194 = vpack.c.bf16 %v2092, %v2090
        %v2195 = vpack.c.bf16 %v2093, %v2091
        %v2196 = vpack.c.bf16 %v2096, %v2094
        %v2197 = vpack.c.bf16 %v2097, %v2095
        %v2198 = vpack.c.bf16 %v2100, %v2098
        %v2199 = vpack.c.bf16 %v2101, %v2099
        %v2200 = vpack.c.bf16 %v2104, %v2102
        %v2201 = vpack.c.bf16 %v2105, %v2103
        %v2202 = vpack.c.bf16 %v2108, %v2106
        %v2203 = vpack.c.bf16 %v2109, %v2107
        %v2204 = vpack.c.bf16 %v2112, %v2110
        %v2205 = vpack.c.bf16 %v2113, %v2111
        %v2206 = vpack.c.bf16 %v2116, %v2114
        %v2207 = vpack.c.bf16 %v2117, %v2115
        %v2208 = vpack.c.bf16 %v2120, %v2118
        %v2209 = vpack.c.bf16 %v2121, %v2119
        %v2210 = vpack.c.bf16 %v2124, %v2122
        %v2211 = vpack.c.bf16 %v2125, %v2123
        %v2212 = vpack.c.bf16 %v2128, %v2126
        %v2213 = vpack.c.bf16 %v2129, %v2127
        %v2214 = vpack.c.bf16 %v2132, %v2130
        %v2215 = vpack.c.bf16 %v2133, %v2131
        %v2216 = vpack.c.bf16 %v2136, %v2134
        %v2217 = vpack.c.bf16 %v2137, %v2135
        %v2218 = vpack.c.bf16 %v2140, %v2138
        %v2219 = vpack.c.bf16 %v2141, %v2139
        %v2220 = vpack.c.bf16 %v2144, %v2142
        %v2221 = vpack.c.bf16 %v2145, %v2143
        %v2222 = vpack.c.bf16 %v2148, %v2146
        %v2223 = vpack.c.bf16 %v2149, %v2147
        %v2224 = vpack.c.bf16 %v2152, %v2150
        %v2225 = vpack.c.bf16 %v2153, %v2151
        %v2226 = vpack.c.bf16 %v2156, %v2154
        %v2227 = vpack.c.bf16 %v2157, %v2155
        %v2228 = vpack.c.bf16 %v2160, %v2158
        %v2229 = vpack.c.bf16 %v2161, %v2159
        %v2230 = vpack.c.bf16 %v2164, %v2162
        %v2231 = vpack.c.bf16 %v2165, %v2163
        %v2232 = vpack.c.bf16 %v2168, %v2166
        %v2233 = vpack.c.bf16 %v2169, %v2167
        %v2234 = vld [vmem:[%s6] sm:$0xf]
        %v2235 = vld [vmem:[%s6 + $0x4] sm:$0xf]
        %v2236 = vld [vmem:[%s6 + $0x8] sm:$0xf]
        %v2237 = vld [vmem:[%s6 + $0xc] sm:$0xf]
        %v2238 = vld [vmem:[%s6 + $0x10] sm:$0xf]
        %v2239 = vld [vmem:[%s6 + $0x14] sm:$0xf]
        %v2240 = vld [vmem:[%s6 + $0x18] sm:$0xf]
        %v2241 = vld [vmem:[%s6 + $0x1c] sm:$0xf]
        %v2242 = vld [vmem:[%s6 + $0x20] sm:$0xf]
        %v2243 = vld [vmem:[%s6 + $0x24] sm:$0xf]
        %v2244 = vld [vmem:[%s6 + $0x28] sm:$0xf]
        %v2245 = vld [vmem:[%s6 + $0x2c] sm:$0xf]
        %v2246 = vld [vmem:[%s6 + $0x30] sm:$0xf]
        %v2247 = vld [vmem:[%s6 + $0x34] sm:$0xf]
        %v2248 = vld [vmem:[%s6 + $0x38] sm:$0xf]
        %v2249 = vld [vmem:[%s6 + $0x3c] sm:$0xf]
        %v2250 = vld [vmem:[%s6 + $0x40] sm:$0xf]
        %v2251 = vld [vmem:[%s6 + $0x44] sm:$0xf]
        %v2252 = vld [vmem:[%s6 + $0x48] sm:$0xf]
        %v2253 = vld [vmem:[%s6 + $0x4c] sm:$0xf]
        %v2254 = vld [vmem:[%s6 + $0x50] sm:$0xf]
        %v2255 = vld [vmem:[%s6 + $0x54] sm:$0xf]
        %v2256 = vld [vmem:[%s6 + $0x58] sm:$0xf]
        %v2257 = vld [vmem:[%s6 + $0x5c] sm:$0xf]
        %v2258 = vld [vmem:[%s6 + $0x60] sm:$0xf]
        %v2259 = vld [vmem:[%s6 + $0x64] sm:$0xf]
        %v2260 = vld [vmem:[%s6 + $0x68] sm:$0xf]
        %v2261 = vld [vmem:[%s6 + $0x6c] sm:$0xf]
        %v2262 = vld [vmem:[%s6 + $0x70] sm:$0xf]
        %v2263 = vld [vmem:[%s6 + $0x74] sm:$0xf]
        %v2264 = vld [vmem:[%s6 + $0x78] sm:$0xf]
        %v2265 = vld [vmem:[%s6 + $0x7c] sm:$0xf]
        %v2266 = vld [vmem:[%s7] sm:$0x1]
        %v2268 = vlaneseq
        %v2269 = vshrl.u32 %v2268, 7
        %v2270 = vsub.s32 0, %v2269
        %v2271 = vrot.slane %v2266, %v2270
        %v2305 = vunpack.c.l.b16 %v2234
        %v2306 = vunpack.c.l.b16 %v2235
        %v2307 = vunpack.c.l.b16 %v2236
        %v2308 = vunpack.c.l.b16 %v2237
        %v2309 = vunpack.c.l.b16 %v2238
        %v2310 = vunpack.c.l.b16 %v2239
        %v2311 = vunpack.c.l.b16 %v2240
        %v2312 = vunpack.c.l.b16 %v2241
        %v2313 = vunpack.c.l.b16 %v2242
        %v2314 = vunpack.c.l.b16 %v2243
        %v2315 = vunpack.c.l.b16 %v2244
        %v2316 = vunpack.c.l.b16 %v2245
        %v2317 = vunpack.c.l.b16 %v2246
        %v2318 = vunpack.c.l.b16 %v2247
        %v2319 = vunpack.c.l.b16 %v2248
        %v2320 = vunpack.c.l.b16 %v2249
        %v2321 = vunpack.c.l.b16 %v2250
        %v2322 = vunpack.c.l.b16 %v2251
        %v2323 = vunpack.c.l.b16 %v2252
        %v2324 = vunpack.c.l.b16 %v2253
        %v2325 = vunpack.c.l.b16 %v2254
        %v2326 = vunpack.c.l.b16 %v2255
        %v2327 = vunpack.c.l.b16 %v2256
        %v2328 = vunpack.c.l.b16 %v2257
        %v2329 = vunpack.c.l.b16 %v2258
        %v2330 = vunpack.c.l.b16 %v2259
        %v2331 = vunpack.c.l.b16 %v2260
        %v2332 = vunpack.c.l.b16 %v2261
        %v2333 = vunpack.c.l.b16 %v2262
        %v2334 = vunpack.c.l.b16 %v2263
        %v2335 = vunpack.c.l.b16 %v2264
        %v2336 = vunpack.c.l.b16 %v2265
        %v2337 = vpack.c.b16 %v2306, %v2305
        %v2338 = vpack.c.b16 %v2308, %v2307
        %v2339 = vpack.c.b16 %v2310, %v2309
        %v2340 = vpack.c.b16 %v2312, %v2311
        %v2341 = vpack.c.b16 %v2314, %v2313
        %v2342 = vpack.c.b16 %v2316, %v2315
        %v2343 = vpack.c.b16 %v2318, %v2317
        %v2344 = vpack.c.b16 %v2320, %v2319
        %v2345 = vpack.c.b16 %v2322, %v2321
        %v2346 = vpack.c.b16 %v2324, %v2323
        %v2347 = vpack.c.b16 %v2326, %v2325
        %v2348 = vpack.c.b16 %v2328, %v2327
        %v2349 = vpack.c.b16 %v2330, %v2329
        %v2350 = vpack.c.b16 %v2332, %v2331
        %v2351 = vpack.c.b16 %v2334, %v2333
        %v2352 = vpack.c.b16 %v2336, %v2335
        %2369 = vmatprep.subr.bf16.mxu0 0
        %2370 = vmatpush1.bf16.msra.mxu0 %v2337
        %2371 = vmatprep.subr.bf16.mxu0 0
        %2372 = vmatpush1.bf16.msra.mxu0 %v2338
        %2373 = vmatprep.subr.bf16.mxu0 0
        %2374 = vmatpush1.bf16.msra.mxu0 %v2339
        %2375 = vmatprep.subr.bf16.mxu0 0
        %2376 = vmatpush1.bf16.msra.mxu0 %v2340
        %2377 = vmatprep.subr.bf16.mxu0 0
        %2378 = vmatpush1.bf16.msra.mxu0 %v2341
        %2379 = vmatprep.subr.bf16.mxu0 0
        %2380 = vmatpush1.bf16.msra.mxu0 %v2342
        %2381 = vmatprep.subr.bf16.mxu0 0
        %2382 = vmatpush1.bf16.msra.mxu0 %v2343
        %2383 = vmatprep.subr.bf16.mxu0 0
        %2384 = vmatpush1.bf16.msra.mxu0 %v2344
        %2385 = vmatprep.subr.bf16.mxu0 0
        %2386 = vmatpush1.bf16.msra.mxu0 %v2345
        %2387 = vmatprep.subr.bf16.mxu0 0
        %2388 = vmatpush1.bf16.msra.mxu0 %v2346
        %2389 = vmatprep.subr.bf16.mxu0 0
        %2390 = vmatpush1.bf16.msra.mxu0 %v2347
        %2391 = vmatprep.subr.bf16.mxu0 0
        %2392 = vmatpush1.bf16.msra.mxu0 %v2348
        %2393 = vmatprep.subr.bf16.mxu0 0
        %2394 = vmatpush1.bf16.msra.mxu0 %v2349
        %2395 = vmatprep.subr.bf16.mxu0 0
        %2396 = vmatpush1.bf16.msra.mxu0 %v2350
        %2397 = vmatprep.subr.bf16.mxu0 0
        %2398 = vmatpush1.bf16.msra.mxu0 %v2351
        %2399 = vmatprep.subr.bf16.mxu0 0
        %2400 = vmatpush1.bf16.msra.mxu0 %v2352
        %2401 = vmatprep.mubr.bf16.mxu0 %v2171
        %2402 = vmatmul.mubr.bf16.gmra.mrb[0].mxu0 %v2170
        %v2403 = vpop.f32.mrb[0].mxu0
        %v2404 = vadd.f32 %v2271, %v2403
        %v2405 = vpop.f32.mrb[0].mxu0
        %v2406 = vpop.f32.mrb[0].mxu0
        %v2407 = vadd.f32 %v2271, %v2406
        %v2408 = vpop.f32.mrb[0].mxu0
        %2409 = vmatprep.mubr.bf16.mxu0 %v2173
        %2410 = vmatmul.mubr.bf16.gmra.mrb[0].mxu0 %v2172
        %v2411 = vpop.f32.mrb[0].mxu0
        %v2412 = vadd.f32 %v2271, %v2411
        %v2413 = vpop.f32.mrb[0].mxu0
        %v2414 = vpop.f32.mrb[0].mxu0
        %v2415 = vadd.f32 %v2271, %v2414
        %v2416 = vpop.f32.mrb[0].mxu0
        %2417 = vmatprep.mubr.bf16.mxu0 %v2175
        %2418 = vmatmul.mubr.bf16.gmra.mrb[0].mxu0 %v2174
        %v2419 = vpop.f32.mrb[0].mxu0
        %v2420 = vadd.f32 %v2271, %v2419
        %v2421 = vpop.f32.mrb[0].mxu0
        %v2422 = vpop.f32.mrb[0].mxu0
        %v2423 = vadd.f32 %v2271, %v2422
        %v2424 = vpop.f32.mrb[0].mxu0
        %2425 = vmatprep.mubr.bf16.mxu0 %v2177
        %2426 = vmatmul.mubr.bf16.gmra.mrb[0].mxu0 %v2176
        %v2427 = vpop.f32.mrb[0].mxu0
        %v2428 = vadd.f32 %v2271, %v2427
        %v2429 = vpop.f32.mrb[0].mxu0
        %v2430 = vpop.f32.mrb[0].mxu0
        %v2431 = vadd.f32 %v2271, %v2430
        %v2432 = vpop.f32.mrb[0].mxu0
        %2433 = vmatprep.mubr.bf16.mxu0 %v2179
        %2434 = vmatmul.mubr.bf16.gmra.mrb[0].mxu0 %v2178
        %v2435 = vpop.f32.mrb[0].mxu0
        %v2436 = vadd.f32 %v2271, %v2435
        %v2437 = vpop.f32.mrb[0].mxu0
        %v2438 = vpop.f32.mrb[0].mxu0
        %v2439 = vadd.f32 %v2271, %v2438
        %v2440 = vpop.f32.mrb[0].mxu0
        %2441 = vmatprep.mubr.bf16.mxu0 %v2181
        %2442 = vmatmul.mubr.bf16.gmra.mrb[0].mxu0 %v2180
        %v2443 = vpop.f32.mrb[0].mxu0
        %v2444 = vadd.f32 %v2271, %v2443
        %v2445 = vpop.f32.mrb[0].mxu0
        %v2446 = vpop.f32.mrb[0].mxu0
        %v2447 = vadd.f32 %v2271, %v2446
        %v2448 = vpop.f32.mrb[0].mxu0
        %2449 = vmatprep.mubr.bf16.mxu0 %v2183
        %2450 = vmatmul.mubr.bf16.gmra.mrb[0].mxu0 %v2182
        %v2451 = vpop.f32.mrb[0].mxu0
        %v2452 = vadd.f32 %v2271, %v2451
        %v2453 = vpop.f32.mrb[0].mxu0
        %v2454 = vpop.f32.mrb[0].mxu0
        %v2455 = vadd.f32 %v2271, %v2454
        %v2456 = vpop.f32.mrb[0].mxu0
        %2457 = vmatprep.mubr.bf16.mxu0 %v2185
        %2458 = vmatmul.mubr.bf16.gmra.mrb[0].mxu0 %v2184
        %v2459 = vpop.f32.mrb[0].mxu0
        %v2460 = vadd.f32 %v2271, %v2459
        %v2461 = vpop.f32.mrb[0].mxu0
        %v2462 = vpop.f32.mrb[0].mxu0
        %v2463 = vadd.f32 %v2271, %v2462
        %v2464 = vpop.f32.mrb[0].mxu0
        %2465 = vmatprep.mubr.bf16.mxu0 %v2187
        %2466 = vmatmul.mubr.bf16.gmra.mrb[0].mxu0 %v2186
        %v2467 = vpop.f32.mrb[0].mxu0
        %v2468 = vadd.f32 %v2271, %v2467
        %v2469 = vpop.f32.mrb[0].mxu0
        %v2470 = vpop.f32.mrb[0].mxu0
        %v2471 = vadd.f32 %v2271, %v2470
        %v2472 = vpop.f32.mrb[0].mxu0
        %2473 = vmatprep.mubr.bf16.mxu0 %v2189
        %2474 = vmatmul.mubr.bf16.gmra.mrb[0].mxu0 %v2188
        %v2475 = vpop.f32.mrb[0].mxu0
        %v2476 = vadd.f32 %v2271, %v2475
        %v2477 = vpop.f32.mrb[0].mxu0
        %v2478 = vpop.f32.mrb[0].mxu0
        %v2479 = vadd.f32 %v2271, %v2478
        %v2480 = vpop.f32.mrb[0].mxu0
        %2481 = vmatprep.mubr.bf16.mxu0 %v2191
        %2482 = vmatmul.mubr.bf16.gmra.mrb[0].mxu0 %v2190
        %v2483 = vpop.f32.mrb[0].mxu0
        %v2484 = vadd.f32 %v2271, %v2483
        %v2485 = vpop.f32.mrb[0].mxu0
        %v2486 = vpop.f32.mrb[0].mxu0
        %v2487 = vadd.f32 %v2271, %v2486
        %v2488 = vpop.f32.mrb[0].mxu0
        %2489 = vmatprep.mubr.bf16.mxu0 %v2193
        %2490 = vmatmul.mubr.bf16.gmra.mrb[0].mxu0 %v2192
        %v2491 = vpop.f32.mrb[0].mxu0
        %v2492 = vadd.f32 %v2271, %v2491
        %v2493 = vpop.f32.mrb[0].mxu0
        %v2494 = vpop.f32.mrb[0].mxu0
        %v2495 = vadd.f32 %v2271, %v2494
        %v2496 = vpop.f32.mrb[0].mxu0
        %2497 = vmatprep.mubr.bf16.mxu0 %v2195
        %2498 = vmatmul.mubr.bf16.gmra.mrb[0].mxu0 %v2194
        %v2499 = vpop.f32.mrb[0].mxu0
        %v2500 = vadd.f32 %v2271, %v2499
        %v2501 = vpop.f32.mrb[0].mxu0
        %v2502 = vpop.f32.mrb[0].mxu0
        %v2503 = vadd.f32 %v2271, %v2502
        %v2504 = vpop.f32.mrb[0].mxu0
        %2505 = vmatprep.mubr.bf16.mxu0 %v2197
        %2506 = vmatmul.mubr.bf16.gmra.mrb[0].mxu0 %v2196
        %v2507 = vpop.f32.mrb[0].mxu0
        %v2508 = vadd.f32 %v2271, %v2507
        %v2509 = vpop.f32.mrb[0].mxu0
        %v2510 = vpop.f32.mrb[0].mxu0
        %v2511 = vadd.f32 %v2271, %v2510
        %v2512 = vpop.f32.mrb[0].mxu0
        %2513 = vmatprep.mubr.bf16.mxu0 %v2199
        %2514 = vmatmul.mubr.bf16.gmra.mrb[0].mxu0 %v2198
        %v2515 = vpop.f32.mrb[0].mxu0
        %v2516 = vadd.f32 %v2271, %v2515
        %v2517 = vpop.f32.mrb[0].mxu0
        %v2518 = vpop.f32.mrb[0].mxu0
        %v2519 = vadd.f32 %v2271, %v2518
        %v2520 = vpop.f32.mrb[0].mxu0
        %2521 = vmatprep.mubr.bf16.mxu0 %v2201
        %2522 = vmatmul.mubr.bf16.gmra.mrb[0].mxu0 %v2200
        %v2523 = vpop.f32.mrb[0].mxu0
        %v2524 = vadd.f32 %v2271, %v2523
        %v2525 = vpop.f32.mrb[0].mxu0
        %v2526 = vpop.f32.mrb[0].mxu0
        %v2527 = vadd.f32 %v2271, %v2526
        %v2528 = vpop.f32.mrb[0].mxu0
        %2529 = vmatprep.mubr.bf16.mxu0 %v2203
        %2530 = vmatmul.mubr.bf16.gmra.mrb[0].mxu0 %v2202
        %v2531 = vpop.f32.mrb[0].mxu0
        %v2532 = vadd.f32 %v2271, %v2531
        %v2533 = vpop.f32.mrb[0].mxu0
        %v2534 = vpop.f32.mrb[0].mxu0
        %v2535 = vadd.f32 %v2271, %v2534
        %v2536 = vpop.f32.mrb[0].mxu0
        %2537 = vmatprep.mubr.bf16.mxu0 %v2205
        %2538 = vmatmul.mubr.bf16.gmra.mrb[0].mxu0 %v2204
        %v2539 = vpop.f32.mrb[0].mxu0
        %v2540 = vadd.f32 %v2271, %v2539
        %v2541 = vpop.f32.mrb[0].mxu0
        %v2542 = vpop.f32.mrb[0].mxu0
        %v2543 = vadd.f32 %v2271, %v2542
        %v2544 = vpop.f32.mrb[0].mxu0
        %2545 = vmatprep.mubr.bf16.mxu0 %v2207
        %2546 = vmatmul.mubr.bf16.gmra.mrb[0].mxu0 %v2206
        %v2547 = vpop.f32.mrb[0].mxu0
        %v2548 = vadd.f32 %v2271, %v2547
        %v2549 = vpop.f32.mrb[0].mxu0
        %v2550 = vpop.f32.mrb[0].mxu0
        %v2551 = vadd.f32 %v2271, %v2550
        %v2552 = vpop.f32.mrb[0].mxu0
        %2553 = vmatprep.mubr.bf16.mxu0 %v2209
        %2554 = vmatmul.mubr.bf16.gmra.mrb[0].mxu0 %v2208
        %v2555 = vpop.f32.mrb[0].mxu0
        %v2556 = vadd.f32 %v2271, %v2555
        %v2557 = vpop.f32.mrb[0].mxu0
        %v2558 = vpop.f32.mrb[0].mxu0
        %v2559 = vadd.f32 %v2271, %v2558
        %v2560 = vpop.f32.mrb[0].mxu0
        %2561 = vmatprep.mubr.bf16.mxu0 %v2211
        %2562 = vmatmul.mubr.bf16.gmra.mrb[0].mxu0 %v2210
        %v2563 = vpop.f32.mrb[0].mxu0
        %v2564 = vadd.f32 %v2271, %v2563
        %v2565 = vpop.f32.mrb[0].mxu0
        %v2566 = vpop.f32.mrb[0].mxu0
        %v2567 = vadd.f32 %v2271, %v2566
        %v2568 = vpop.f32.mrb[0].mxu0
        %2569 = vmatprep.mubr.bf16.mxu0 %v2213
        %2570 = vmatmul.mubr.bf16.gmra.mrb[0].mxu0 %v2212
        %v2571 = vpop.f32.mrb[0].mxu0
        %v2572 = vadd.f32 %v2271, %v2571
        %v2573 = vpop.f32.mrb[0].mxu0
        %v2574 = vpop.f32.mrb[0].mxu0
        %v2575 = vadd.f32 %v2271, %v2574
        %v2576 = vpop.f32.mrb[0].mxu0
        %2577 = vmatprep.mubr.bf16.mxu0 %v2215
        %2578 = vmatmul.mubr.bf16.gmra.mrb[0].mxu0 %v2214
        %v2579 = vpop.f32.mrb[0].mxu0
        %v2580 = vadd.f32 %v2271, %v2579
        %v2581 = vpop.f32.mrb[0].mxu0
        %v2582 = vpop.f32.mrb[0].mxu0
        %v2583 = vadd.f32 %v2271, %v2582
        %v2584 = vpop.f32.mrb[0].mxu0
        %2585 = vmatprep.mubr.bf16.mxu0 %v2217
        %2586 = vmatmul.mubr.bf16.gmra.mrb[0].mxu0 %v2216
        %v2587 = vpop.f32.mrb[0].mxu0
        %v2588 = vadd.f32 %v2271, %v2587
        %v2589 = vpop.f32.mrb[0].mxu0
        %v2590 = vpop.f32.mrb[0].mxu0
        %v2591 = vadd.f32 %v2271, %v2590
        %v2592 = vpop.f32.mrb[0].mxu0
        %2593 = vmatprep.mubr.bf16.mxu0 %v2219
        %2594 = vmatmul.mubr.bf16.gmra.mrb[0].mxu0 %v2218
        %v2595 = vpop.f32.mrb[0].mxu0
        %v2596 = vadd.f32 %v2271, %v2595
        %v2597 = vpop.f32.mrb[0].mxu0
        %v2598 = vpop.f32.mrb[0].mxu0
        %v2599 = vadd.f32 %v2271, %v2598
        %v2600 = vpop.f32.mrb[0].mxu0
        %2601 = vmatprep.mubr.bf16.mxu0 %v2221
        %2602 = vmatmul.mubr.bf16.gmra.mrb[0].mxu0 %v2220
        %v2603 = vpop.f32.mrb[0].mxu0
        %v2604 = vadd.f32 %v2271, %v2603
        %v2605 = vpop.f32.mrb[0].mxu0
        %v2606 = vpop.f32.mrb[0].mxu0
        %v2607 = vadd.f32 %v2271, %v2606
        %v2608 = vpop.f32.mrb[0].mxu0
        %2609 = vmatprep.mubr.bf16.mxu0 %v2223
        %2610 = vmatmul.mubr.bf16.gmra.mrb[0].mxu0 %v2222
        %v2611 = vpop.f32.mrb[0].mxu0
        %v2612 = vadd.f32 %v2271, %v2611
        %v2613 = vpop.f32.mrb[0].mxu0
        %v2614 = vpop.f32.mrb[0].mxu0
        %v2615 = vadd.f32 %v2271, %v2614
        %v2616 = vpop.f32.mrb[0].mxu0
        %2617 = vmatprep.mubr.bf16.mxu0 %v2225
        %2618 = vmatmul.mubr.bf16.gmra.mrb[0].mxu0 %v2224
        %v2619 = vpop.f32.mrb[0].mxu0
        %v2620 = vadd.f32 %v2271, %v2619
        %v2621 = vpop.f32.mrb[0].mxu0
        %v2622 = vpop.f32.mrb[0].mxu0
        %v2623 = vadd.f32 %v2271, %v2622
        %v2624 = vpop.f32.mrb[0].mxu0
        %2625 = vmatprep.mubr.bf16.mxu0 %v2227
        %2626 = vmatmul.mubr.bf16.gmra.mrb[0].mxu0 %v2226
        %v2627 = vpop.f32.mrb[0].mxu0
        %v2628 = vadd.f32 %v2271, %v2627
        %v2629 = vpop.f32.mrb[0].mxu0
        %v2630 = vpop.f32.mrb[0].mxu0
        %v2631 = vadd.f32 %v2271, %v2630
        %v2632 = vpop.f32.mrb[0].mxu0
        %2633 = vmatprep.mubr.bf16.mxu0 %v2229
        %2634 = vmatmul.mubr.bf16.gmra.mrb[0].mxu0 %v2228
        %v2635 = vpop.f32.mrb[0].mxu0
        %v2636 = vadd.f32 %v2271, %v2635
        %v2637 = vpop.f32.mrb[0].mxu0
        %v2638 = vpop.f32.mrb[0].mxu0
        %v2639 = vadd.f32 %v2271, %v2638
        %v2640 = vpop.f32.mrb[0].mxu0
        %2641 = vmatprep.mubr.bf16.mxu0 %v2231
        %2642 = vmatmul.mubr.bf16.gmra.mrb[0].mxu0 %v2230
        %v2643 = vpop.f32.mrb[0].mxu0
        %v2644 = vadd.f32 %v2271, %v2643
        %v2645 = vpop.f32.mrb[0].mxu0
        %v2646 = vpop.f32.mrb[0].mxu0
        %v2647 = vadd.f32 %v2271, %v2646
        %v2648 = vpop.f32.mrb[0].mxu0
        %2649 = vmatprep.mubr.bf16.mxu0 %v2233
        %2650 = vmatmul.mubr.bf16.gmra.mrb[0].mxu0 %v2232
        %v2651 = vpop.f32.mrb[0].mxu0
        %v2652 = vadd.f32 %v2271, %v2651
        %v2653 = vpop.f32.mrb[0].mxu0
        %v2654 = vpop.f32.mrb[0].mxu0
        %v2655 = vadd.f32 %v2271, %v2654
        %v2656 = vpop.f32.mrb[0].mxu0
        %2657 = vdwg.mxu0
        %2658 = vst [vmem:[%s299] sm:$0xff] %v2404
        %2659 = vst [vmem:[%s299 + $0x8] sm:$0xff] %v2407
        %2660 = vst [vmem:[%s299 + $0x10] sm:$0xff] %v2412
        %2661 = vst [vmem:[%s299 + $0x18] sm:$0xff] %v2415
        %2662 = vst [vmem:[%s299 + $0x20] sm:$0xff] %v2420
        %2663 = vst [vmem:[%s299 + $0x28] sm:$0xff] %v2423
        %2664 = vst [vmem:[%s299 + $0x30] sm:$0xff] %v2428
        %2665 = vst [vmem:[%s299 + $0x38] sm:$0xff] %v2431
        %2666 = vst [vmem:[%s299 + $0x40] sm:$0xff] %v2436
        %2667 = vst [vmem:[%s299 + $0x48] sm:$0xff] %v2439
        %2668 = vst [vmem:[%s299 + $0x50] sm:$0xff] %v2444
        %2669 = vst [vmem:[%s299 + $0x58] sm:$0xff] %v2447
        %2670 = vst [vmem:[%s299 + $0x60] sm:$0xff] %v2452
        %2671 = vst [vmem:[%s299 + $0x68] sm:$0xff] %v2455
        %2672 = vst [vmem:[%s299 + $0x70] sm:$0xff] %v2460
        %2673 = vst [vmem:[%s299 + $0x78] sm:$0xff] %v2463
        %2674 = vst [vmem:[%s299 + $0x80] sm:$0xff] %v2468
        %2675 = vst [vmem:[%s299 + $0x88] sm:$0xff] %v2471
        %2676 = vst [vmem:[%s299 + $0x90] sm:$0xff] %v2476
        %2677 = vst [vmem:[%s299 + $0x98] sm:$0xff] %v2479
        %2678 = vst [vmem:[%s299 + $0xa0] sm:$0xff] %v2484
        %2679 = vst [vmem:[%s299 + $0xa8] sm:$0xff] %v2487
        %2680 = vst [vmem:[%s299 + $0xb0] sm:$0xff] %v2492
        %2681 = vst [vmem:[%s299 + $0xb8] sm:$0xff] %v2495
        %2682 = vst [vmem:[%s299 + $0xc0] sm:$0xff] %v2500
        %2683 = vst [vmem:[%s299 + $0xc8] sm:$0xff] %v2503
        %2684 = vst [vmem:[%s299 + $0xd0] sm:$0xff] %v2508
        %2685 = vst [vmem:[%s299 + $0xd8] sm:$0xff] %v2511
        %2686 = vst [vmem:[%s299 + $0xe0] sm:$0xff] %v2516
        %2687 = vst [vmem:[%s299 + $0xe8] sm:$0xff] %v2519
        %2688 = vst [vmem:[%s299 + $0xf0] sm:$0xff] %v2524
        %2689 = vst [vmem:[%s299 + $0xf8] sm:$0xff] %v2527
        %2690 = vst [vmem:[%s299 + $0x100] sm:$0xff] %v2532
        %2691 = vst [vmem:[%s299 + $0x108] sm:$0xff] %v2535
        %2692 = vst [vmem:[%s299 + $0x110] sm:$0xff] %v2540
        %2693 = vst [vmem:[%s299 + $0x118] sm:$0xff] %v2543
        %2694 = vst [vmem:[%s299 + $0x120] sm:$0xff] %v2548
        %2695 = vst [vmem:[%s299 + $0x128] sm:$0xff] %v2551
        %2696 = vst [vmem:[%s299 + $0x130] sm:$0xff] %v2556
        %2697 = vst [vmem:[%s299 + $0x138] sm:$0xff] %v2559
        %2698 = vst [vmem:[%s299 + $0x140] sm:$0xff] %v2564
        %2699 = vst [vmem:[%s299 + $0x148] sm:$0xff] %v2567
        %2700 = vst [vmem:[%s299 + $0x150] sm:$0xff] %v2572
        %2701 = vst [vmem:[%s299 + $0x158] sm:$0xff] %v2575
        %2702 = vst [vmem:[%s299 + $0x160] sm:$0xff] %v2580
        %2703 = vst [vmem:[%s299 + $0x168] sm:$0xff] %v2583
        %2704 = vst [vmem:[%s299 + $0x170] sm:$0xff] %v2588
        %2705 = vst [vmem:[%s299 + $0x178] sm:$0xff] %v2591
        %2706 = vst [vmem:[%s299 + $0x180] sm:$0xff] %v2596
        %2707 = vst [vmem:[%s299 + $0x188] sm:$0xff] %v2599
        %2708 = vst [vmem:[%s299 + $0x190] sm:$0xff] %v2604
        %2709 = vst [vmem:[%s299 + $0x198] sm:$0xff] %v2607
        %2710 = vst [vmem:[%s299 + $0x1a0] sm:$0xff] %v2612
        %2711 = vst [vmem:[%s299 + $0x1a8] sm:$0xff] %v2615
        %2712 = vst [vmem:[%s299 + $0x1b0] sm:$0xff] %v2620
        %2713 = vst [vmem:[%s299 + $0x1b8] sm:$0xff] %v2623
        %2714 = vst [vmem:[%s299 + $0x1c0] sm:$0xff] %v2628
        %2715 = vst [vmem:[%s299 + $0x1c8] sm:$0xff] %v2631
        %2716 = vst [vmem:[%s299 + $0x1d0] sm:$0xff] %v2636
        %2717 = vst [vmem:[%s299 + $0x1d8] sm:$0xff] %v2639
        %2718 = vst [vmem:[%s299 + $0x1e0] sm:$0xff] %v2644
        %2719 = vst [vmem:[%s299 + $0x1e8] sm:$0xff] %v2647
        %2720 = vst [vmem:[%s299 + $0x1f0] sm:$0xff] %v2652
        %2721 = vst [vmem:[%s299 + $0x1f8] sm:$0xff] %v2655
        %s2722 = sand.u32 %s203, 1
        %s2723 = scalar_lea.sflag [#allocation3], %s2722
        %s2724 = sand.u32 %s203, 1
        %s2725 = smul.addr %s2724, 512
        %s2726 = scalar_lea.vmem [#allocation2], %s2725
        // Predicated region
        $region53: #{mlp_forward.3} parent=51 // pred_check
          %p2727 = pneg %p213
        $region54: #{mlp_forward.3} parent=51 // pred_check_branch
          %2729 = sbr.rel (%p2727) target = $region56
        $region55: #{mlp_forward.3} parent=51 // pred_region
          %s2730 = smul.u32 64, %s22
          %s2732 = ssub.s32 8192, 8192
          %2733 = vsyncadd %s2723, %s2732
          %s2734 = smul.addr %s2730, 128
          %s2735 = scalar_lea.hbm %s8, %s2734
          %s2736 = sshll.u32 %s2726, 4
          %s2737 = int_to_ptr.vmem [resolvable:$true] %s2736
          %2742 = dma.vmem_to_hbm [thread:$0]  %s2737, 8192, %s2735, %s2723, 128, 128, 8
        $region56: #{mlp_forward.3} parent=51 // pred_fallthru
          _
      $region52: #{mlp_forward.3} parent=5 // pred_fallthru
        _
      %p2743 = scmp.le.s32.totalorder 2, %s17
      // Predicated region
      $region57: #{mlp_forward.3} parent=5 // pred_check
        %p2744 = pneg %p2743
      $region58: #{mlp_forward.3} parent=5 // pred_check_branch
        %2746 = sbr.rel (%p2744) target = $region60
      $region59: #{mlp_forward.3} parent=5 // pred_region
        %s2747 = ssub.s32 %s17, 2
        // Predicated region
        $region61: #{mlp_forward.3} parent=59 // pred_check
          %p2748 = pneg %p219
        $region62: #{mlp_forward.3} parent=59 // pred_check_branch
          %2750 = sbr.rel (%p2748) target = $region64
        $region63: #{mlp_forward.3} parent=59 // pred_region
          %s2751 = sand.u32 %s204, 1
          %s2752 = scalar_lea.sflag [#allocation3], %s2751
          %s2753 = sand.u32 %s204, 1
          %s2754 = smul.addr %s2753, 512
          %s2755 = scalar_lea.vmem [#allocation2], %s2754
          %2756 = dma.done %s2752, 8192
        $region64: #{mlp_forward.3} parent=59 // pred_fallthru
          _
      $region60: #{mlp_forward.3} parent=5 // pred_fallthru
        _
    $region6: #{mlp_forward.3} parent=1 // loop_footer
      %s21 = sadd.s32 1, %s17
    $region7: #{mlp_forward.3} parent=1 // loop_footer_branch
      %16 = sbr.rel target = $region3
    $region8: #{mlp_forward.3} parent=1 // loop_exit
      _
    %2757 = vsyncpa [#allocation3], 1
    %s2758 = scalar_lea.sflag [#allocation3], 1
    %2759 = vsyncpa %s2758, 1

</llo_original>
